<compile_context>
chip_gen: v5e
topology: v5e:2x2
jax: 0.10.0
libtpu: 0.0.40
codegen_flags: <defaults>
</compile_context>

<pallas_src>
import math
import jax
import jax.numpy as jnp
from jax.experimental import pallas as pl
from jax.experimental.pallas import tpu as pltpu

# ----------------------------- config (small, BERT-like) ---------------------
B = 2            # batch size
S = 8            # max_length (sequence length)
D = 128          # hidden size (scaled-down stand-in for BERT's 768)
NUM_HEADS = 4
HEAD_DIM = D // NUM_HEADS
D_FF = 4 * D     # intermediate size (512)
NUM_LAYERS = 2
VOCAB = 1000
TYPE_VOCAB = 2
MAX_POS = 16
CLS_H = 50       # classifier hidden (matches the module: H = 50)
D_OUT = 2        # num labels      (matches the module: D_out = 2)
CLS_PAD = 128    # lane-dense padding for classifier hidden / logits
LN_EPS = 1e-12
BS = B * S       # batch folded onto the sublane axis -> (BS, D) tiles


# ----------------------------- in-kernel helpers -----------------------------
def _layernorm(x, g, b):
    mu = jnp.mean(x, axis=-1, keepdims=True)
    var = jnp.mean(jnp.square(x - mu), axis=-1, keepdims=True)
    return (x - mu) * jax.lax.rsqrt(var + LN_EPS) * g + b


def _mm(x, w):
    # bf16 MXU operands, f32 accumulation
    return jnp.dot(x.astype(jnp.bfloat16), w, preferred_element_type=jnp.float32)


# ----------------------------- fused forward kernel --------------------------
def fused_bert_kernel(h_ref, bias_ref, eg_ref, eb_ref,
                      wq_ref, bq_ref, wk_ref, bk_ref, wv_ref, bv_ref,
                      wo_ref, bo_ref, l1g_ref, l1b_ref,
                      wi_ref, bi_ref, wp_ref, bp_ref, l2g_ref, l2b_ref,
                      w1_ref, b1_ref, w2_ref, b2_ref,
                      o_ref):
    # Per-head lane masks, hoisted (reused by every layer, every head).
    lane = jax.lax.broadcasted_iota(jnp.int32, (1, D), 1)
    head_masks = [
        ((lane >= h * HEAD_DIM) & (lane < (h + 1) * HEAD_DIM)).astype(jnp.float32)
        for h in range(NUM_HEADS)
    ]
    bias = bias_ref[...]                    # (BS, BS) additive mask
    scale = 1.0 / math.sqrt(HEAD_DIM)

    # Embedding layernorm
    h = _layernorm(h_ref[...], eg_ref[...], eb_ref[...])        # (BS, D) f32

    # Encoder layers (static unroll; all weights VMEM-resident)
    for l in range(NUM_LAYERS):
        x = h
        q = _mm(x, wq_ref[l]) + bq_ref[l]                       # (BS, D)
        k = _mm(x, wk_ref[l]) + bk_ref[l]
        v = _mm(x, wv_ref[l]) + bv_ref[l]
        k_b = k.astype(jnp.bfloat16)

        attn = jnp.zeros_like(x)
        for hd in range(NUM_HEADS):
            mh = head_masks[hd]
            # Full-lane-width masked matmuls: no lane slicing, no concatenate.
            s = jnp.einsum('qd,kd->qk', (q * mh).astype(jnp.bfloat16), k_b,
                           preferred_element_type=jnp.float32) * scale + bias
            s = s - jnp.max(s, axis=-1, keepdims=True)
            p = jnp.exp(s)
            p = p * pl.reciprocal(jnp.sum(p, axis=-1, keepdims=True), approx=True)
            attn = attn + jnp.dot(p.astype(jnp.bfloat16),
                                  (v * mh).astype(jnp.bfloat16),
                                  preferred_element_type=jnp.float32)

        # Attention output projection + residual + LN
        attn = _mm(attn, wo_ref[l]) + bo_ref[l]
        h1 = _layernorm(x + attn, l1g_ref[l], l1b_ref[l])

        # Feed-forward (GELU) + residual + LN
        ff = _mm(h1, wi_ref[l]) + bi_ref[l]
        # TODO(synk): HF BERT's default GELU is the exact erf form; tanh approx used here.
        ff = jax.nn.gelu(ff, approximate=True)
        ff = _mm(ff, wp_ref[l]) + bp_ref[l]
        h = _layernorm(h1 + ff, l2g_ref[l], l2b_ref[l])

    # Classifier head on all BS rows (free at this scale, lane-dense output);
    # the CLS rows / real logit lanes are selected in the JAX wrapper.
    c = _mm(h, w1_ref[...]) + b1_ref[...]
    c = jnp.maximum(c, 0.0)                                     # ReLU
    o_ref[...] = _mm(c, w2_ref[...]) + b2_ref[...]


# ----------------------------- wrapper ----------------------------------------
_STACKED_NAMES = ("wq", "bq", "wk", "bk", "wv", "bv", "wo", "bo",
                  "ln1g", "ln1b", "wi", "bi", "wp", "bp", "ln2g", "ln2b")


def _full_spec(arr):
    return pl.BlockSpec(arr.shape, lambda i, _n=arr.ndim: (0,) * _n)


def bert_classifier_forward(params, input_ids, attention_mask):
    # Embeddings (gather is glue, done in plain JAX)
    word = jnp.take(params["word_emb"], input_ids, axis=0)          # (B, S, D)
    pos = params["pos_emb"][:S][None, :, :]                         # (1, S, D)
    typ = params["type_emb"][0][None, None, :]                      # (1, 1, D)  (token_type_ids == 0)
    hidden0 = (word + pos + typ).reshape(BS, D).astype(jnp.float32)

    # Additive attention bias: block-diagonal over batch + key-padding mask.
    row_batch = jnp.arange(BS, dtype=jnp.int32) // S
    same_batch = row_batch[:, None] == row_batch[None, :]
    key_valid = attention_mask.reshape(BS).astype(jnp.int32) > 0
    allowed = same_batch & key_valid[None, :]
    bias = jnp.where(allowed, 0.0, -1e9).astype(jnp.float32)        # (BS, BS)

    args = [hidden0, bias, params["emb_ln_g"], params["emb_ln_b"]]
    args += [params[name] for name in _STACKED_NAMES]
    args += [params["cls_w1"], params["cls_b1"], params["cls_w2"], params["cls_b2"]]

    out = pl.pallas_call(
        fused_bert_kernel,
        out_shape=jax.ShapeDtypeStruct((BS, CLS_PAD), jnp.float32),
        grid=(1,),
        in_specs=[_full_spec(a) for a in args],
        out_specs=pl.BlockSpec((BS, CLS_PAD), lambda i: (0, 0)),
        compiler_params=pltpu.CompilerParams(dimension_semantics=("arbitrary",)),
    )(*args)

    # outputs[0][:, 0, :] -> CLS row of each sequence; real logits in first D_OUT lanes.
    return out.reshape(B, S, CLS_PAD)[:, 0, :D_OUT]                 # (B, 2)


# ----------------------------- parameter construction ------------------------
def init_params(key):
    keys = iter(jax.random.split(key, 16))

    def nrm(shape, dtype=jnp.float32, scale=0.02):
        return (scale * jax.random.normal(next(keys), shape)).astype(dtype)

    p = {
        "word_emb": nrm((VOCAB, D)),
        "pos_emb": nrm((MAX_POS, D)),
        "type_emb": nrm((TYPE_VOCAB, D)),
        "emb_ln_g": jnp.ones((1, D), jnp.float32),
        "emb_ln_b": jnp.zeros((1, D), jnp.float32),
        # Stacked per-layer parameters (leading axis = layer); matmul weights bf16.
        "wq": nrm((NUM_LAYERS, D, D), jnp.bfloat16),
        "wk": nrm((NUM_LAYERS, D, D), jnp.bfloat16),
        "wv": nrm((NUM_LAYERS, D, D), jnp.bfloat16),
        "wo": nrm((NUM_LAYERS, D, D), jnp.bfloat16),
        "bq": jnp.zeros((NUM_LAYERS, 1, D), jnp.float32),
        "bk": jnp.zeros((NUM_LAYERS, 1, D), jnp.float32),
        "bv": jnp.zeros((NUM_LAYERS, 1, D), jnp.float32),
        "bo": jnp.zeros((NUM_LAYERS, 1, D), jnp.float32),
        "ln1g": jnp.ones((NUM_LAYERS, 1, D), jnp.float32),
        "ln1b": jnp.zeros((NUM_LAYERS, 1, D), jnp.float32),
        "wi": nrm((NUM_LAYERS, D, D_FF), jnp.bfloat16),
        "bi": jnp.zeros((NUM_LAYERS, 1, D_FF), jnp.float32),
        "wp": nrm((NUM_LAYERS, D_FF, D), jnp.bfloat16),
        "bp": jnp.zeros((NUM_LAYERS, 1, D), jnp.float32),
        "ln2g": jnp.ones((NUM_LAYERS, 1, D), jnp.float32),
        "ln2b": jnp.zeros((NUM_LAYERS, 1, D), jnp.float32),
    }
    # Classifier: Linear(D, 50) -> ReLU -> Linear(50, 2), zero-padded to lane-dense 128.
    w1 = nrm((D, CLS_H))
    w2 = nrm((CLS_H, D_OUT))
    w1p = jnp.zeros((D, CLS_PAD), jnp.float32).at[:, :CLS_H].set(w1)
    w2p = jnp.zeros((CLS_PAD, CLS_PAD), jnp.float32).at[:CLS_H, :D_OUT].set(w2)
    p["cls_w1"] = w1p.astype(jnp.bfloat16)
    p["cls_b1"] = jnp.zeros((1, CLS_PAD), jnp.float32)
    p["cls_w2"] = w2p.astype(jnp.bfloat16)
    p["cls_b2"] = jnp.zeros((1, CLS_PAD), jnp.float32)
    return p


# ----------------------------- main -------------------------------------------
if __name__ == "__main__":
    key = jax.random.PRNGKey(0)
    k_param, k_ids = jax.random.split(key)

    params = init_params(k_param)

    input_ids = jax.random.randint(k_ids, (B, S), 0, VOCAB, dtype=jnp.int32)
    # first sequence fully valid, second has 3 padding positions
    attention_mask = jnp.array(
        [[1, 1, 1, 1, 1, 1, 1, 1],
         [1, 1, 1, 1, 1, 0, 0, 0]], dtype=jnp.int32)

    logits = jax.jit(bert_classifier_forward)(params, input_ids, attention_mask)
    logits = jax.block_until_ready(logits)

    assert logits.shape == (B, D_OUT), logits.shape
    assert jnp.all(jnp.isfinite(logits))
    print("KERNEL_OK")
</pallas_src>

<mosaic_0001>
module attributes {stable_mosaic.version = 11 : i64} {
  func.func @fused_bert_kernel(%arg0: i32, %arg1: memref<16x128xf32, #tpu.memory_space<vmem>>, %arg2: memref<16x16xf32, #tpu.memory_space<vmem>>, %arg3: memref<1x128xf32, #tpu.memory_space<vmem>>, %arg4: memref<1x128xf32, #tpu.memory_space<vmem>>, %arg5: memref<2x128x128xbf16, #tpu.memory_space<vmem>>, %arg6: memref<2x1x128xf32, #tpu.memory_space<vmem>>, %arg7: memref<2x128x128xbf16, #tpu.memory_space<vmem>>, %arg8: memref<2x1x128xf32, #tpu.memory_space<vmem>>, %arg9: memref<2x128x128xbf16, #tpu.memory_space<vmem>>, %arg10: memref<2x1x128xf32, #tpu.memory_space<vmem>>, %arg11: memref<2x128x128xbf16, #tpu.memory_space<vmem>>, %arg12: memref<2x1x128xf32, #tpu.memory_space<vmem>>, %arg13: memref<2x1x128xf32, #tpu.memory_space<vmem>>, %arg14: memref<2x1x128xf32, #tpu.memory_space<vmem>>, %arg15: memref<2x128x512xbf16, #tpu.memory_space<vmem>>, %arg16: memref<2x1x512xf32, #tpu.memory_space<vmem>>, %arg17: memref<2x512x128xbf16, #tpu.memory_space<vmem>>, %arg18: memref<2x1x128xf32, #tpu.memory_space<vmem>>, %arg19: memref<2x1x128xf32, #tpu.memory_space<vmem>>, %arg20: memref<2x1x128xf32, #tpu.memory_space<vmem>>, %arg21: memref<128x128xbf16, #tpu.memory_space<vmem>>, %arg22: memref<1x128xf32, #tpu.memory_space<vmem>>, %arg23: memref<128x128xbf16, #tpu.memory_space<vmem>>, %arg24: memref<1x128xf32, #tpu.memory_space<vmem>>, %arg25: memref<16x128xf32, #tpu.memory_space<vmem>>) attributes {dimension_semantics = [#tpu.dimension_semantics<arbitrary>], iteration_bounds = array<i64: 1>, scalar_prefetch = 0 : i64, scratch_operands = 0 : i64, tpu.core_type = #tpu.core_type<tc>, window_params = [{pipeline_mode = #tpu.pipeline_mode<synchronous>, transform_indices = @transform_0, window_bounds = array<i64: 16, 128>}, {pipeline_mode = #tpu.pipeline_mode<synchronous>, transform_indices = @transform_1, window_bounds = array<i64: 16, 16>}, {pipeline_mode = #tpu.pipeline_mode<synchronous>, transform_indices = @transform_2, window_bounds = array<i64: 1, 128>}, {pipeline_mode = #tpu.pipeline_mode<synchronous>, transform_indices = @transform_3, window_bounds = array<i64: 1, 128>}, {pipeline_mode = #tpu.pipeline_mode<synchronous>, transform_indices = @transform_4, window_bounds = array<i64: 2, 128, 128>}, {pipeline_mode = #tpu.pipeline_mode<synchronous>, transform_indices = @transform_5, window_bounds = array<i64: 2, 1, 128>}, {pipeline_mode = #tpu.pipeline_mode<synchronous>, transform_indices = @transform_6, window_bounds = array<i64: 2, 128, 128>}, {pipeline_mode = #tpu.pipeline_mode<synchronous>, transform_indices = @transform_7, window_bounds = array<i64: 2, 1, 128>}, {pipeline_mode = #tpu.pipeline_mode<synchronous>, transform_indices = @transform_8, window_bounds = array<i64: 2, 128, 128>}, {pipeline_mode = #tpu.pipeline_mode<synchronous>, transform_indices = @transform_9, window_bounds = array<i64: 2, 1, 128>}, {pipeline_mode = #tpu.pipeline_mode<synchronous>, transform_indices = @transform_10, window_bounds = array<i64: 2, 128, 128>}, {pipeline_mode = #tpu.pipeline_mode<synchronous>, transform_indices = @transform_11, window_bounds = array<i64: 2, 1, 128>}, {pipeline_mode = #tpu.pipeline_mode<synchronous>, transform_indices = @transform_12, window_bounds = array<i64: 2, 1, 128>}, {pipeline_mode = #tpu.pipeline_mode<synchronous>, transform_indices = @transform_13, window_bounds = array<i64: 2, 1, 128>}, {pipeline_mode = #tpu.pipeline_mode<synchronous>, transform_indices = @transform_14, window_bounds = array<i64: 2, 128, 512>}, {pipeline_mode = #tpu.pipeline_mode<synchronous>, transform_indices = @transform_15, window_bounds = array<i64: 2, 1, 512>}, {pipeline_mode = #tpu.pipeline_mode<synchronous>, transform_indices = @transform_16, window_bounds = array<i64: 2, 512, 128>}, {pipeline_mode = #tpu.pipeline_mode<synchronous>, transform_indices = @transform_17, window_bounds = array<i64: 2, 1, 128>}, {pipeline_mode = #tpu.pipeline_mode<synchronous>, transform_indices = @transform_18, window_bounds = array<i64: 2, 1, 128>}, {pipeline_mode = #tpu.pipeline_mode<synchronous>, transform_indices = @transform_19, window_bounds = array<i64: 2, 1, 128>}, {pipeline_mode = #tpu.pipeline_mode<synchronous>, transform_indices = @transform_20, window_bounds = array<i64: 128, 128>}, {pipeline_mode = #tpu.pipeline_mode<synchronous>, transform_indices = @transform_21, window_bounds = array<i64: 1, 128>}, {pipeline_mode = #tpu.pipeline_mode<synchronous>, transform_indices = @transform_22, window_bounds = array<i64: 128, 128>}, {pipeline_mode = #tpu.pipeline_mode<synchronous>, transform_indices = @transform_23, window_bounds = array<i64: 1, 128>}, {pipeline_mode = #tpu.pipeline_mode<synchronous>, transform_indices = @transform_24, window_bounds = array<i64: 16, 128>}]} {
    %0 = tpu.iota {dimensions = array<i32: 1>} : vector<1x128xi32>
    %c0_i32 = arith.constant 0 : i32
    %1 = vector.broadcast %c0_i32 : i32 to vector<1x128xi32>
    %2 = arith.cmpi sge, %0, %1 : vector<1x128xi32>
    %c32_i32 = arith.constant 32 : i32
    %3 = vector.broadcast %c32_i32 : i32 to vector<1x128xi32>
    %4 = arith.cmpi slt, %0, %3 : vector<1x128xi32>
    %5 = arith.andi %2, %4 : vector<1x128xi1>
    %6 = arith.extui %5 : vector<1x128xi1> to vector<1x128xi32>
    %7 = arith.sitofp %6 : vector<1x128xi32> to vector<1x128xf32>
    %c32_i32_0 = arith.constant 32 : i32
    %8 = vector.broadcast %c32_i32_0 : i32 to vector<1x128xi32>
    %9 = arith.cmpi sge, %0, %8 : vector<1x128xi32>
    %c64_i32 = arith.constant 64 : i32
    %10 = vector.broadcast %c64_i32 : i32 to vector<1x128xi32>
    %11 = arith.cmpi slt, %0, %10 : vector<1x128xi32>
    %12 = arith.andi %9, %11 : vector<1x128xi1>
    %13 = arith.extui %12 : vector<1x128xi1> to vector<1x128xi32>
    %14 = arith.sitofp %13 : vector<1x128xi32> to vector<1x128xf32>
    %c64_i32_1 = arith.constant 64 : i32
    %15 = vector.broadcast %c64_i32_1 : i32 to vector<1x128xi32>
    %16 = arith.cmpi sge, %0, %15 : vector<1x128xi32>
    %c96_i32 = arith.constant 96 : i32
    %17 = vector.broadcast %c96_i32 : i32 to vector<1x128xi32>
    %18 = arith.cmpi slt, %0, %17 : vector<1x128xi32>
    %19 = arith.andi %16, %18 : vector<1x128xi1>
    %20 = arith.extui %19 : vector<1x128xi1> to vector<1x128xi32>
    %21 = arith.sitofp %20 : vector<1x128xi32> to vector<1x128xf32>
    %c96_i32_2 = arith.constant 96 : i32
    %22 = vector.broadcast %c96_i32_2 : i32 to vector<1x128xi32>
    %23 = arith.cmpi sge, %0, %22 : vector<1x128xi32>
    %c128_i32 = arith.constant 128 : i32
    %24 = vector.broadcast %c128_i32 : i32 to vector<1x128xi32>
    %25 = arith.cmpi slt, %0, %24 : vector<1x128xi32>
    %26 = arith.andi %23, %25 : vector<1x128xi1>
    %27 = arith.extui %26 : vector<1x128xi1> to vector<1x128xi32>
    %28 = arith.sitofp %27 : vector<1x128xi32> to vector<1x128xf32>
    %c0 = arith.constant 0 : index
    %c0_3 = arith.constant 0 : index
    %29 = vector.load %arg2[%c0, %c0_3] : memref<16x16xf32, #tpu.memory_space<vmem>>, vector<16x16xf32>
    %c0_4 = arith.constant 0 : index
    %c0_5 = arith.constant 0 : index
    %30 = vector.load %arg1[%c0_4, %c0_5] : memref<16x128xf32, #tpu.memory_space<vmem>>, vector<16x128xf32>
    %c0_6 = arith.constant 0 : index
    %c0_7 = arith.constant 0 : index
    %31 = vector.load %arg3[%c0_6, %c0_7] : memref<1x128xf32, #tpu.memory_space<vmem>>, vector<1x128xf32>
    %c0_8 = arith.constant 0 : index
    %c0_9 = arith.constant 0 : index
    %32 = vector.load %arg4[%c0_8, %c0_9] : memref<1x128xf32, #tpu.memory_space<vmem>>, vector<1x128xf32>
    %cst = arith.constant dense<0.000000e+00> : vector<16xf32>
    %33 = vector.multi_reduction <add>, %30, %cst [1] : vector<16x128xf32> to vector<16xf32>
    %34 = vector.shape_cast %33 : vector<16xf32> to vector<16x1xf32>
    %cst_10 = arith.constant 1.280000e+02 : f32
    %35 = vector.broadcast %cst_10 : f32 to vector<16x1xf32>
    %36 = arith.divf %34, %35 : vector<16x1xf32>
    %37 = vector.broadcast %36 : vector<16x1xf32> to vector<16x128xf32>
    %38 = arith.subf %30, %37 : vector<16x128xf32>
    %39 = arith.mulf %38, %38 : vector<16x128xf32>
    %cst_11 = arith.constant dense<0.000000e+00> : vector<16xf32>
    %40 = vector.multi_reduction <add>, %39, %cst_11 [1] : vector<16x128xf32> to vector<16xf32>
    %41 = vector.shape_cast %40 : vector<16xf32> to vector<16x1xf32>
    %cst_12 = arith.constant 1.280000e+02 : f32
    %42 = vector.broadcast %cst_12 : f32 to vector<16x1xf32>
    %43 = arith.divf %41, %42 : vector<16x1xf32>
    %44 = vector.broadcast %36 : vector<16x1xf32> to vector<16x128xf32>
    %45 = arith.subf %30, %44 : vector<16x128xf32>
    %cst_13 = arith.constant 9.99999996E-13 : f32
    %46 = vector.broadcast %cst_13 : f32 to vector<16x1xf32>
    %47 = arith.addf %43, %46 : vector<16x1xf32>
    %48 = math.rsqrt %47 : vector<16x1xf32>
    %49 = vector.broadcast %48 : vector<16x1xf32> to vector<16x128xf32>
    %50 = arith.mulf %45, %49 : vector<16x128xf32>
    %51 = vector.broadcast %31 : vector<1x128xf32> to vector<16x128xf32>
    %52 = arith.mulf %50, %51 : vector<16x128xf32>
    %53 = vector.broadcast %32 : vector<1x128xf32> to vector<16x128xf32>
    %54 = arith.addf %52, %53 : vector<16x128xf32>
    %c0_14 = arith.constant 0 : index
    %c0_15 = arith.constant 0 : index
    %c0_16 = arith.constant 0 : index
    %55 = vector.load %arg5[%c0_14, %c0_15, %c0_16] : memref<2x128x128xbf16, #tpu.memory_space<vmem>>, vector<1x128x128xbf16>
    %56 = vector.shape_cast %55 : vector<1x128x128xbf16> to vector<128x128xbf16>
    %57 = arith.truncf %54 : vector<16x128xf32> to vector<16x128xbf16>
    %cst_17 = arith.constant dense<0.000000e+00> : vector<16x128xf32>
    %58 = tpu.matmul %57, %56, %cst_17 {dimension_numbers = #tpu.dot_dimension_numbers<[1], [0], [0], [1], [0, 0, 1, 1], [], []>} : vector<16x128xbf16>, vector<128x128xbf16>, vector<16x128xf32> -> vector<16x128xf32>
    %c0_18 = arith.constant 0 : index
    %c0_19 = arith.constant 0 : index
    %c0_20 = arith.constant 0 : index
    %59 = vector.load %arg6[%c0_18, %c0_19, %c0_20] : memref<2x1x128xf32, #tpu.memory_space<vmem>>, vector<1x1x128xf32>
    %60 = vector.shape_cast %59 : vector<1x1x128xf32> to vector<1x128xf32>
    %61 = vector.broadcast %60 : vector<1x128xf32> to vector<16x128xf32>
    %62 = arith.addf %58, %61 : vector<16x128xf32>
    %c0_21 = arith.constant 0 : index
    %c0_22 = arith.constant 0 : index
    %c0_23 = arith.constant 0 : index
    %63 = vector.load %arg7[%c0_21, %c0_22, %c0_23] : memref<2x128x128xbf16, #tpu.memory_space<vmem>>, vector<1x128x128xbf16>
    %64 = vector.shape_cast %63 : vector<1x128x128xbf16> to vector<128x128xbf16>
    %65 = arith.truncf %54 : vector<16x128xf32> to vector<16x128xbf16>
    %cst_24 = arith.constant dense<0.000000e+00> : vector<16x128xf32>
    %66 = tpu.matmul %65, %64, %cst_24 {dimension_numbers = #tpu.dot_dimension_numbers<[1], [0], [0], [1], [0, 0, 1, 1], [], []>} : vector<16x128xbf16>, vector<128x128xbf16>, vector<16x128xf32> -> vector<16x128xf32>
    %c0_25 = arith.constant 0 : index
    %c0_26 = arith.constant 0 : index
    %c0_27 = arith.constant 0 : index
    %67 = vector.load %arg8[%c0_25, %c0_26, %c0_27] : memref<2x1x128xf32, #tpu.memory_space<vmem>>, vector<1x1x128xf32>
    %68 = vector.shape_cast %67 : vector<1x1x128xf32> to vector<1x128xf32>
    %69 = vector.broadcast %68 : vector<1x128xf32> to vector<16x128xf32>
    %70 = arith.addf %66, %69 : vector<16x128xf32>
    %c0_28 = arith.constant 0 : index
    %c0_29 = arith.constant 0 : index
    %c0_30 = arith.constant 0 : index
    %71 = vector.load %arg9[%c0_28, %c0_29, %c0_30] : memref<2x128x128xbf16, #tpu.memory_space<vmem>>, vector<1x128x128xbf16>
    %72 = vector.shape_cast %71 : vector<1x128x128xbf16> to vector<128x128xbf16>
    %73 = arith.truncf %54 : vector<16x128xf32> to vector<16x128xbf16>
    %cst_31 = arith.constant dense<0.000000e+00> : vector<16x128xf32>
    %74 = tpu.matmul %73, %72, %cst_31 {dimension_numbers = #tpu.dot_dimension_numbers<[1], [0], [0], [1], [0, 0, 1, 1], [], []>} : vector<16x128xbf16>, vector<128x128xbf16>, vector<16x128xf32> -> vector<16x128xf32>
    %c0_32 = arith.constant 0 : index
    %c0_33 = arith.constant 0 : index
    %c0_34 = arith.constant 0 : index
    %75 = vector.load %arg10[%c0_32, %c0_33, %c0_34] : memref<2x1x128xf32, #tpu.memory_space<vmem>>, vector<1x1x128xf32>
    %76 = vector.shape_cast %75 : vector<1x1x128xf32> to vector<1x128xf32>
    %77 = vector.broadcast %76 : vector<1x128xf32> to vector<16x128xf32>
    %78 = arith.addf %74, %77 : vector<16x128xf32>
    %79 = arith.truncf %70 : vector<16x128xf32> to vector<16x128xbf16>
    %cst_35 = arith.constant 0.000000e+00 : f32
    %80 = vector.broadcast %cst_35 : f32 to vector<16x128xf32>
    %81 = vector.broadcast %7 : vector<1x128xf32> to vector<16x128xf32>
    %82 = arith.mulf %62, %81 : vector<16x128xf32>
    %83 = arith.truncf %82 : vector<16x128xf32> to vector<16x128xbf16>
    "tpu.trace_start"() <{level = 10 : i32, message = "qd,kd->qk"}> : () -> ()
    %cst_36 = arith.constant dense<0.000000e+00> : vector<16x16xf32>
    %84 = tpu.matmul %83, %79, %cst_36 {dimension_numbers = #tpu.dot_dimension_numbers<[1], [1], [0], [0], [0, 0, 1, 0], [], []>} : vector<16x128xbf16>, vector<16x128xbf16>, vector<16x16xf32> -> vector<16x16xf32>
    "tpu.trace_stop"() : () -> ()
    %cst_37 = arith.constant 0.176776692 : f32
    %85 = vector.broadcast %cst_37 : f32 to vector<16x16xf32>
    %86 = arith.mulf %84, %85 : vector<16x16xf32>
    %87 = arith.addf %86, %29 : vector<16x16xf32>
    %cst_38 = arith.constant dense<0xFF800000> : vector<16xf32>
    %88 = vector.multi_reduction <maximumf>, %87, %cst_38 [1] : vector<16x16xf32> to vector<16xf32>
    %89 = vector.shape_cast %88 : vector<16xf32> to vector<16x1xf32>
    %90 = vector.broadcast %89 : vector<16x1xf32> to vector<16x16xf32>
    %91 = arith.subf %87, %90 : vector<16x16xf32>
    %92 = math.exp %91 : vector<16x16xf32>
    %cst_39 = arith.constant dense<0.000000e+00> : vector<16xf32>
    %93 = vector.multi_reduction <add>, %92, %cst_39 [1] : vector<16x16xf32> to vector<16xf32>
    %94 = vector.shape_cast %93 : vector<16xf32> to vector<16x1xf32>
    %95 = tpu.reciprocal %94 {approx = true} : vector<16x1xf32> -> vector<16x1xf32>
    %96 = vector.broadcast %95 : vector<16x1xf32> to vector<16x16xf32>
    %97 = arith.mulf %92, %96 : vector<16x16xf32>
    %98 = arith.truncf %97 : vector<16x16xf32> to vector<16x16xbf16>
    %99 = vector.broadcast %7 : vector<1x128xf32> to vector<16x128xf32>
    %100 = arith.mulf %78, %99 : vector<16x128xf32>
    %101 = arith.truncf %100 : vector<16x128xf32> to vector<16x128xbf16>
    %cst_40 = arith.constant dense<0.000000e+00> : vector<16x128xf32>
    %102 = tpu.matmul %98, %101, %cst_40 {dimension_numbers = #tpu.dot_dimension_numbers<[1], [0], [0], [1], [0, 0, 1, 1], [], []>} : vector<16x16xbf16>, vector<16x128xbf16>, vector<16x128xf32> -> vector<16x128xf32>
    %103 = arith.addf %80, %102 : vector<16x128xf32>
    %104 = vector.broadcast %14 : vector<1x128xf32> to vector<16x128xf32>
    %105 = arith.mulf %62, %104 : vector<16x128xf32>
    %106 = arith.truncf %105 : vector<16x128xf32> to vector<16x128xbf16>
    "tpu.trace_start"() <{level = 10 : i32, message = "qd,kd->qk"}> : () -> ()
    %cst_41 = arith.constant dense<0.000000e+00> : vector<16x16xf32>
    %107 = tpu.matmul %106, %79, %cst_41 {dimension_numbers = #tpu.dot_dimension_numbers<[1], [1], [0], [0], [0, 0, 1, 0], [], []>} : vector<16x128xbf16>, vector<16x128xbf16>, vector<16x16xf32> -> vector<16x16xf32>
    "tpu.trace_stop"() : () -> ()
    %cst_42 = arith.constant 0.176776692 : f32
    %108 = vector.broadcast %cst_42 : f32 to vector<16x16xf32>
    %109 = arith.mulf %107, %108 : vector<16x16xf32>
    %110 = arith.addf %109, %29 : vector<16x16xf32>
    %cst_43 = arith.constant dense<0xFF800000> : vector<16xf32>
    %111 = vector.multi_reduction <maximumf>, %110, %cst_43 [1] : vector<16x16xf32> to vector<16xf32>
    %112 = vector.shape_cast %111 : vector<16xf32> to vector<16x1xf32>
    %113 = vector.broadcast %112 : vector<16x1xf32> to vector<16x16xf32>
    %114 = arith.subf %110, %113 : vector<16x16xf32>
    %115 = math.exp %114 : vector<16x16xf32>
    %cst_44 = arith.constant dense<0.000000e+00> : vector<16xf32>
    %116 = vector.multi_reduction <add>, %115, %cst_44 [1] : vector<16x16xf32> to vector<16xf32>
    %117 = vector.shape_cast %116 : vector<16xf32> to vector<16x1xf32>
    %118 = tpu.reciprocal %117 {approx = true} : vector<16x1xf32> -> vector<16x1xf32>
    %119 = vector.broadcast %118 : vector<16x1xf32> to vector<16x16xf32>
    %120 = arith.mulf %115, %119 : vector<16x16xf32>
    %121 = arith.truncf %120 : vector<16x16xf32> to vector<16x16xbf16>
    %122 = vector.broadcast %14 : vector<1x128xf32> to vector<16x128xf32>
    %123 = arith.mulf %78, %122 : vector<16x128xf32>
    %124 = arith.truncf %123 : vector<16x128xf32> to vector<16x128xbf16>
    %cst_45 = arith.constant dense<0.000000e+00> : vector<16x128xf32>
    %125 = tpu.matmul %121, %124, %cst_45 {dimension_numbers = #tpu.dot_dimension_numbers<[1], [0], [0], [1], [0, 0, 1, 1], [], []>} : vector<16x16xbf16>, vector<16x128xbf16>, vector<16x128xf32> -> vector<16x128xf32>
    %126 = arith.addf %103, %125 : vector<16x128xf32>
    %127 = vector.broadcast %21 : vector<1x128xf32> to vector<16x128xf32>
    %128 = arith.mulf %62, %127 : vector<16x128xf32>
    %129 = arith.truncf %128 : vector<16x128xf32> to vector<16x128xbf16>
    "tpu.trace_start"() <{level = 10 : i32, message = "qd,kd->qk"}> : () -> ()
    %cst_46 = arith.constant dense<0.000000e+00> : vector<16x16xf32>
    %130 = tpu.matmul %129, %79, %cst_46 {dimension_numbers = #tpu.dot_dimension_numbers<[1], [1], [0], [0], [0, 0, 1, 0], [], []>} : vector<16x128xbf16>, vector<16x128xbf16>, vector<16x16xf32> -> vector<16x16xf32>
    "tpu.trace_stop"() : () -> ()
    %cst_47 = arith.constant 0.176776692 : f32
    %131 = vector.broadcast %cst_47 : f32 to vector<16x16xf32>
    %132 = arith.mulf %130, %131 : vector<16x16xf32>
    %133 = arith.addf %132, %29 : vector<16x16xf32>
    %cst_48 = arith.constant dense<0xFF800000> : vector<16xf32>
    %134 = vector.multi_reduction <maximumf>, %133, %cst_48 [1] : vector<16x16xf32> to vector<16xf32>
    %135 = vector.shape_cast %134 : vector<16xf32> to vector<16x1xf32>
    %136 = vector.broadcast %135 : vector<16x1xf32> to vector<16x16xf32>
    %137 = arith.subf %133, %136 : vector<16x16xf32>
    %138 = math.exp %137 : vector<16x16xf32>
    %cst_49 = arith.constant dense<0.000000e+00> : vector<16xf32>
    %139 = vector.multi_reduction <add>, %138, %cst_49 [1] : vector<16x16xf32> to vector<16xf32>
    %140 = vector.shape_cast %139 : vector<16xf32> to vector<16x1xf32>
    %141 = tpu.reciprocal %140 {approx = true} : vector<16x1xf32> -> vector<16x1xf32>
    %142 = vector.broadcast %141 : vector<16x1xf32> to vector<16x16xf32>
    %143 = arith.mulf %138, %142 : vector<16x16xf32>
    %144 = arith.truncf %143 : vector<16x16xf32> to vector<16x16xbf16>
    %145 = vector.broadcast %21 : vector<1x128xf32> to vector<16x128xf32>
    %146 = arith.mulf %78, %145 : vector<16x128xf32>
    %147 = arith.truncf %146 : vector<16x128xf32> to vector<16x128xbf16>
    %cst_50 = arith.constant dense<0.000000e+00> : vector<16x128xf32>
    %148 = tpu.matmul %144, %147, %cst_50 {dimension_numbers = #tpu.dot_dimension_numbers<[1], [0], [0], [1], [0, 0, 1, 1], [], []>} : vector<16x16xbf16>, vector<16x128xbf16>, vector<16x128xf32> -> vector<16x128xf32>
    %149 = arith.addf %126, %148 : vector<16x128xf32>
    %150 = vector.broadcast %28 : vector<1x128xf32> to vector<16x128xf32>
    %151 = arith.mulf %62, %150 : vector<16x128xf32>
    %152 = arith.truncf %151 : vector<16x128xf32> to vector<16x128xbf16>
    "tpu.trace_start"() <{level = 10 : i32, message = "qd,kd->qk"}> : () -> ()
    %cst_51 = arith.constant dense<0.000000e+00> : vector<16x16xf32>
    %153 = tpu.matmul %152, %79, %cst_51 {dimension_numbers = #tpu.dot_dimension_numbers<[1], [1], [0], [0], [0, 0, 1, 0], [], []>} : vector<16x128xbf16>, vector<16x128xbf16>, vector<16x16xf32> -> vector<16x16xf32>
    "tpu.trace_stop"() : () -> ()
    %cst_52 = arith.constant 0.176776692 : f32
    %154 = vector.broadcast %cst_52 : f32 to vector<16x16xf32>
    %155 = arith.mulf %153, %154 : vector<16x16xf32>
    %156 = arith.addf %155, %29 : vector<16x16xf32>
    %cst_53 = arith.constant dense<0xFF800000> : vector<16xf32>
    %157 = vector.multi_reduction <maximumf>, %156, %cst_53 [1] : vector<16x16xf32> to vector<16xf32>
    %158 = vector.shape_cast %157 : vector<16xf32> to vector<16x1xf32>
    %159 = vector.broadcast %158 : vector<16x1xf32> to vector<16x16xf32>
    %160 = arith.subf %156, %159 : vector<16x16xf32>
    %161 = math.exp %160 : vector<16x16xf32>
    %cst_54 = arith.constant dense<0.000000e+00> : vector<16xf32>
    %162 = vector.multi_reduction <add>, %161, %cst_54 [1] : vector<16x16xf32> to vector<16xf32>
    %163 = vector.shape_cast %162 : vector<16xf32> to vector<16x1xf32>
    %164 = tpu.reciprocal %163 {approx = true} : vector<16x1xf32> -> vector<16x1xf32>
    %165 = vector.broadcast %164 : vector<16x1xf32> to vector<16x16xf32>
    %166 = arith.mulf %161, %165 : vector<16x16xf32>
    %167 = arith.truncf %166 : vector<16x16xf32> to vector<16x16xbf16>
    %168 = vector.broadcast %28 : vector<1x128xf32> to vector<16x128xf32>
    %169 = arith.mulf %78, %168 : vector<16x128xf32>
    %170 = arith.truncf %169 : vector<16x128xf32> to vector<16x128xbf16>
    %cst_55 = arith.constant dense<0.000000e+00> : vector<16x128xf32>
    %171 = tpu.matmul %167, %170, %cst_55 {dimension_numbers = #tpu.dot_dimension_numbers<[1], [0], [0], [1], [0, 0, 1, 1], [], []>} : vector<16x16xbf16>, vector<16x128xbf16>, vector<16x128xf32> -> vector<16x128xf32>
    %172 = arith.addf %149, %171 : vector<16x128xf32>
    %c0_56 = arith.constant 0 : index
    %c0_57 = arith.constant 0 : index
    %c0_58 = arith.constant 0 : index
    %173 = vector.load %arg11[%c0_56, %c0_57, %c0_58] : memref<2x128x128xbf16, #tpu.memory_space<vmem>>, vector<1x128x128xbf16>
    %174 = vector.shape_cast %173 : vector<1x128x128xbf16> to vector<128x128xbf16>
    %175 = arith.truncf %172 : vector<16x128xf32> to vector<16x128xbf16>
    %cst_59 = arith.constant dense<0.000000e+00> : vector<16x128xf32>
    %176 = tpu.matmul %175, %174, %cst_59 {dimension_numbers = #tpu.dot_dimension_numbers<[1], [0], [0], [1], [0, 0, 1, 1], [], []>} : vector<16x128xbf16>, vector<128x128xbf16>, vector<16x128xf32> -> vector<16x128xf32>
    %c0_60 = arith.constant 0 : index
    %c0_61 = arith.constant 0 : index
    %c0_62 = arith.constant 0 : index
    %177 = vector.load %arg12[%c0_60, %c0_61, %c0_62] : memref<2x1x128xf32, #tpu.memory_space<vmem>>, vector<1x1x128xf32>
    %178 = vector.shape_cast %177 : vector<1x1x128xf32> to vector<1x128xf32>
    %179 = vector.broadcast %178 : vector<1x128xf32> to vector<16x128xf32>
    %180 = arith.addf %176, %179 : vector<16x128xf32>
    %181 = arith.addf %54, %180 : vector<16x128xf32>
    %c0_63 = arith.constant 0 : index
    %c0_64 = arith.constant 0 : index
    %c0_65 = arith.constant 0 : index
    %182 = vector.load %arg13[%c0_63, %c0_64, %c0_65] : memref<2x1x128xf32, #tpu.memory_space<vmem>>, vector<1x1x128xf32>
    %183 = vector.shape_cast %182 : vector<1x1x128xf32> to vector<1x128xf32>
    %c0_66 = arith.constant 0 : index
    %c0_67 = arith.constant 0 : index
    %c0_68 = arith.constant 0 : index
    %184 = vector.load %arg14[%c0_66, %c0_67, %c0_68] : memref<2x1x128xf32, #tpu.memory_space<vmem>>, vector<1x1x128xf32>
    %185 = vector.shape_cast %184 : vector<1x1x128xf32> to vector<1x128xf32>
    %cst_69 = arith.constant dense<0.000000e+00> : vector<16xf32>
    %186 = vector.multi_reduction <add>, %181, %cst_69 [1] : vector<16x128xf32> to vector<16xf32>
    %187 = vector.shape_cast %186 : vector<16xf32> to vector<16x1xf32>
    %cst_70 = arith.constant 1.280000e+02 : f32
    %188 = vector.broadcast %cst_70 : f32 to vector<16x1xf32>
    %189 = arith.divf %187, %188 : vector<16x1xf32>
    %190 = vector.broadcast %189 : vector<16x1xf32> to vector<16x128xf32>
    %191 = arith.subf %181, %190 : vector<16x128xf32>
    %192 = arith.mulf %191, %191 : vector<16x128xf32>
    %cst_71 = arith.constant dense<0.000000e+00> : vector<16xf32>
    %193 = vector.multi_reduction <add>, %192, %cst_71 [1] : vector<16x128xf32> to vector<16xf32>
    %194 = vector.shape_cast %193 : vector<16xf32> to vector<16x1xf32>
    %cst_72 = arith.constant 1.280000e+02 : f32
    %195 = vector.broadcast %cst_72 : f32 to vector<16x1xf32>
    %196 = arith.divf %194, %195 : vector<16x1xf32>
    %197 = vector.broadcast %189 : vector<16x1xf32> to vector<16x128xf32>
    %198 = arith.subf %181, %197 : vector<16x128xf32>
    %cst_73 = arith.constant 9.99999996E-13 : f32
    %199 = vector.broadcast %cst_73 : f32 to vector<16x1xf32>
    %200 = arith.addf %196, %199 : vector<16x1xf32>
    %201 = math.rsqrt %200 : vector<16x1xf32>
    %202 = vector.broadcast %201 : vector<16x1xf32> to vector<16x128xf32>
    %203 = arith.mulf %198, %202 : vector<16x128xf32>
    %204 = vector.broadcast %183 : vector<1x128xf32> to vector<16x128xf32>
    %205 = arith.mulf %203, %204 : vector<16x128xf32>
    %206 = vector.broadcast %185 : vector<1x128xf32> to vector<16x128xf32>
    %207 = arith.addf %205, %206 : vector<16x128xf32>
    %c0_74 = arith.constant 0 : index
    %c0_75 = arith.constant 0 : index
    %c0_76 = arith.constant 0 : index
    %208 = vector.load %arg15[%c0_74, %c0_75, %c0_76] : memref<2x128x512xbf16, #tpu.memory_space<vmem>>, vector<1x128x512xbf16>
    %209 = vector.shape_cast %208 : vector<1x128x512xbf16> to vector<128x512xbf16>
    %210 = arith.truncf %207 : vector<16x128xf32> to vector<16x128xbf16>
    %cst_77 = arith.constant dense<0.000000e+00> : vector<16x512xf32>
    %211 = tpu.matmul %210, %209, %cst_77 {dimension_numbers = #tpu.dot_dimension_numbers<[1], [0], [0], [1], [0, 0, 1, 1], [], []>} : vector<16x128xbf16>, vector<128x512xbf16>, vector<16x512xf32> -> vector<16x512xf32>
    %c0_78 = arith.constant 0 : index
    %c0_79 = arith.constant 0 : index
    %c0_80 = arith.constant 0 : index
    %212 = vector.load %arg16[%c0_78, %c0_79, %c0_80] : memref<2x1x512xf32, #tpu.memory_space<vmem>>, vector<1x1x512xf32>
    %213 = vector.shape_cast %212 : vector<1x1x512xf32> to vector<1x512xf32>
    %214 = vector.broadcast %213 : vector<1x512xf32> to vector<16x512xf32>
    %215 = arith.addf %211, %214 : vector<16x512xf32>
    %216 = arith.mulf %215, %215 : vector<16x512xf32>
    %217 = arith.mulf %215, %216 : vector<16x512xf32>
    %cst_81 = arith.constant 4.471500e-02 : f32
    %218 = vector.broadcast %cst_81 : f32 to vector<16x512xf32>
    %219 = arith.mulf %218, %217 : vector<16x512xf32>
    %220 = arith.addf %215, %219 : vector<16x512xf32>
    %cst_82 = arith.constant 0.797884583 : f32
    %221 = vector.broadcast %cst_82 : f32 to vector<16x512xf32>
    %222 = arith.mulf %221, %220 : vector<16x512xf32>
    %223 = math.tanh %222 : vector<16x512xf32>
    %cst_83 = arith.constant 1.000000e+00 : f32
    %224 = vector.broadcast %cst_83 : f32 to vector<16x512xf32>
    %225 = arith.addf %224, %223 : vector<16x512xf32>
    %cst_84 = arith.constant 5.000000e-01 : f32
    %226 = vector.broadcast %cst_84 : f32 to vector<16x512xf32>
    %227 = arith.mulf %226, %225 : vector<16x512xf32>
    %228 = arith.mulf %215, %227 : vector<16x512xf32>
    %c0_85 = arith.constant 0 : index
    %c0_86 = arith.constant 0 : index
    %c0_87 = arith.constant 0 : index
    %229 = vector.load %arg17[%c0_85, %c0_86, %c0_87] : memref<2x512x128xbf16, #tpu.memory_space<vmem>>, vector<1x512x128xbf16>
    %230 = vector.shape_cast %229 : vector<1x512x128xbf16> to vector<512x128xbf16>
    %231 = arith.truncf %228 : vector<16x512xf32> to vector<16x512xbf16>
    %cst_88 = arith.constant dense<0.000000e+00> : vector<16x128xf32>
    %232 = tpu.matmul %231, %230, %cst_88 {dimension_numbers = #tpu.dot_dimension_numbers<[1], [0], [0], [1], [0, 0, 1, 1], [], []>} : vector<16x512xbf16>, vector<512x128xbf16>, vector<16x128xf32> -> vector<16x128xf32>
    %c0_89 = arith.constant 0 : index
    %c0_90 = arith.constant 0 : index
    %c0_91 = arith.constant 0 : index
    %233 = vector.load %arg18[%c0_89, %c0_90, %c0_91] : memref<2x1x128xf32, #tpu.memory_space<vmem>>, vector<1x1x128xf32>
    %234 = vector.shape_cast %233 : vector<1x1x128xf32> to vector<1x128xf32>
    %235 = vector.broadcast %234 : vector<1x128xf32> to vector<16x128xf32>
    %236 = arith.addf %232, %235 : vector<16x128xf32>
    %237 = arith.addf %207, %236 : vector<16x128xf32>
    %c0_92 = arith.constant 0 : index
    %c0_93 = arith.constant 0 : index
    %c0_94 = arith.constant 0 : index
    %238 = vector.load %arg19[%c0_92, %c0_93, %c0_94] : memref<2x1x128xf32, #tpu.memory_space<vmem>>, vector<1x1x128xf32>
    %239 = vector.shape_cast %238 : vector<1x1x128xf32> to vector<1x128xf32>
    %c0_95 = arith.constant 0 : index
    %c0_96 = arith.constant 0 : index
    %c0_97 = arith.constant 0 : index
    %240 = vector.load %arg20[%c0_95, %c0_96, %c0_97] : memref<2x1x128xf32, #tpu.memory_space<vmem>>, vector<1x1x128xf32>
    %241 = vector.shape_cast %240 : vector<1x1x128xf32> to vector<1x128xf32>
    %cst_98 = arith.constant dense<0.000000e+00> : vector<16xf32>
    %242 = vector.multi_reduction <add>, %237, %cst_98 [1] : vector<16x128xf32> to vector<16xf32>
    %243 = vector.shape_cast %242 : vector<16xf32> to vector<16x1xf32>
    %cst_99 = arith.constant 1.280000e+02 : f32
    %244 = vector.broadcast %cst_99 : f32 to vector<16x1xf32>
    %245 = arith.divf %243, %244 : vector<16x1xf32>
    %246 = vector.broadcast %245 : vector<16x1xf32> to vector<16x128xf32>
    %247 = arith.subf %237, %246 : vector<16x128xf32>
    %248 = arith.mulf %247, %247 : vector<16x128xf32>
    %cst_100 = arith.constant dense<0.000000e+00> : vector<16xf32>
    %249 = vector.multi_reduction <add>, %248, %cst_100 [1] : vector<16x128xf32> to vector<16xf32>
    %250 = vector.shape_cast %249 : vector<16xf32> to vector<16x1xf32>
    %cst_101 = arith.constant 1.280000e+02 : f32
    %251 = vector.broadcast %cst_101 : f32 to vector<16x1xf32>
    %252 = arith.divf %250, %251 : vector<16x1xf32>
    %253 = vector.broadcast %245 : vector<16x1xf32> to vector<16x128xf32>
    %254 = arith.subf %237, %253 : vector<16x128xf32>
    %cst_102 = arith.constant 9.99999996E-13 : f32
    %255 = vector.broadcast %cst_102 : f32 to vector<16x1xf32>
    %256 = arith.addf %252, %255 : vector<16x1xf32>
    %257 = math.rsqrt %256 : vector<16x1xf32>
    %258 = vector.broadcast %257 : vector<16x1xf32> to vector<16x128xf32>
    %259 = arith.mulf %254, %258 : vector<16x128xf32>
    %260 = vector.broadcast %239 : vector<1x128xf32> to vector<16x128xf32>
    %261 = arith.mulf %259, %260 : vector<16x128xf32>
    %262 = vector.broadcast %241 : vector<1x128xf32> to vector<16x128xf32>
    %263 = arith.addf %261, %262 : vector<16x128xf32>
    %c1 = arith.constant 1 : index
    %c0_103 = arith.constant 0 : index
    %c0_104 = arith.constant 0 : index
    %264 = vector.load %arg5[%c1, %c0_103, %c0_104] : memref<2x128x128xbf16, #tpu.memory_space<vmem>>, vector<1x128x128xbf16>
    %265 = vector.shape_cast %264 : vector<1x128x128xbf16> to vector<128x128xbf16>
    %266 = arith.truncf %263 : vector<16x128xf32> to vector<16x128xbf16>
    %cst_105 = arith.constant dense<0.000000e+00> : vector<16x128xf32>
    %267 = tpu.matmul %266, %265, %cst_105 {dimension_numbers = #tpu.dot_dimension_numbers<[1], [0], [0], [1], [0, 0, 1, 1], [], []>} : vector<16x128xbf16>, vector<128x128xbf16>, vector<16x128xf32> -> vector<16x128xf32>
    %c1_106 = arith.constant 1 : index
    %c0_107 = arith.constant 0 : index
    %c0_108 = arith.constant 0 : index
    %268 = vector.load %arg6[%c1_106, %c0_107, %c0_108] : memref<2x1x128xf32, #tpu.memory_space<vmem>>, vector<1x1x128xf32>
    %269 = vector.shape_cast %268 : vector<1x1x128xf32> to vector<1x128xf32>
    %270 = vector.broadcast %269 : vector<1x128xf32> to vector<16x128xf32>
    %271 = arith.addf %267, %270 : vector<16x128xf32>
    %c1_109 = arith.constant 1 : index
    %c0_110 = arith.constant 0 : index
    %c0_111 = arith.constant 0 : index
    %272 = vector.load %arg7[%c1_109, %c0_110, %c0_111] : memref<2x128x128xbf16, #tpu.memory_space<vmem>>, vector<1x128x128xbf16>
    %273 = vector.shape_cast %272 : vector<1x128x128xbf16> to vector<128x128xbf16>
    %274 = arith.truncf %263 : vector<16x128xf32> to vector<16x128xbf16>
    %cst_112 = arith.constant dense<0.000000e+00> : vector<16x128xf32>
    %275 = tpu.matmul %274, %273, %cst_112 {dimension_numbers = #tpu.dot_dimension_numbers<[1], [0], [0], [1], [0, 0, 1, 1], [], []>} : vector<16x128xbf16>, vector<128x128xbf16>, vector<16x128xf32> -> vector<16x128xf32>
    %c1_113 = arith.constant 1 : index
    %c0_114 = arith.constant 0 : index
    %c0_115 = arith.constant 0 : index
    %276 = vector.load %arg8[%c1_113, %c0_114, %c0_115] : memref<2x1x128xf32, #tpu.memory_space<vmem>>, vector<1x1x128xf32>
    %277 = vector.shape_cast %276 : vector<1x1x128xf32> to vector<1x128xf32>
    %278 = vector.broadcast %277 : vector<1x128xf32> to vector<16x128xf32>
    %279 = arith.addf %275, %278 : vector<16x128xf32>
    %c1_116 = arith.constant 1 : index
    %c0_117 = arith.constant 0 : index
    %c0_118 = arith.constant 0 : index
    %280 = vector.load %arg9[%c1_116, %c0_117, %c0_118] : memref<2x128x128xbf16, #tpu.memory_space<vmem>>, vector<1x128x128xbf16>
    %281 = vector.shape_cast %280 : vector<1x128x128xbf16> to vector<128x128xbf16>
    %282 = arith.truncf %263 : vector<16x128xf32> to vector<16x128xbf16>
    %cst_119 = arith.constant dense<0.000000e+00> : vector<16x128xf32>
    %283 = tpu.matmul %282, %281, %cst_119 {dimension_numbers = #tpu.dot_dimension_numbers<[1], [0], [0], [1], [0, 0, 1, 1], [], []>} : vector<16x128xbf16>, vector<128x128xbf16>, vector<16x128xf32> -> vector<16x128xf32>
    %c1_120 = arith.constant 1 : index
    %c0_121 = arith.constant 0 : index
    %c0_122 = arith.constant 0 : index
    %284 = vector.load %arg10[%c1_120, %c0_121, %c0_122] : memref<2x1x128xf32, #tpu.memory_space<vmem>>, vector<1x1x128xf32>
    %285 = vector.shape_cast %284 : vector<1x1x128xf32> to vector<1x128xf32>
    %286 = vector.broadcast %285 : vector<1x128xf32> to vector<16x128xf32>
    %287 = arith.addf %283, %286 : vector<16x128xf32>
    %288 = arith.truncf %279 : vector<16x128xf32> to vector<16x128xbf16>
    %cst_123 = arith.constant 0.000000e+00 : f32
    %289 = vector.broadcast %cst_123 : f32 to vector<16x128xf32>
    %290 = vector.broadcast %7 : vector<1x128xf32> to vector<16x128xf32>
    %291 = arith.mulf %271, %290 : vector<16x128xf32>
    %292 = arith.truncf %291 : vector<16x128xf32> to vector<16x128xbf16>
    "tpu.trace_start"() <{level = 10 : i32, message = "qd,kd->qk"}> : () -> ()
    %cst_124 = arith.constant dense<0.000000e+00> : vector<16x16xf32>
    %293 = tpu.matmul %292, %288, %cst_124 {dimension_numbers = #tpu.dot_dimension_numbers<[1], [1], [0], [0], [0, 0, 1, 0], [], []>} : vector<16x128xbf16>, vector<16x128xbf16>, vector<16x16xf32> -> vector<16x16xf32>
    "tpu.trace_stop"() : () -> ()
    %cst_125 = arith.constant 0.176776692 : f32
    %294 = vector.broadcast %cst_125 : f32 to vector<16x16xf32>
    %295 = arith.mulf %293, %294 : vector<16x16xf32>
    %296 = arith.addf %295, %29 : vector<16x16xf32>
    %cst_126 = arith.constant dense<0xFF800000> : vector<16xf32>
    %297 = vector.multi_reduction <maximumf>, %296, %cst_126 [1] : vector<16x16xf32> to vector<16xf32>
    %298 = vector.shape_cast %297 : vector<16xf32> to vector<16x1xf32>
    %299 = vector.broadcast %298 : vector<16x1xf32> to vector<16x16xf32>
    %300 = arith.subf %296, %299 : vector<16x16xf32>
    %301 = math.exp %300 : vector<16x16xf32>
    %cst_127 = arith.constant dense<0.000000e+00> : vector<16xf32>
    %302 = vector.multi_reduction <add>, %301, %cst_127 [1] : vector<16x16xf32> to vector<16xf32>
    %303 = vector.shape_cast %302 : vector<16xf32> to vector<16x1xf32>
    %304 = tpu.reciprocal %303 {approx = true} : vector<16x1xf32> -> vector<16x1xf32>
    %305 = vector.broadcast %304 : vector<16x1xf32> to vector<16x16xf32>
    %306 = arith.mulf %301, %305 : vector<16x16xf32>
    %307 = arith.truncf %306 : vector<16x16xf32> to vector<16x16xbf16>
    %308 = vector.broadcast %7 : vector<1x128xf32> to vector<16x128xf32>
    %309 = arith.mulf %287, %308 : vector<16x128xf32>
    %310 = arith.truncf %309 : vector<16x128xf32> to vector<16x128xbf16>
    %cst_128 = arith.constant dense<0.000000e+00> : vector<16x128xf32>
    %311 = tpu.matmul %307, %310, %cst_128 {dimension_numbers = #tpu.dot_dimension_numbers<[1], [0], [0], [1], [0, 0, 1, 1], [], []>} : vector<16x16xbf16>, vector<16x128xbf16>, vector<16x128xf32> -> vector<16x128xf32>
    %312 = arith.addf %289, %311 : vector<16x128xf32>
    %313 = vector.broadcast %14 : vector<1x128xf32> to vector<16x128xf32>
    %314 = arith.mulf %271, %313 : vector<16x128xf32>
    %315 = arith.truncf %314 : vector<16x128xf32> to vector<16x128xbf16>
    "tpu.trace_start"() <{level = 10 : i32, message = "qd,kd->qk"}> : () -> ()
    %cst_129 = arith.constant dense<0.000000e+00> : vector<16x16xf32>
    %316 = tpu.matmul %315, %288, %cst_129 {dimension_numbers = #tpu.dot_dimension_numbers<[1], [1], [0], [0], [0, 0, 1, 0], [], []>} : vector<16x128xbf16>, vector<16x128xbf16>, vector<16x16xf32> -> vector<16x16xf32>
    "tpu.trace_stop"() : () -> ()
    %cst_130 = arith.constant 0.176776692 : f32
    %317 = vector.broadcast %cst_130 : f32 to vector<16x16xf32>
    %318 = arith.mulf %316, %317 : vector<16x16xf32>
    %319 = arith.addf %318, %29 : vector<16x16xf32>
    %cst_131 = arith.constant dense<0xFF800000> : vector<16xf32>
    %320 = vector.multi_reduction <maximumf>, %319, %cst_131 [1] : vector<16x16xf32> to vector<16xf32>
    %321 = vector.shape_cast %320 : vector<16xf32> to vector<16x1xf32>
    %322 = vector.broadcast %321 : vector<16x1xf32> to vector<16x16xf32>
    %323 = arith.subf %319, %322 : vector<16x16xf32>
    %324 = math.exp %323 : vector<16x16xf32>
    %cst_132 = arith.constant dense<0.000000e+00> : vector<16xf32>
    %325 = vector.multi_reduction <add>, %324, %cst_132 [1] : vector<16x16xf32> to vector<16xf32>
    %326 = vector.shape_cast %325 : vector<16xf32> to vector<16x1xf32>
    %327 = tpu.reciprocal %326 {approx = true} : vector<16x1xf32> -> vector<16x1xf32>
    %328 = vector.broadcast %327 : vector<16x1xf32> to vector<16x16xf32>
    %329 = arith.mulf %324, %328 : vector<16x16xf32>
    %330 = arith.truncf %329 : vector<16x16xf32> to vector<16x16xbf16>
    %331 = vector.broadcast %14 : vector<1x128xf32> to vector<16x128xf32>
    %332 = arith.mulf %287, %331 : vector<16x128xf32>
    %333 = arith.truncf %332 : vector<16x128xf32> to vector<16x128xbf16>
    %cst_133 = arith.constant dense<0.000000e+00> : vector<16x128xf32>
    %334 = tpu.matmul %330, %333, %cst_133 {dimension_numbers = #tpu.dot_dimension_numbers<[1], [0], [0], [1], [0, 0, 1, 1], [], []>} : vector<16x16xbf16>, vector<16x128xbf16>, vector<16x128xf32> -> vector<16x128xf32>
    %335 = arith.addf %312, %334 : vector<16x128xf32>
    %336 = vector.broadcast %21 : vector<1x128xf32> to vector<16x128xf32>
    %337 = arith.mulf %271, %336 : vector<16x128xf32>
    %338 = arith.truncf %337 : vector<16x128xf32> to vector<16x128xbf16>
    "tpu.trace_start"() <{level = 10 : i32, message = "qd,kd->qk"}> : () -> ()
    %cst_134 = arith.constant dense<0.000000e+00> : vector<16x16xf32>
    %339 = tpu.matmul %338, %288, %cst_134 {dimension_numbers = #tpu.dot_dimension_numbers<[1], [1], [0], [0], [0, 0, 1, 0], [], []>} : vector<16x128xbf16>, vector<16x128xbf16>, vector<16x16xf32> -> vector<16x16xf32>
    "tpu.trace_stop"() : () -> ()
    %cst_135 = arith.constant 0.176776692 : f32
    %340 = vector.broadcast %cst_135 : f32 to vector<16x16xf32>
    %341 = arith.mulf %339, %340 : vector<16x16xf32>
    %342 = arith.addf %341, %29 : vector<16x16xf32>
    %cst_136 = arith.constant dense<0xFF800000> : vector<16xf32>
    %343 = vector.multi_reduction <maximumf>, %342, %cst_136 [1] : vector<16x16xf32> to vector<16xf32>
    %344 = vector.shape_cast %343 : vector<16xf32> to vector<16x1xf32>
    %345 = vector.broadcast %344 : vector<16x1xf32> to vector<16x16xf32>
    %346 = arith.subf %342, %345 : vector<16x16xf32>
    %347 = math.exp %346 : vector<16x16xf32>
    %cst_137 = arith.constant dense<0.000000e+00> : vector<16xf32>
    %348 = vector.multi_reduction <add>, %347, %cst_137 [1] : vector<16x16xf32> to vector<16xf32>
    %349 = vector.shape_cast %348 : vector<16xf32> to vector<16x1xf32>
    %350 = tpu.reciprocal %349 {approx = true} : vector<16x1xf32> -> vector<16x1xf32>
    %351 = vector.broadcast %350 : vector<16x1xf32> to vector<16x16xf32>
    %352 = arith.mulf %347, %351 : vector<16x16xf32>
    %353 = arith.truncf %352 : vector<16x16xf32> to vector<16x16xbf16>
    %354 = vector.broadcast %21 : vector<1x128xf32> to vector<16x128xf32>
    %355 = arith.mulf %287, %354 : vector<16x128xf32>
    %356 = arith.truncf %355 : vector<16x128xf32> to vector<16x128xbf16>
    %cst_138 = arith.constant dense<0.000000e+00> : vector<16x128xf32>
    %357 = tpu.matmul %353, %356, %cst_138 {dimension_numbers = #tpu.dot_dimension_numbers<[1], [0], [0], [1], [0, 0, 1, 1], [], []>} : vector<16x16xbf16>, vector<16x128xbf16>, vector<16x128xf32> -> vector<16x128xf32>
    %358 = arith.addf %335, %357 : vector<16x128xf32>
    %359 = vector.broadcast %28 : vector<1x128xf32> to vector<16x128xf32>
    %360 = arith.mulf %271, %359 : vector<16x128xf32>
    %361 = arith.truncf %360 : vector<16x128xf32> to vector<16x128xbf16>
    "tpu.trace_start"() <{level = 10 : i32, message = "qd,kd->qk"}> : () -> ()
    %cst_139 = arith.constant dense<0.000000e+00> : vector<16x16xf32>
    %362 = tpu.matmul %361, %288, %cst_139 {dimension_numbers = #tpu.dot_dimension_numbers<[1], [1], [0], [0], [0, 0, 1, 0], [], []>} : vector<16x128xbf16>, vector<16x128xbf16>, vector<16x16xf32> -> vector<16x16xf32>
    "tpu.trace_stop"() : () -> ()
    %cst_140 = arith.constant 0.176776692 : f32
    %363 = vector.broadcast %cst_140 : f32 to vector<16x16xf32>
    %364 = arith.mulf %362, %363 : vector<16x16xf32>
    %365 = arith.addf %364, %29 : vector<16x16xf32>
    %cst_141 = arith.constant dense<0xFF800000> : vector<16xf32>
    %366 = vector.multi_reduction <maximumf>, %365, %cst_141 [1] : vector<16x16xf32> to vector<16xf32>
    %367 = vector.shape_cast %366 : vector<16xf32> to vector<16x1xf32>
    %368 = vector.broadcast %367 : vector<16x1xf32> to vector<16x16xf32>
    %369 = arith.subf %365, %368 : vector<16x16xf32>
    %370 = math.exp %369 : vector<16x16xf32>
    %cst_142 = arith.constant dense<0.000000e+00> : vector<16xf32>
    %371 = vector.multi_reduction <add>, %370, %cst_142 [1] : vector<16x16xf32> to vector<16xf32>
    %372 = vector.shape_cast %371 : vector<16xf32> to vector<16x1xf32>
    %373 = tpu.reciprocal %372 {approx = true} : vector<16x1xf32> -> vector<16x1xf32>
    %374 = vector.broadcast %373 : vector<16x1xf32> to vector<16x16xf32>
    %375 = arith.mulf %370, %374 : vector<16x16xf32>
    %376 = arith.truncf %375 : vector<16x16xf32> to vector<16x16xbf16>
    %377 = vector.broadcast %28 : vector<1x128xf32> to vector<16x128xf32>
    %378 = arith.mulf %287, %377 : vector<16x128xf32>
    %379 = arith.truncf %378 : vector<16x128xf32> to vector<16x128xbf16>
    %cst_143 = arith.constant dense<0.000000e+00> : vector<16x128xf32>
    %380 = tpu.matmul %376, %379, %cst_143 {dimension_numbers = #tpu.dot_dimension_numbers<[1], [0], [0], [1], [0, 0, 1, 1], [], []>} : vector<16x16xbf16>, vector<16x128xbf16>, vector<16x128xf32> -> vector<16x128xf32>
    %381 = arith.addf %358, %380 : vector<16x128xf32>
    %c1_144 = arith.constant 1 : index
    %c0_145 = arith.constant 0 : index
    %c0_146 = arith.constant 0 : index
    %382 = vector.load %arg11[%c1_144, %c0_145, %c0_146] : memref<2x128x128xbf16, #tpu.memory_space<vmem>>, vector<1x128x128xbf16>
    %383 = vector.shape_cast %382 : vector<1x128x128xbf16> to vector<128x128xbf16>
    %384 = arith.truncf %381 : vector<16x128xf32> to vector<16x128xbf16>
    %cst_147 = arith.constant dense<0.000000e+00> : vector<16x128xf32>
    %385 = tpu.matmul %384, %383, %cst_147 {dimension_numbers = #tpu.dot_dimension_numbers<[1], [0], [0], [1], [0, 0, 1, 1], [], []>} : vector<16x128xbf16>, vector<128x128xbf16>, vector<16x128xf32> -> vector<16x128xf32>
    %c1_148 = arith.constant 1 : index
    %c0_149 = arith.constant 0 : index
    %c0_150 = arith.constant 0 : index
    %386 = vector.load %arg12[%c1_148, %c0_149, %c0_150] : memref<2x1x128xf32, #tpu.memory_space<vmem>>, vector<1x1x128xf32>
    %387 = vector.shape_cast %386 : vector<1x1x128xf32> to vector<1x128xf32>
    %388 = vector.broadcast %387 : vector<1x128xf32> to vector<16x128xf32>
    %389 = arith.addf %385, %388 : vector<16x128xf32>
    %390 = arith.addf %263, %389 : vector<16x128xf32>
    %c1_151 = arith.constant 1 : index
    %c0_152 = arith.constant 0 : index
    %c0_153 = arith.constant 0 : index
    %391 = vector.load %arg13[%c1_151, %c0_152, %c0_153] : memref<2x1x128xf32, #tpu.memory_space<vmem>>, vector<1x1x128xf32>
    %392 = vector.shape_cast %391 : vector<1x1x128xf32> to vector<1x128xf32>
    %c1_154 = arith.constant 1 : index
    %c0_155 = arith.constant 0 : index
    %c0_156 = arith.constant 0 : index
    %393 = vector.load %arg14[%c1_154, %c0_155, %c0_156] : memref<2x1x128xf32, #tpu.memory_space<vmem>>, vector<1x1x128xf32>
    %394 = vector.shape_cast %393 : vector<1x1x128xf32> to vector<1x128xf32>
    %cst_157 = arith.constant dense<0.000000e+00> : vector<16xf32>
    %395 = vector.multi_reduction <add>, %390, %cst_157 [1] : vector<16x128xf32> to vector<16xf32>
    %396 = vector.shape_cast %395 : vector<16xf32> to vector<16x1xf32>
    %cst_158 = arith.constant 1.280000e+02 : f32
    %397 = vector.broadcast %cst_158 : f32 to vector<16x1xf32>
    %398 = arith.divf %396, %397 : vector<16x1xf32>
    %399 = vector.broadcast %398 : vector<16x1xf32> to vector<16x128xf32>
    %400 = arith.subf %390, %399 : vector<16x128xf32>
    %401 = arith.mulf %400, %400 : vector<16x128xf32>
    %cst_159 = arith.constant dense<0.000000e+00> : vector<16xf32>
    %402 = vector.multi_reduction <add>, %401, %cst_159 [1] : vector<16x128xf32> to vector<16xf32>
    %403 = vector.shape_cast %402 : vector<16xf32> to vector<16x1xf32>
    %cst_160 = arith.constant 1.280000e+02 : f32
    %404 = vector.broadcast %cst_160 : f32 to vector<16x1xf32>
    %405 = arith.divf %403, %404 : vector<16x1xf32>
    %406 = vector.broadcast %398 : vector<16x1xf32> to vector<16x128xf32>
    %407 = arith.subf %390, %406 : vector<16x128xf32>
    %cst_161 = arith.constant 9.99999996E-13 : f32
    %408 = vector.broadcast %cst_161 : f32 to vector<16x1xf32>
    %409 = arith.addf %405, %408 : vector<16x1xf32>
    %410 = math.rsqrt %409 : vector<16x1xf32>
    %411 = vector.broadcast %410 : vector<16x1xf32> to vector<16x128xf32>
    %412 = arith.mulf %407, %411 : vector<16x128xf32>
    %413 = vector.broadcast %392 : vector<1x128xf32> to vector<16x128xf32>
    %414 = arith.mulf %412, %413 : vector<16x128xf32>
    %415 = vector.broadcast %394 : vector<1x128xf32> to vector<16x128xf32>
    %416 = arith.addf %414, %415 : vector<16x128xf32>
    %c1_162 = arith.constant 1 : index
    %c0_163 = arith.constant 0 : index
    %c0_164 = arith.constant 0 : index
    %417 = vector.load %arg15[%c1_162, %c0_163, %c0_164] : memref<2x128x512xbf16, #tpu.memory_space<vmem>>, vector<1x128x512xbf16>
    %418 = vector.shape_cast %417 : vector<1x128x512xbf16> to vector<128x512xbf16>
    %419 = arith.truncf %416 : vector<16x128xf32> to vector<16x128xbf16>
    %cst_165 = arith.constant dense<0.000000e+00> : vector<16x512xf32>
    %420 = tpu.matmul %419, %418, %cst_165 {dimension_numbers = #tpu.dot_dimension_numbers<[1], [0], [0], [1], [0, 0, 1, 1], [], []>} : vector<16x128xbf16>, vector<128x512xbf16>, vector<16x512xf32> -> vector<16x512xf32>
    %c1_166 = arith.constant 1 : index
    %c0_167 = arith.constant 0 : index
    %c0_168 = arith.constant 0 : index
    %421 = vector.load %arg16[%c1_166, %c0_167, %c0_168] : memref<2x1x512xf32, #tpu.memory_space<vmem>>, vector<1x1x512xf32>
    %422 = vector.shape_cast %421 : vector<1x1x512xf32> to vector<1x512xf32>
    %423 = vector.broadcast %422 : vector<1x512xf32> to vector<16x512xf32>
    %424 = arith.addf %420, %423 : vector<16x512xf32>
    %425 = arith.mulf %424, %424 : vector<16x512xf32>
    %426 = arith.mulf %424, %425 : vector<16x512xf32>
    %cst_169 = arith.constant 4.471500e-02 : f32
    %427 = vector.broadcast %cst_169 : f32 to vector<16x512xf32>
    %428 = arith.mulf %427, %426 : vector<16x512xf32>
    %429 = arith.addf %424, %428 : vector<16x512xf32>
    %cst_170 = arith.constant 0.797884583 : f32
    %430 = vector.broadcast %cst_170 : f32 to vector<16x512xf32>
    %431 = arith.mulf %430, %429 : vector<16x512xf32>
    %432 = math.tanh %431 : vector<16x512xf32>
    %cst_171 = arith.constant 1.000000e+00 : f32
    %433 = vector.broadcast %cst_171 : f32 to vector<16x512xf32>
    %434 = arith.addf %433, %432 : vector<16x512xf32>
    %cst_172 = arith.constant 5.000000e-01 : f32
    %435 = vector.broadcast %cst_172 : f32 to vector<16x512xf32>
    %436 = arith.mulf %435, %434 : vector<16x512xf32>
    %437 = arith.mulf %424, %436 : vector<16x512xf32>
    %c1_173 = arith.constant 1 : index
    %c0_174 = arith.constant 0 : index
    %c0_175 = arith.constant 0 : index
    %438 = vector.load %arg17[%c1_173, %c0_174, %c0_175] : memref<2x512x128xbf16, #tpu.memory_space<vmem>>, vector<1x512x128xbf16>
    %439 = vector.shape_cast %438 : vector<1x512x128xbf16> to vector<512x128xbf16>
    %440 = arith.truncf %437 : vector<16x512xf32> to vector<16x512xbf16>
    %cst_176 = arith.constant dense<0.000000e+00> : vector<16x128xf32>
    %441 = tpu.matmul %440, %439, %cst_176 {dimension_numbers = #tpu.dot_dimension_numbers<[1], [0], [0], [1], [0, 0, 1, 1], [], []>} : vector<16x512xbf16>, vector<512x128xbf16>, vector<16x128xf32> -> vector<16x128xf32>
    %c1_177 = arith.constant 1 : index
    %c0_178 = arith.constant 0 : index
    %c0_179 = arith.constant 0 : index
    %442 = vector.load %arg18[%c1_177, %c0_178, %c0_179] : memref<2x1x128xf32, #tpu.memory_space<vmem>>, vector<1x1x128xf32>
    %443 = vector.shape_cast %442 : vector<1x1x128xf32> to vector<1x128xf32>
    %444 = vector.broadcast %443 : vector<1x128xf32> to vector<16x128xf32>
    %445 = arith.addf %441, %444 : vector<16x128xf32>
    %446 = arith.addf %416, %445 : vector<16x128xf32>
    %c1_180 = arith.constant 1 : index
    %c0_181 = arith.constant 0 : index
    %c0_182 = arith.constant 0 : index
    %447 = vector.load %arg19[%c1_180, %c0_181, %c0_182] : memref<2x1x128xf32, #tpu.memory_space<vmem>>, vector<1x1x128xf32>
    %448 = vector.shape_cast %447 : vector<1x1x128xf32> to vector<1x128xf32>
    %c1_183 = arith.constant 1 : index
    %c0_184 = arith.constant 0 : index
    %c0_185 = arith.constant 0 : index
    %449 = vector.load %arg20[%c1_183, %c0_184, %c0_185] : memref<2x1x128xf32, #tpu.memory_space<vmem>>, vector<1x1x128xf32>
    %450 = vector.shape_cast %449 : vector<1x1x128xf32> to vector<1x128xf32>
    %cst_186 = arith.constant dense<0.000000e+00> : vector<16xf32>
    %451 = vector.multi_reduction <add>, %446, %cst_186 [1] : vector<16x128xf32> to vector<16xf32>
    %452 = vector.shape_cast %451 : vector<16xf32> to vector<16x1xf32>
    %cst_187 = arith.constant 1.280000e+02 : f32
    %453 = vector.broadcast %cst_187 : f32 to vector<16x1xf32>
    %454 = arith.divf %452, %453 : vector<16x1xf32>
    %455 = vector.broadcast %454 : vector<16x1xf32> to vector<16x128xf32>
    %456 = arith.subf %446, %455 : vector<16x128xf32>
    %457 = arith.mulf %456, %456 : vector<16x128xf32>
    %cst_188 = arith.constant dense<0.000000e+00> : vector<16xf32>
    %458 = vector.multi_reduction <add>, %457, %cst_188 [1] : vector<16x128xf32> to vector<16xf32>
    %459 = vector.shape_cast %458 : vector<16xf32> to vector<16x1xf32>
    %cst_189 = arith.constant 1.280000e+02 : f32
    %460 = vector.broadcast %cst_189 : f32 to vector<16x1xf32>
    %461 = arith.divf %459, %460 : vector<16x1xf32>
    %462 = vector.broadcast %454 : vector<16x1xf32> to vector<16x128xf32>
    %463 = arith.subf %446, %462 : vector<16x128xf32>
    %cst_190 = arith.constant 9.99999996E-13 : f32
    %464 = vector.broadcast %cst_190 : f32 to vector<16x1xf32>
    %465 = arith.addf %461, %464 : vector<16x1xf32>
    %466 = math.rsqrt %465 : vector<16x1xf32>
    %467 = vector.broadcast %466 : vector<16x1xf32> to vector<16x128xf32>
    %468 = arith.mulf %463, %467 : vector<16x128xf32>
    %469 = vector.broadcast %448 : vector<1x128xf32> to vector<16x128xf32>
    %470 = arith.mulf %468, %469 : vector<16x128xf32>
    %471 = vector.broadcast %450 : vector<1x128xf32> to vector<16x128xf32>
    %472 = arith.addf %470, %471 : vector<16x128xf32>
    %c0_191 = arith.constant 0 : index
    %c0_192 = arith.constant 0 : index
    %473 = vector.load %arg21[%c0_191, %c0_192] : memref<128x128xbf16, #tpu.memory_space<vmem>>, vector<128x128xbf16>
    %474 = arith.truncf %472 : vector<16x128xf32> to vector<16x128xbf16>
    %cst_193 = arith.constant dense<0.000000e+00> : vector<16x128xf32>
    %475 = tpu.matmul %474, %473, %cst_193 {dimension_numbers = #tpu.dot_dimension_numbers<[1], [0], [0], [1], [0, 0, 1, 1], [], []>} : vector<16x128xbf16>, vector<128x128xbf16>, vector<16x128xf32> -> vector<16x128xf32>
    %c0_194 = arith.constant 0 : index
    %c0_195 = arith.constant 0 : index
    %476 = vector.load %arg22[%c0_194, %c0_195] : memref<1x128xf32, #tpu.memory_space<vmem>>, vector<1x128xf32>
    %477 = vector.broadcast %476 : vector<1x128xf32> to vector<16x128xf32>
    %478 = arith.addf %475, %477 : vector<16x128xf32>
    %cst_196 = arith.constant 0.000000e+00 : f32
    %479 = vector.broadcast %cst_196 : f32 to vector<16x128xf32>
    %480 = arith.maximumf %478, %479 : vector<16x128xf32>
    %c0_197 = arith.constant 0 : index
    %c0_198 = arith.constant 0 : index
    %481 = vector.load %arg23[%c0_197, %c0_198] : memref<128x128xbf16, #tpu.memory_space<vmem>>, vector<128x128xbf16>
    %482 = arith.truncf %480 : vector<16x128xf32> to vector<16x128xbf16>
    %cst_199 = arith.constant dense<0.000000e+00> : vector<16x128xf32>
    %483 = tpu.matmul %482, %481, %cst_199 {dimension_numbers = #tpu.dot_dimension_numbers<[1], [0], [0], [1], [0, 0, 1, 1], [], []>} : vector<16x128xbf16>, vector<128x128xbf16>, vector<16x128xf32> -> vector<16x128xf32>
    %c0_200 = arith.constant 0 : index
    %c0_201 = arith.constant 0 : index
    %484 = vector.load %arg24[%c0_200, %c0_201] : memref<1x128xf32, #tpu.memory_space<vmem>>, vector<1x128xf32>
    %485 = vector.broadcast %484 : vector<1x128xf32> to vector<16x128xf32>
    %486 = arith.addf %483, %485 : vector<16x128xf32>
    %c0_202 = arith.constant 0 : index
    %c0_203 = arith.constant 0 : index
    %487 = vector.load %arg25[%c0_202, %c0_203] : memref<16x128xf32, #tpu.memory_space<vmem>>, vector<16x128xf32>
    tpu.vector_store %arg25[%c0_202, %c0_203], %486 {strides = array<i32>} : memref<16x128xf32, #tpu.memory_space<vmem>>, vector<16x128xf32>,
    return
  }
  func.func @transform_0(%arg0: i32) -> (i32, i32) {
    %c0_i32 = arith.constant 0 : i32
    %c0_i32_0 = arith.constant 0 : i32
    %c0_i32_1 = arith.constant 0 : i32
    return %c0_i32, %c0_i32_0 : i32, i32
  }
  func.func @transform_1(%arg0: i32) -> (i32, i32) {
    %c0_i32 = arith.constant 0 : i32
    %c0_i32_0 = arith.constant 0 : i32
    %c0_i32_1 = arith.constant 0 : i32
    return %c0_i32, %c0_i32_0 : i32, i32
  }
  func.func @transform_2(%arg0: i32) -> (i32, i32) {
    %c0_i32 = arith.constant 0 : i32
    %c0_i32_0 = arith.constant 0 : i32
    %c0_i32_1 = arith.constant 0 : i32
    return %c0_i32, %c0_i32_0 : i32, i32
  }
  func.func @transform_3(%arg0: i32) -> (i32, i32) {
    %c0_i32 = arith.constant 0 : i32
    %c0_i32_0 = arith.constant 0 : i32
    %c0_i32_1 = arith.constant 0 : i32
    return %c0_i32, %c0_i32_0 : i32, i32
  }
  func.func @transform_4(%arg0: i32) -> (i32, i32, i32) {
    %c0_i32 = arith.constant 0 : i32
    %c0_i32_0 = arith.constant 0 : i32
    %c0_i32_1 = arith.constant 0 : i32
    %c0_i32_2 = arith.constant 0 : i32
    return %c0_i32, %c0_i32_0, %c0_i32_1 : i32, i32, i32
  }
  func.func @transform_5(%arg0: i32) -> (i32, i32, i32) {
    %c0_i32 = arith.constant 0 : i32
    %c0_i32_0 = arith.constant 0 : i32
    %c0_i32_1 = arith.constant 0 : i32
    %c0_i32_2 = arith.constant 0 : i32
    return %c0_i32, %c0_i32_0, %c0_i32_1 : i32, i32, i32
  }
  func.func @transform_6(%arg0: i32) -> (i32, i32, i32) {
    %c0_i32 = arith.constant 0 : i32
    %c0_i32_0 = arith.constant 0 : i32
    %c0_i32_1 = arith.constant 0 : i32
    %c0_i32_2 = arith.constant 0 : i32
    return %c0_i32, %c0_i32_0, %c0_i32_1 : i32, i32, i32
  }
  func.func @transform_7(%arg0: i32) -> (i32, i32, i32) {
    %c0_i32 = arith.constant 0 : i32
    %c0_i32_0 = arith.constant 0 : i32
    %c0_i32_1 = arith.constant 0 : i32
    %c0_i32_2 = arith.constant 0 : i32
    return %c0_i32, %c0_i32_0, %c0_i32_1 : i32, i32, i32
  }
  func.func @transform_8(%arg0: i32) -> (i32, i32, i32) {
    %c0_i32 = arith.constant 0 : i32
    %c0_i32_0 = arith.constant 0 : i32
    %c0_i32_1 = arith.constant 0 : i32
    %c0_i32_2 = arith.constant 0 : i32
    return %c0_i32, %c0_i32_0, %c0_i32_1 : i32, i32, i32
  }
  func.func @transform_9(%arg0: i32) -> (i32, i32, i32) {
    %c0_i32 = arith.constant 0 : i32
    %c0_i32_0 = arith.constant 0 : i32
    %c0_i32_1 = arith.constant 0 : i32
    %c0_i32_2 = arith.constant 0 : i32
    return %c0_i32, %c0_i32_0, %c0_i32_1 : i32, i32, i32
  }
  func.func @transform_10(%arg0: i32) -> (i32, i32, i32) {
    %c0_i32 = arith.constant 0 : i32
    %c0_i32_0 = arith.constant 0 : i32
    %c0_i32_1 = arith.constant 0 : i32
    %c0_i32_2 = arith.constant 0 : i32
    return %c0_i32, %c0_i32_0, %c0_i32_1 : i32, i32, i32
  }
  func.func @transform_11(%arg0: i32) -> (i32, i32, i32) {
    %c0_i32 = arith.constant 0 : i32
    %c0_i32_0 = arith.constant 0 : i32
    %c0_i32_1 = arith.constant 0 : i32
    %c0_i32_2 = arith.constant 0 : i32
    return %c0_i32, %c0_i32_0, %c0_i32_1 : i32, i32, i32
  }
  func.func @transform_12(%arg0: i32) -> (i32, i32, i32) {
    %c0_i32 = arith.constant 0 : i32
    %c0_i32_0 = arith.constant 0 : i32
    %c0_i32_1 = arith.constant 0 : i32
    %c0_i32_2 = arith.constant 0 : i32
    return %c0_i32, %c0_i32_0, %c0_i32_1 : i32, i32, i32
  }
  func.func @transform_13(%arg0: i32) -> (i32, i32, i32) {
    %c0_i32 = arith.constant 0 : i32
    %c0_i32_0 = arith.constant 0 : i32
    %c0_i32_1 = arith.constant 0 : i32
    %c0_i32_2 = arith.constant 0 : i32
    return %c0_i32, %c0_i32_0, %c0_i32_1 : i32, i32, i32
  }
  func.func @transform_14(%arg0: i32) -> (i32, i32, i32) {
    %c0_i32 = arith.constant 0 : i32
    %c0_i32_0 = arith.constant 0 : i32
    %c0_i32_1 = arith.constant 0 : i32
    %c0_i32_2 = arith.constant 0 : i32
    return %c0_i32, %c0_i32_0, %c0_i32_1 : i32, i32, i32
  }
  func.func @transform_15(%arg0: i32) -> (i32, i32, i32) {
    %c0_i32 = arith.constant 0 : i32
    %c0_i32_0 = arith.constant 0 : i32
    %c0_i32_1 = arith.constant 0 : i32
    %c0_i32_2 = arith.constant 0 : i32
    return %c0_i32, %c0_i32_0, %c0_i32_1 : i32, i32, i32
  }
  func.func @transform_16(%arg0: i32) -> (i32, i32, i32) {
    %c0_i32 = arith.constant 0 : i32
    %c0_i32_0 = arith.constant 0 : i32
    %c0_i32_1 = arith.constant 0 : i32
    %c0_i32_2 = arith.constant 0 : i32
    return %c0_i32, %c0_i32_0, %c0_i32_1 : i32, i32, i32
  }
  func.func @transform_17(%arg0: i32) -> (i32, i32, i32) {
    %c0_i32 = arith.constant 0 : i32
    %c0_i32_0 = arith.constant 0 : i32
    %c0_i32_1 = arith.constant 0 : i32
    %c0_i32_2 = arith.constant 0 : i32
    return %c0_i32, %c0_i32_0, %c0_i32_1 : i32, i32, i32
  }
  func.func @transform_18(%arg0: i32) -> (i32, i32, i32) {
    %c0_i32 = arith.constant 0 : i32
    %c0_i32_0 = arith.constant 0 : i32
    %c0_i32_1 = arith.constant 0 : i32
    %c0_i32_2 = arith.constant 0 : i32
    return %c0_i32, %c0_i32_0, %c0_i32_1 : i32, i32, i32
  }
  func.func @transform_19(%arg0: i32) -> (i32, i32, i32) {
    %c0_i32 = arith.constant 0 : i32
    %c0_i32_0 = arith.constant 0 : i32
    %c0_i32_1 = arith.constant 0 : i32
    %c0_i32_2 = arith.constant 0 : i32
    return %c0_i32, %c0_i32_0, %c0_i32_1 : i32, i32, i32
  }
  func.func @transform_20(%arg0: i32) -> (i32, i32) {
    %c0_i32 = arith.constant 0 : i32
    %c0_i32_0 = arith.constant 0 : i32
    %c0_i32_1 = arith.constant 0 : i32
    return %c0_i32, %c0_i32_0 : i32, i32
  }
  func.func @transform_21(%arg0: i32) -> (i32, i32) {
    %c0_i32 = arith.constant 0 : i32
    %c0_i32_0 = arith.constant 0 : i32
    %c0_i32_1 = arith.constant 0 : i32
    return %c0_i32, %c0_i32_0 : i32, i32
  }
  func.func @transform_22(%arg0: i32) -> (i32, i32) {
    %c0_i32 = arith.constant 0 : i32
    %c0_i32_0 = arith.constant 0 : i32
    %c0_i32_1 = arith.constant 0 : i32
    return %c0_i32, %c0_i32_0 : i32, i32
  }
  func.func @transform_23(%arg0: i32) -> (i32, i32) {
    %c0_i32 = arith.constant 0 : i32
    %c0_i32_0 = arith.constant 0 : i32
    %c0_i32_1 = arith.constant 0 : i32
    return %c0_i32, %c0_i32_0 : i32, i32
  }
  func.func @transform_24(%arg0: i32) -> (i32, i32) {
    %c0_i32 = arith.constant 0 : i32
    %c0_i32_0 = arith.constant 0 : i32
    %c0_i32_1 = arith.constant 0 : i32
    return %c0_i32, %c0_i32_0 : i32, i32
  }
}

</mosaic_0001>

<llo_original>
// kernel: bert_classifier_forward.1
$region0: #{bert_classifier_forward.1}
  #allocation0 [shape = 'u32[]', space=smem, size = 0x4, offset = 0x4, fixed_abs, tag = 'smem constant byte address 0x4 - core index']
  #allocation1 [shape = 'u32[72,128]{1,0:T(1,128)}', space=vmem, size = 0x9000, scoped, tag = 'internal scratch']
  %s0 = inlined_call_operand.vmem [shape: f32[16,128], index: 0, kind: input, shape index: {}]
  %s1 = inlined_call_operand.vmem [shape: f32[16,16], index: 1, kind: input, shape index: {}]
  %s2 = inlined_call_operand.vmem [shape: f32[1,128], index: 2, kind: input, shape index: {}]
  %s3 = inlined_call_operand.vmem [shape: f32[1,128], index: 3, kind: input, shape index: {}]
  %s4 = inlined_call_operand.vmem [shape: bf16[2,128,128], index: 4, kind: input, shape index: {}]
  %s5 = inlined_call_operand.vmem [shape: f32[2,1,128], index: 5, kind: input, shape index: {}]
  %s6 = inlined_call_operand.hbm [shape: bf16[2,128,128], index: 6, kind: input, shape index: {}]
  %s7 = inlined_call_operand.vmem [shape: f32[2,1,128], index: 7, kind: input, shape index: {}]
  %s8 = inlined_call_operand.hbm [shape: bf16[2,128,128], index: 8, kind: input, shape index: {}]
  %s9 = inlined_call_operand.vmem [shape: f32[2,1,128], index: 9, kind: input, shape index: {}]
  %s10 = inlined_call_operand.hbm [shape: bf16[2,128,128], index: 10, kind: input, shape index: {}]
  %s11 = inlined_call_operand.vmem [shape: f32[2,1,128], index: 11, kind: input, shape index: {}]
  %s12 = inlined_call_operand.vmem [shape: f32[2,1,128], index: 12, kind: input, shape index: {}]
  %s13 = inlined_call_operand.vmem [shape: f32[2,1,128], index: 13, kind: input, shape index: {}]
  %s14 = inlined_call_operand.hbm [shape: bf16[2,128,512], index: 14, kind: input, shape index: {}]
  %s15 = inlined_call_operand.vmem [shape: f32[2,1,512], index: 15, kind: input, shape index: {}]
  %s16 = inlined_call_operand.hbm [shape: bf16[2,512,128], index: 16, kind: input, shape index: {}]
  %s17 = inlined_call_operand.vmem [shape: f32[2,1,128], index: 17, kind: input, shape index: {}]
  %s18 = inlined_call_operand.vmem [shape: f32[2,1,128], index: 18, kind: input, shape index: {}]
  %s19 = inlined_call_operand.vmem [shape: f32[2,1,128], index: 19, kind: input, shape index: {}]
  %s20 = inlined_call_operand.vmem [shape: bf16[128,128], index: 20, kind: input, shape index: {}]
  %s21 = inlined_call_operand.vmem [shape: f32[1,128], index: 21, kind: input, shape index: {}]
  %s22 = inlined_call_operand.hbm [shape: bf16[128,128], index: 22, kind: input, shape index: {}]
  %s23 = inlined_call_operand.vmem [shape: f32[1,128], index: 23, kind: input, shape index: {}]
  %s24 = inlined_call_operand.vmem [shape: f32[16,128], index: 24, kind: output, shape index: {}]
  %s25 = sld [smem:[#allocation0]]
  $region130: #{bert_classifier_forward.1} parent=0
    _
  %s27 = ssub.s32 1, %s25
  %s28 = scalar_select 0, %s27, %s25
  $region1: #{bert_classifier_forward.1} parent=0
    #allocation2 [shape = 'u8[65536]{0}', space=vmem, size = 0x10000, scoped, tag = 'input window, operand 6, single buffered']
    #allocation3 [shape = 's32[1]{0}', space=sflag, size = 0x4, scoped, tag = 'scoped memory for bert_classifier_forward.1']
    #allocation4 [shape = 'u8[65536]{0}', space=vmem, size = 0x10000, scoped, tag = 'input window, operand 8, single buffered']
    #allocation5 [shape = 's32[1]{0}', space=sflag, size = 0x4, scoped, tag = 'scoped memory for bert_classifier_forward.1']
    #allocation6 [shape = 'u8[65536]{0}', space=vmem, size = 0x10000, scoped, tag = 'input window, operand 10, single buffered']
    #allocation7 [shape = 'u8[262144]{0}', space=vmem, size = 0x40000, scoped, tag = 'input window, operand 14, single buffered']
    #allocation8 [shape = 's32[1]{0}', space=sflag, size = 0x4, scoped, tag = 'scoped memory for bert_classifier_forward.1']
    #allocation9 [shape = 'u8[262144]{0}', space=vmem, size = 0x40000, scoped, tag = 'input window, operand 16, single buffered']
    #allocation10 [shape = 'u8[32768]{0}', space=vmem, size = 0x8000, scoped, tag = 'input window, operand 22, single buffered']
    #allocation11 [shape = 's32[1]{0}', space=sflag, size = 0x4, scoped, tag = 'scoped memory for bert_classifier_forward.1']
    %29 = vsyncpa [#allocation3], 0
    %30 = vsyncpa [#allocation5], 0
    %31 = vsyncpa [#allocation8], 0
    %32 = vsyncpa [#allocation11], 0
    // Predicated region
    $region2: #{bert_classifier_forward.1} parent=1 // pred_check
      _
    $region3: #{bert_classifier_forward.1} parent=1 // pred_check_branch
      %34 = sbr.rel (0) target = $region5
    $region4: #{bert_classifier_forward.1} parent=1 // pred_region
      _
    $region5: #{bert_classifier_forward.1} parent=1 // pred_fallthru
      _
    // Predicated region
    $region6: #{bert_classifier_forward.1} parent=1 // pred_check
      _
    $region7: #{bert_classifier_forward.1} parent=1 // pred_check_branch
      %36 = sbr.rel (0) target = $region9
    $region8: #{bert_classifier_forward.1} parent=1 // pred_region
      _
    $region9: #{bert_classifier_forward.1} parent=1 // pred_fallthru
      _
    // Predicated region
    $region10: #{bert_classifier_forward.1} parent=1 // pred_check
      _
    $region11: #{bert_classifier_forward.1} parent=1 // pred_check_branch
      %38 = sbr.rel (0) target = $region13
    $region12: #{bert_classifier_forward.1} parent=1 // pred_region
      _
    $region13: #{bert_classifier_forward.1} parent=1 // pred_fallthru
      _
    // Predicated region
    $region14: #{bert_classifier_forward.1} parent=1 // pred_check
      _
    $region15: #{bert_classifier_forward.1} parent=1 // pred_check_branch
      %40 = sbr.rel (0) target = $region17
    $region16: #{bert_classifier_forward.1} parent=1 // pred_region
      _
    $region17: #{bert_classifier_forward.1} parent=1 // pred_fallthru
      _
    // Predicated region
    $region18: #{bert_classifier_forward.1} parent=1 // pred_check
      _
    $region19: #{bert_classifier_forward.1} parent=1 // pred_check_branch
      %42 = sbr.rel (0) target = $region21
    $region20: #{bert_classifier_forward.1} parent=1 // pred_region
      _
    $region21: #{bert_classifier_forward.1} parent=1 // pred_fallthru
      _
    // Predicated region
    $region22: #{bert_classifier_forward.1} parent=1 // pred_check
      _
    $region23: #{bert_classifier_forward.1} parent=1 // pred_check_branch
      %44 = sbr.rel (0) target = $region25
    $region24: #{bert_classifier_forward.1} parent=1 // pred_region
      _
    $region25: #{bert_classifier_forward.1} parent=1 // pred_fallthru
      _
    // Predicated region
    $region26: #{bert_classifier_forward.1} parent=1 // pred_check
      _
    $region27: #{bert_classifier_forward.1} parent=1 // pred_check_branch
      %46 = sbr.rel (0) target = $region29
    $region28: #{bert_classifier_forward.1} parent=1 // pred_region
      %48 = vsyncadd [#allocation3], 0
      %s49 = sshll.u32 %s6, 4
      %s50 = int_to_ptr.hbm [resolvable:$true] %s49
      %s51 = sshll.u32 [#allocation2], 4
      %s52 = int_to_ptr.vmem [resolvable:$true] %s51
      %57 = dma.hbm_to_vmem [thread:$0]  %s50, 2048, %s52, [#allocation3], 64, 64, 4
    $region29: #{bert_classifier_forward.1} parent=1 // pred_fallthru
      _
    // Predicated region
    $region30: #{bert_classifier_forward.1} parent=1 // pred_check
      _
    $region31: #{bert_classifier_forward.1} parent=1 // pred_check_branch
      %59 = sbr.rel (0) target = $region33
    $region32: #{bert_classifier_forward.1} parent=1 // pred_region
      _
    $region33: #{bert_classifier_forward.1} parent=1 // pred_fallthru
      _
    // Predicated region
    $region34: #{bert_classifier_forward.1} parent=1 // pred_check
      _
    $region35: #{bert_classifier_forward.1} parent=1 // pred_check_branch
      %61 = sbr.rel (0) target = $region37
    $region36: #{bert_classifier_forward.1} parent=1 // pred_region
      %63 = vsyncadd [#allocation5], 0
      %s64 = sshll.u32 %s8, 4
      %s65 = int_to_ptr.hbm [resolvable:$true] %s64
      %s66 = sshll.u32 [#allocation4], 4
      %s67 = int_to_ptr.vmem [resolvable:$true] %s66
      %72 = dma.hbm_to_vmem [thread:$0]  %s65, 2048, %s67, [#allocation5], 64, 64, 4
    $region37: #{bert_classifier_forward.1} parent=1 // pred_fallthru
      _
    // Predicated region
    $region38: #{bert_classifier_forward.1} parent=1 // pred_check
      _
    $region39: #{bert_classifier_forward.1} parent=1 // pred_check_branch
      %74 = sbr.rel (0) target = $region41
    $region40: #{bert_classifier_forward.1} parent=1 // pred_region
      _
    $region41: #{bert_classifier_forward.1} parent=1 // pred_fallthru
      _
    // Predicated region
    $region42: #{bert_classifier_forward.1} parent=1 // pred_check
      _
    $region43: #{bert_classifier_forward.1} parent=1 // pred_check_branch
      %76 = sbr.rel (0) target = $region45
    $region44: #{bert_classifier_forward.1} parent=1 // pred_region
      %78 = vsyncadd [#allocation5], 0
      %s79 = sshll.u32 %s10, 4
      %s80 = int_to_ptr.hbm [resolvable:$true] %s79
      %s81 = sshll.u32 [#allocation6], 4
      %s82 = int_to_ptr.vmem [resolvable:$true] %s81
      %87 = dma.hbm_to_vmem [thread:$0]  %s80, 2048, %s82, [#allocation5], 64, 64, 4
    $region45: #{bert_classifier_forward.1} parent=1 // pred_fallthru
      _
    // Predicated region
    $region46: #{bert_classifier_forward.1} parent=1 // pred_check
      _
    $region47: #{bert_classifier_forward.1} parent=1 // pred_check_branch
      %89 = sbr.rel (0) target = $region49
    $region48: #{bert_classifier_forward.1} parent=1 // pred_region
      _
    $region49: #{bert_classifier_forward.1} parent=1 // pred_fallthru
      _
    // Predicated region
    $region50: #{bert_classifier_forward.1} parent=1 // pred_check
      _
    $region51: #{bert_classifier_forward.1} parent=1 // pred_check_branch
      %91 = sbr.rel (0) target = $region53
    $region52: #{bert_classifier_forward.1} parent=1 // pred_region
      _
    $region53: #{bert_classifier_forward.1} parent=1 // pred_fallthru
      _
    // Predicated region
    $region54: #{bert_classifier_forward.1} parent=1 // pred_check
      _
    $region55: #{bert_classifier_forward.1} parent=1 // pred_check_branch
      %93 = sbr.rel (0) target = $region57
    $region56: #{bert_classifier_forward.1} parent=1 // pred_region
      _
    $region57: #{bert_classifier_forward.1} parent=1 // pred_fallthru
      _
    // Predicated region
    $region58: #{bert_classifier_forward.1} parent=1 // pred_check
      _
    $region59: #{bert_classifier_forward.1} parent=1 // pred_check_branch
      %95 = sbr.rel (0) target = $region61
    $region60: #{bert_classifier_forward.1} parent=1 // pred_region
      %97 = vsyncadd [#allocation8], 0
      %s98 = sshll.u32 %s14, 4
      %s99 = int_to_ptr.hbm [resolvable:$true] %s98
      %s100 = sshll.u32 [#allocation7], 4
      %s101 = int_to_ptr.vmem [resolvable:$true] %s100
      %106 = dma.hbm_to_vmem [thread:$0]  %s99, 8192, %s101, [#allocation8], 256, 256, 16
    $region61: #{bert_classifier_forward.1} parent=1 // pred_fallthru
      _
    // Predicated region
    $region62: #{bert_classifier_forward.1} parent=1 // pred_check
      _
    $region63: #{bert_classifier_forward.1} parent=1 // pred_check_branch
      %108 = sbr.rel (0) target = $region65
    $region64: #{bert_classifier_forward.1} parent=1 // pred_region
      _
    $region65: #{bert_classifier_forward.1} parent=1 // pred_fallthru
      _
    // Predicated region
    $region66: #{bert_classifier_forward.1} parent=1 // pred_check
      _
    $region67: #{bert_classifier_forward.1} parent=1 // pred_check_branch
      %110 = sbr.rel (0) target = $region69
    $region68: #{bert_classifier_forward.1} parent=1 // pred_region
      %112 = vsyncadd [#allocation8], 0
      %s113 = sshll.u32 %s16, 4
      %s114 = int_to_ptr.hbm [resolvable:$true] %s113
      %s115 = sshll.u32 [#allocation9], 4
      %s116 = int_to_ptr.vmem [resolvable:$true] %s115
      %121 = dma.hbm_to_vmem [thread:$0]  %s114, 8192, %s116, [#allocation8], 64, 64, 4
    $region69: #{bert_classifier_forward.1} parent=1 // pred_fallthru
      _
    // Predicated region
    $region70: #{bert_classifier_forward.1} parent=1 // pred_check
      _
    $region71: #{bert_classifier_forward.1} parent=1 // pred_check_branch
      %123 = sbr.rel (0) target = $region73
    $region72: #{bert_classifier_forward.1} parent=1 // pred_region
      _
    $region73: #{bert_classifier_forward.1} parent=1 // pred_fallthru
      _
    // Predicated region
    $region74: #{bert_classifier_forward.1} parent=1 // pred_check
      _
    $region75: #{bert_classifier_forward.1} parent=1 // pred_check_branch
      %125 = sbr.rel (0) target = $region77
    $region76: #{bert_classifier_forward.1} parent=1 // pred_region
      _
    $region77: #{bert_classifier_forward.1} parent=1 // pred_fallthru
      _
    // Predicated region
    $region78: #{bert_classifier_forward.1} parent=1 // pred_check
      _
    $region79: #{bert_classifier_forward.1} parent=1 // pred_check_branch
      %127 = sbr.rel (0) target = $region81
    $region80: #{bert_classifier_forward.1} parent=1 // pred_region
      _
    $region81: #{bert_classifier_forward.1} parent=1 // pred_fallthru
      _
    // Predicated region
    $region82: #{bert_classifier_forward.1} parent=1 // pred_check
      _
    $region83: #{bert_classifier_forward.1} parent=1 // pred_check_branch
      %129 = sbr.rel (0) target = $region85
    $region84: #{bert_classifier_forward.1} parent=1 // pred_region
      _
    $region85: #{bert_classifier_forward.1} parent=1 // pred_fallthru
      _
    // Predicated region
    $region86: #{bert_classifier_forward.1} parent=1 // pred_check
      _
    $region87: #{bert_classifier_forward.1} parent=1 // pred_check_branch
      %131 = sbr.rel (0) target = $region89
    $region88: #{bert_classifier_forward.1} parent=1 // pred_region
      _
    $region89: #{bert_classifier_forward.1} parent=1 // pred_fallthru
      _
    // Predicated region
    $region90: #{bert_classifier_forward.1} parent=1 // pred_check
      _
    $region91: #{bert_classifier_forward.1} parent=1 // pred_check_branch
      %133 = sbr.rel (0) target = $region93
    $region92: #{bert_classifier_forward.1} parent=1 // pred_region
      %135 = vsyncadd [#allocation11], 0
      %s136 = sshll.u32 %s22, 4
      %s137 = int_to_ptr.hbm [resolvable:$true] %s136
      %s138 = sshll.u32 [#allocation10], 4
      %s139 = int_to_ptr.vmem [resolvable:$true] %s138
      %144 = dma.hbm_to_vmem [thread:$0]  %s137, 1024, %s139, [#allocation11], 64, 64, 4
    $region93: #{bert_classifier_forward.1} parent=1 // pred_fallthru
      _
    // Predicated region
    $region94: #{bert_classifier_forward.1} parent=1 // pred_check
      _
    $region95: #{bert_classifier_forward.1} parent=1 // pred_check_branch
      %146 = sbr.rel (0) target = $region97
    $region96: #{bert_classifier_forward.1} parent=1 // pred_region
      _
    $region97: #{bert_classifier_forward.1} parent=1 // pred_fallthru
      _
    // Predicated region
    $region98: #{bert_classifier_forward.1} parent=1 // pred_check
      _
    $region99: #{bert_classifier_forward.1} parent=1 // pred_check_branch
      %148 = sbr.rel (0) target = $region101
    $region100: #{bert_classifier_forward.1} parent=1 // pred_region
      %150 = dma.done [#allocation3], 2048
    $region101: #{bert_classifier_forward.1} parent=1 // pred_fallthru
      _
    // Predicated region
    $region102: #{bert_classifier_forward.1} parent=1 // pred_check
      _
    $region103: #{bert_classifier_forward.1} parent=1 // pred_check_branch
      %152 = sbr.rel (0) target = $region105
    $region104: #{bert_classifier_forward.1} parent=1 // pred_region
      %154 = dma.done [#allocation5], 2048
    $region105: #{bert_classifier_forward.1} parent=1 // pred_fallthru
      _
    // Predicated region
    $region106: #{bert_classifier_forward.1} parent=1 // pred_check
      _
    $region107: #{bert_classifier_forward.1} parent=1 // pred_check_branch
      %156 = sbr.rel (0) target = $region109
    $region108: #{bert_classifier_forward.1} parent=1 // pred_region
      %158 = dma.done [#allocation5], 2048
    $region109: #{bert_classifier_forward.1} parent=1 // pred_fallthru
      _
    // Predicated region
    $region110: #{bert_classifier_forward.1} parent=1 // pred_check
      _
    $region111: #{bert_classifier_forward.1} parent=1 // pred_check_branch
      %160 = sbr.rel (0) target = $region113
    $region112: #{bert_classifier_forward.1} parent=1 // pred_region
      %162 = dma.done [#allocation8], 8192
    $region113: #{bert_classifier_forward.1} parent=1 // pred_fallthru
      _
    // Predicated region
    $region114: #{bert_classifier_forward.1} parent=1 // pred_check
      _
    $region115: #{bert_classifier_forward.1} parent=1 // pred_check_branch
      %164 = sbr.rel (0) target = $region117
    $region116: #{bert_classifier_forward.1} parent=1 // pred_region
      %166 = dma.done [#allocation8], 8192
    $region117: #{bert_classifier_forward.1} parent=1 // pred_fallthru
      _
    // Predicated region
    $region118: #{bert_classifier_forward.1} parent=1 // pred_check
      _
    $region119: #{bert_classifier_forward.1} parent=1 // pred_check_branch
      %168 = sbr.rel (0) target = $region121
    $region120: #{bert_classifier_forward.1} parent=1 // pred_region
      %170 = dma.done [#allocation11], 1024
    $region121: #{bert_classifier_forward.1} parent=1 // pred_fallthru
      _
    %v172 = vlaneseq
    %v173 = vand.u32 %v172, 127
    %vm174 = vcmp.ge.s32.totalorder %v173, 0
    %vm175 = vcmp.lt.s32.totalorder %v173, 32
    %vm176 = vmand %vm174, %vm175
    %v177 = vsel %vm176, 1, 0
    %v178 = vcvt.s32.f32 %v177
    %vm179 = vcmp.ge.s32.totalorder %v173, 32
    %vm180 = vcmp.lt.s32.totalorder %v173, 64
    %vm181 = vmand %vm179, %vm180
    %v182 = vsel %vm181, 1, 0
    %v183 = vcvt.s32.f32 %v182
    %vm184 = vcmp.ge.s32.totalorder %v173, 64
    %vm185 = vcmp.lt.s32.totalorder %v173, 96
    %vm186 = vmand %vm184, %vm185
    %v187 = vsel %vm186, 1, 0
    %v188 = vcvt.s32.f32 %v187
    %vm189 = vcmp.ge.s32.totalorder %v173, 96
    %vm190 = vcmp.lt.s32.totalorder %v173, 128
    %vm191 = vmand %vm189, %vm190
    %v192 = vsel %vm191, 1, 0
    %v193 = vcvt.s32.f32 %v192
    %v194 = vld [vmem:[%s1] sm:$0xff]
    %v195 = vld [vmem:[%s1 + $0x8] sm:$0xff]
    %v196 = vld [vmem:[%s0] sm:$0xff]
    %v197 = vld [vmem:[%s0 + $0x8] sm:$0xff]
    %v198 = vld [vmem:[%s2] sm:$0x1]
    %v199 = vld [vmem:[%s3] sm:$0x1]
    %200 = vadd.xlane.f32.xlu0 %v196
    %v201 = vpop.xlane.xlu0 %200
    %202 = vadd.xlane.f32.xlu0 %v197
    %v203 = vpop.xlane.xlu0 %202
    %v204 = vrcp.pop 128.0
    %v205 = vmul.f32 128.0, %v204
    %v206 = vsub.f32 1.0, %v205
    %v207 = vmul.f32 %v204, %v206
    %v208 = vadd.f32 %v204, %v207
    %vm209 = vweird.f32 %v204
    %v210 = vsel %vm209, %v204, %v208
    %v211 = vmul.f32 %v201, %v210
    %v212 = vmul.f32 %v203, %v210
    %v213 = vsub.f32 %v196, %v211
    %v214 = vsub.f32 %v197, %v212
    %v215 = vmul.f32 %v213, %v213
    %v216 = vmul.f32 %v214, %v214
    %217 = vadd.xlane.f32.xlu0 %v215
    %v218 = vpop.xlane.xlu0 %217
    %219 = vadd.xlane.f32.xlu0 %v216
    %v220 = vpop.xlane.xlu0 %219
    %v221 = vmul.f32 %v218, %v210
    %v222 = vmul.f32 %v220, %v210
    %v223 = vadd.f32 %v221, 1e-12
    %v224 = vadd.f32 %v222, 1e-12
    %v225 = vrsqrt.pop %v223
    %v226 = vmul.f32 %v225, %v223
    %v227 = vmul.f32 %v226, %v225
    %v228 = vmul.f32 0.5, %v227
    %v229 = vsub.f32 1.5, %v228
    %v230 = vmul.f32 %v225, %v229
    %vm231 = vweird.f32 %v223
    %vm232 = vweird.f32 %v225
    %vm233 = vmor %vm231, %vm232
    %v234 = vsel %vm233, %v225, %v230
    %v235 = vrsqrt.pop %v224
    %v236 = vmul.f32 %v235, %v224
    %v237 = vmul.f32 %v236, %v235
    %v238 = vmul.f32 0.5, %v237
    %v239 = vsub.f32 1.5, %v238
    %v240 = vmul.f32 %v235, %v239
    %vm241 = vweird.f32 %v224
    %vm242 = vweird.f32 %v235
    %vm243 = vmor %vm241, %vm242
    %v244 = vsel %vm243, %v235, %v240
    %v245 = vmul.f32 %v213, %v234
    %v246 = vmul.f32 %v214, %v244
    %v248 = vperm.slane %v198, 0
    %v250 = vmul.f32 %v245, %v248
    %v251 = vmul.f32 %v246, %v248
    %v253 = vperm.slane %v199, 0
    %v255 = vadd.f32 %v250, %v253
    %v256 = vadd.f32 %v251, %v253
    %v257 = vld [vmem:[%s4] sm:$0xf]
    %v258 = vld [vmem:[%s4 + $0x4] sm:$0xf]
    %v259 = vld [vmem:[%s4 + $0x8] sm:$0xf]
    %v260 = vld [vmem:[%s4 + $0xc] sm:$0xf]
    %v261 = vld [vmem:[%s4 + $0x10] sm:$0xf]
    %v262 = vld [vmem:[%s4 + $0x14] sm:$0xf]
    %v263 = vld [vmem:[%s4 + $0x18] sm:$0xf]
    %v264 = vld [vmem:[%s4 + $0x1c] sm:$0xf]
    %v265 = vld [vmem:[%s4 + $0x20] sm:$0xf]
    %v266 = vld [vmem:[%s4 + $0x24] sm:$0xf]
    %v267 = vld [vmem:[%s4 + $0x28] sm:$0xf]
    %v268 = vld [vmem:[%s4 + $0x2c] sm:$0xf]
    %v269 = vld [vmem:[%s4 + $0x30] sm:$0xf]
    %v270 = vld [vmem:[%s4 + $0x34] sm:$0xf]
    %v271 = vld [vmem:[%s4 + $0x38] sm:$0xf]
    %v272 = vld [vmem:[%s4 + $0x3c] sm:$0xf]
    %v273 = vpack.c.bf16 %v256, %v255
    %v274 = vld [vmem:[%s5] sm:$0x1]
    %v276 = vperm.slane %v274, 0
    %v294 = vunpack.c.l.b16 %v257
    %v295 = vunpack.c.l.b16 %v258
    %v296 = vunpack.c.l.b16 %v259
    %v297 = vunpack.c.l.b16 %v260
    %v298 = vunpack.c.l.b16 %v261
    %v299 = vunpack.c.l.b16 %v262
    %v300 = vunpack.c.l.b16 %v263
    %v301 = vunpack.c.l.b16 %v264
    %v302 = vunpack.c.l.b16 %v265
    %v303 = vunpack.c.l.b16 %v266
    %v304 = vunpack.c.l.b16 %v267
    %v305 = vunpack.c.l.b16 %v268
    %v306 = vunpack.c.l.b16 %v269
    %v307 = vunpack.c.l.b16 %v270
    %v308 = vunpack.c.l.b16 %v271
    %v309 = vunpack.c.l.b16 %v272
    %v310 = vpack.c.b16 %v295, %v294
    %v311 = vpack.c.b16 %v297, %v296
    %v312 = vpack.c.b16 %v299, %v298
    %v313 = vpack.c.b16 %v301, %v300
    %v314 = vpack.c.b16 %v303, %v302
    %v315 = vpack.c.b16 %v305, %v304
    %v316 = vpack.c.b16 %v307, %v306
    %v317 = vpack.c.b16 %v309, %v308
    %326 = vmatpush.bf16.msra.mxu0 %v317
    %327 = vmatpush.bf16.msra.mxu0 %v316
    %328 = vmatpush.bf16.msra.mxu0 %v315
    %329 = vmatpush.bf16.msra.mxu0 %v314
    %330 = vmatpush.bf16.msra.mxu0 %v313
    %331 = vmatpush.bf16.msra.mxu0 %v312
    %332 = vmatpush.bf16.msra.mxu0 %v311
    %333 = vmatpush.bf16.msra.mxu0 %v310
    %334 = vmatmul.bf16.gmra.mxu0 %v273
    %v335 = vpop.f32.mrf.mxu0
    %v336 = vadd.f32 %v276, %v335
    %v337 = vpop.f32.mrf.mxu0
    %v338 = vadd.f32 %v276, %v337
    %339 = vdwg.mxu0
    %v340 = vld [vmem:[#allocation2] sm:$0xf]
    %v341 = vld [vmem:[#allocation2 + $0x4] sm:$0xf]
    %v342 = vld [vmem:[#allocation2 + $0x8] sm:$0xf]
    %v343 = vld [vmem:[#allocation2 + $0xc] sm:$0xf]
    %v344 = vld [vmem:[#allocation2 + $0x10] sm:$0xf]
    %v345 = vld [vmem:[#allocation2 + $0x14] sm:$0xf]
    %v346 = vld [vmem:[#allocation2 + $0x18] sm:$0xf]
    %v347 = vld [vmem:[#allocation2 + $0x1c] sm:$0xf]
    %v348 = vld [vmem:[#allocation2 + $0x20] sm:$0xf]
    %v349 = vld [vmem:[#allocation2 + $0x24] sm:$0xf]
    %v350 = vld [vmem:[#allocation2 + $0x28] sm:$0xf]
    %v351 = vld [vmem:[#allocation2 + $0x2c] sm:$0xf]
    %v352 = vld [vmem:[#allocation2 + $0x30] sm:$0xf]
    %v353 = vld [vmem:[#allocation2 + $0x34] sm:$0xf]
    %v354 = vld [vmem:[#allocation2 + $0x38] sm:$0xf]
    %v355 = vld [vmem:[#allocation2 + $0x3c] sm:$0xf]
    %v356 = vld [vmem:[%s7] sm:$0x1]
    %v358 = vperm.slane %v356, 0
    %v376 = vunpack.c.l.b16 %v340
    %v377 = vunpack.c.l.b16 %v341
    %v378 = vunpack.c.l.b16 %v342
    %v379 = vunpack.c.l.b16 %v343
    %v380 = vunpack.c.l.b16 %v344
    %v381 = vunpack.c.l.b16 %v345
    %v382 = vunpack.c.l.b16 %v346
    %v383 = vunpack.c.l.b16 %v347
    %v384 = vunpack.c.l.b16 %v348
    %v385 = vunpack.c.l.b16 %v349
    %v386 = vunpack.c.l.b16 %v350
    %v387 = vunpack.c.l.b16 %v351
    %v388 = vunpack.c.l.b16 %v352
    %v389 = vunpack.c.l.b16 %v353
    %v390 = vunpack.c.l.b16 %v354
    %v391 = vunpack.c.l.b16 %v355
    %v392 = vpack.c.b16 %v377, %v376
    %v393 = vpack.c.b16 %v379, %v378
    %v394 = vpack.c.b16 %v381, %v380
    %v395 = vpack.c.b16 %v383, %v382
    %v396 = vpack.c.b16 %v385, %v384
    %v397 = vpack.c.b16 %v387, %v386
    %v398 = vpack.c.b16 %v389, %v388
    %v399 = vpack.c.b16 %v391, %v390
    %408 = vmatpush.bf16.msra.mxu0 %v399
    %409 = vmatpush.bf16.msra.mxu0 %v398
    %410 = vmatpush.bf16.msra.mxu0 %v397
    %411 = vmatpush.bf16.msra.mxu0 %v396
    %412 = vmatpush.bf16.msra.mxu0 %v395
    %413 = vmatpush.bf16.msra.mxu0 %v394
    %414 = vmatpush.bf16.msra.mxu0 %v393
    %415 = vmatpush.bf16.msra.mxu0 %v392
    %416 = vmatmul.bf16.gmra.mxu0 %v273
    %v417 = vpop.f32.mrf.mxu0
    %v418 = vadd.f32 %v358, %v417
    %v419 = vpop.f32.mrf.mxu0
    %v420 = vadd.f32 %v358, %v419
    %421 = vdwg.mxu0
    %v422 = vld [vmem:[#allocation4] sm:$0xf]
    %v423 = vld [vmem:[#allocation4 + $0x4] sm:$0xf]
    %v424 = vld [vmem:[#allocation4 + $0x8] sm:$0xf]
    %v425 = vld [vmem:[#allocation4 + $0xc] sm:$0xf]
    %v426 = vld [vmem:[#allocation4 + $0x10] sm:$0xf]
    %v427 = vld [vmem:[#allocation4 + $0x14] sm:$0xf]
    %v428 = vld [vmem:[#allocation4 + $0x18] sm:$0xf]
    %v429 = vld [vmem:[#allocation4 + $0x1c] sm:$0xf]
    %v430 = vld [vmem:[#allocation4 + $0x20] sm:$0xf]
    %v431 = vld [vmem:[#allocation4 + $0x24] sm:$0xf]
    %v432 = vld [vmem:[#allocation4 + $0x28] sm:$0xf]
    %v433 = vld [vmem:[#allocation4 + $0x2c] sm:$0xf]
    %v434 = vld [vmem:[#allocation4 + $0x30] sm:$0xf]
    %v435 = vld [vmem:[#allocation4 + $0x34] sm:$0xf]
    %v436 = vld [vmem:[#allocation4 + $0x38] sm:$0xf]
    %v437 = vld [vmem:[#allocation4 + $0x3c] sm:$0xf]
    %v438 = vld [vmem:[%s9] sm:$0x1]
    %v440 = vperm.slane %v438, 0
    %v458 = vunpack.c.l.b16 %v422
    %v459 = vunpack.c.l.b16 %v423
    %v460 = vunpack.c.l.b16 %v424
    %v461 = vunpack.c.l.b16 %v425
    %v462 = vunpack.c.l.b16 %v426
    %v463 = vunpack.c.l.b16 %v427
    %v464 = vunpack.c.l.b16 %v428
    %v465 = vunpack.c.l.b16 %v429
    %v466 = vunpack.c.l.b16 %v430
    %v467 = vunpack.c.l.b16 %v431
    %v468 = vunpack.c.l.b16 %v432
    %v469 = vunpack.c.l.b16 %v433
    %v470 = vunpack.c.l.b16 %v434
    %v471 = vunpack.c.l.b16 %v435
    %v472 = vunpack.c.l.b16 %v436
    %v473 = vunpack.c.l.b16 %v437
    %v474 = vpack.c.b16 %v459, %v458
    %v475 = vpack.c.b16 %v461, %v460
    %v476 = vpack.c.b16 %v463, %v462
    %v477 = vpack.c.b16 %v465, %v464
    %v478 = vpack.c.b16 %v467, %v466
    %v479 = vpack.c.b16 %v469, %v468
    %v480 = vpack.c.b16 %v471, %v470
    %v481 = vpack.c.b16 %v473, %v472
    %490 = vmatpush.bf16.msra.mxu0 %v481
    %491 = vmatpush.bf16.msra.mxu0 %v480
    %492 = vmatpush.bf16.msra.mxu0 %v479
    %493 = vmatpush.bf16.msra.mxu0 %v478
    %494 = vmatpush.bf16.msra.mxu0 %v477
    %495 = vmatpush.bf16.msra.mxu0 %v476
    %496 = vmatpush.bf16.msra.mxu0 %v475
    %497 = vmatpush.bf16.msra.mxu0 %v474
    %498 = vmatmul.bf16.gmra.mxu0 %v273
    %v499 = vpop.f32.mrf.mxu0
    %v500 = vadd.f32 %v440, %v499
    %v501 = vpop.f32.mrf.mxu0
    %v502 = vadd.f32 %v440, %v501
    %503 = vdwg.mxu0
    %v504 = vpack.c.bf16 %v420, %v418
    %v505 = vmul.f32 %v336, %v178
    %v506 = vmul.f32 %v338, %v178
    %v507 = vpack.c.bf16 %v506, %v505
    %508 = vmatpush.bf16.xpose.msra.mxu0 0
    %509 = vmatpush.bf16.xpose.msra.mxu0 0
    %510 = vmatpush.bf16.xpose.msra.mxu0 0
    %511 = vmatpush.bf16.xpose.msra.mxu0 0
    %512 = vmatpush.bf16.xpose.msra.mxu0 0
    %513 = vmatpush.bf16.xpose.msra.mxu0 0
    %514 = vmatpush.bf16.xpose.msra.mxu0 0
    %515 = vmatpush.bf16.xpose.msra.mxu0 %v504
    %516 = vmatmul.bf16.gmra.mxu0 %v507
    %v517 = vpop.f32.mrf.mxu0
    %v518 = vadd.f32 0.0, %v517
    %v519 = vpop.f32.mrf.mxu0
    %v520 = vadd.f32 0.0, %v519
    %521 = vdwg.mxu0
    %v522 = vmul.f32 %v518, 0.17677669
    %v523 = vmul.f32 %v520, 0.17677669
    %v524 = vadd.f32 %v522, %v194
    %v525 = vadd.f32 %v523, %v195
    %vm526 = vcmask 130048
    %v527 = vsel %vm526, %v524, -inf
    %528 = vmax.xlane.f32.xlu0 %v527
    %v529 = vpop.xlane.xlu0 %528
    %v530 = vsel %vm526, %v525, -inf
    %531 = vmax.xlane.f32.xlu0 %v530
    %v532 = vpop.xlane.xlu0 %531
    %v533 = vsub.f32 %v524, %v529
    %v534 = vsub.f32 %v525, %v532
    %v535 = vmul.f32 %v533, 1.442695
    %v536 = vpow.pop %v535
    %v537 = vmul.f32 %v534, 1.442695
    %v538 = vpow.pop %v537
    %v539 = vsel %vm526, %v536, 0.0
    %540 = vadd.xlane.f32.xlu0 %v539
    %v541 = vpop.xlane.xlu0 %540
    %v542 = vsel %vm526, %v538, 0.0
    %543 = vadd.xlane.f32.xlu0 %v542
    %v544 = vpop.xlane.xlu0 %543
    %v545 = vrcp.pop %v541
    %v546 = vrcp.pop %v544
    %v547 = vmul.f32 %v536, %v545
    %v548 = vmul.f32 %v538, %v546
    %v549 = vpack.c.bf16 %v548, %v547
    %v550 = vmul.f32 %v500, %v178
    %v551 = vmul.f32 %v502, %v178
    %v552 = vpack.c.bf16 %v551, %v550
    %v553 = vmul.f32 %v336, %v183
    %v554 = vmul.f32 %v338, %v183
    %v555 = vpack.c.bf16 %v554, %v553
    %556 = vmatpush.bf16.xpose.msra.mxu0 0
    %557 = vmatpush.bf16.xpose.msra.mxu0 0
    %558 = vmatpush.bf16.xpose.msra.mxu0 0
    %559 = vmatpush.bf16.xpose.msra.mxu0 0
    %560 = vmatpush.bf16.xpose.msra.mxu0 0
    %561 = vmatpush.bf16.xpose.msra.mxu0 0
    %562 = vmatpush.bf16.xpose.msra.mxu0 0
    %563 = vmatpush.bf16.xpose.msra.mxu0 %v504
    %564 = vmatmul.bf16.gmra.mxu0 %v555
    %v565 = vpop.f32.mrf.mxu0
    %v566 = vadd.f32 0.0, %v565
    %v567 = vpop.f32.mrf.mxu0
    %v568 = vadd.f32 0.0, %v567
    %569 = vdwg.mxu0
    %v570 = vmul.f32 %v566, 0.17677669
    %v571 = vmul.f32 %v568, 0.17677669
    %v572 = vadd.f32 %v570, %v194
    %v573 = vadd.f32 %v571, %v195
    %v574 = vsel %vm526, %v572, -inf
    %575 = vmax.xlane.f32.xlu0 %v574
    %v576 = vpop.xlane.xlu0 %575
    %v577 = vsel %vm526, %v573, -inf
    %578 = vmax.xlane.f32.xlu0 %v577
    %v579 = vpop.xlane.xlu0 %578
    %v580 = vsub.f32 %v572, %v576
    %v581 = vsub.f32 %v573, %v579
    %v582 = vmul.f32 %v580, 1.442695
    %v583 = vpow.pop %v582
    %v584 = vmul.f32 %v581, 1.442695
    %v585 = vpow.pop %v584
    %v586 = vsel %vm526, %v583, 0.0
    %587 = vadd.xlane.f32.xlu0 %v586
    %v588 = vpop.xlane.xlu0 %587
    %v589 = vsel %vm526, %v585, 0.0
    %590 = vadd.xlane.f32.xlu0 %v589
    %v591 = vpop.xlane.xlu0 %590
    %v592 = vrcp.pop %v588
    %v593 = vrcp.pop %v591
    %v594 = vmul.f32 %v583, %v592
    %v595 = vmul.f32 %v585, %v593
    %v596 = vpack.c.bf16 %v595, %v594
    %v597 = vmul.f32 %v500, %v183
    %v598 = vmul.f32 %v502, %v183
    %v599 = vpack.c.bf16 %v598, %v597
    %v601 = vsel %vm526, %v596, 0
    %603 = vmatpush.bf16.msra.mxu0 0
    %604 = vmatpush.bf16.msra.mxu0 0
    %605 = vmatpush.bf16.msra.mxu0 0
    %606 = vmatpush.bf16.msra.mxu0 0
    %607 = vmatpush.bf16.msra.mxu0 0
    %608 = vmatpush.bf16.msra.mxu0 0
    %609 = vmatpush.bf16.msra.mxu0 0
    %610 = vmatpush.bf16.msra.mxu0 %v599
    %611 = vmatmul.bf16.gmra.mxu0 %v601
    %v612 = vpop.f32.mrf.mxu0
    %v613 = vadd.f32 0.0, %v612
    %v614 = vpop.f32.mrf.mxu0
    %v615 = vadd.f32 0.0, %v614
    %616 = vdwg.mxu0
    %v618 = vsel %vm526, %v549, 0
    %620 = vmatpush.bf16.msra.mxu0 0
    %621 = vmatpush.bf16.msra.mxu0 0
    %622 = vmatpush.bf16.msra.mxu0 0
    %623 = vmatpush.bf16.msra.mxu0 0
    %624 = vmatpush.bf16.msra.mxu0 0
    %625 = vmatpush.bf16.msra.mxu0 0
    %626 = vmatpush.bf16.msra.mxu0 0
    %627 = vmatpush.bf16.msra.mxu0 %v552
    %628 = vmatmul.bf16.gmra.mxu0 %v618
    %v629 = vpop.f32.mrf.mxu0
    %v630 = vadd.f32 %v613, %v629
    %v631 = vpop.f32.mrf.mxu0
    %v632 = vadd.f32 %v615, %v631
    %633 = vdwg.mxu0
    %v634 = vmul.f32 %v336, %v188
    %v635 = vmul.f32 %v338, %v188
    %v636 = vpack.c.bf16 %v635, %v634
    %637 = vmatpush.bf16.xpose.msra.mxu0 0
    %638 = vmatpush.bf16.xpose.msra.mxu0 0
    %639 = vmatpush.bf16.xpose.msra.mxu0 0
    %640 = vmatpush.bf16.xpose.msra.mxu0 0
    %641 = vmatpush.bf16.xpose.msra.mxu0 0
    %642 = vmatpush.bf16.xpose.msra.mxu0 0
    %643 = vmatpush.bf16.xpose.msra.mxu0 0
    %644 = vmatpush.bf16.xpose.msra.mxu0 %v504
    %645 = vmatmul.bf16.gmra.mxu0 %v636
    %v646 = vpop.f32.mrf.mxu0
    %v647 = vadd.f32 0.0, %v646
    %v648 = vpop.f32.mrf.mxu0
    %v649 = vadd.f32 0.0, %v648
    %650 = vdwg.mxu0
    %v651 = vmul.f32 %v647, 0.17677669
    %v652 = vmul.f32 %v649, 0.17677669
    %v653 = vadd.f32 %v651, %v194
    %v654 = vadd.f32 %v652, %v195
    %v655 = vsel %vm526, %v653, -inf
    %656 = vmax.xlane.f32.xlu0 %v655
    %v657 = vpop.xlane.xlu0 %656
    %v658 = vsel %vm526, %v654, -inf
    %659 = vmax.xlane.f32.xlu0 %v658
    %v660 = vpop.xlane.xlu0 %659
    %v661 = vsub.f32 %v653, %v657
    %v662 = vsub.f32 %v654, %v660
    %v663 = vmul.f32 %v661, 1.442695
    %v664 = vpow.pop %v663
    %v665 = vmul.f32 %v662, 1.442695
    %v666 = vpow.pop %v665
    %v667 = vsel %vm526, %v664, 0.0
    %668 = vadd.xlane.f32.xlu0 %v667
    %v669 = vpop.xlane.xlu0 %668
    %v670 = vsel %vm526, %v666, 0.0
    %671 = vadd.xlane.f32.xlu0 %v670
    %v672 = vpop.xlane.xlu0 %671
    %v673 = vrcp.pop %v669
    %v674 = vrcp.pop %v672
    %v675 = vmul.f32 %v664, %v673
    %v676 = vmul.f32 %v666, %v674
    %v677 = vpack.c.bf16 %v676, %v675
    %v678 = vmul.f32 %v500, %v188
    %v679 = vmul.f32 %v502, %v188
    %v680 = vpack.c.bf16 %v679, %v678
    %v682 = vsel %vm526, %v677, 0
    %684 = vmatpush.bf16.msra.mxu0 0
    %685 = vmatpush.bf16.msra.mxu0 0
    %686 = vmatpush.bf16.msra.mxu0 0
    %687 = vmatpush.bf16.msra.mxu0 0
    %688 = vmatpush.bf16.msra.mxu0 0
    %689 = vmatpush.bf16.msra.mxu0 0
    %690 = vmatpush.bf16.msra.mxu0 0
    %691 = vmatpush.bf16.msra.mxu0 %v680
    %692 = vmatmul.bf16.gmra.mxu0 %v682
    %v693 = vpop.f32.mrf.mxu0
    %v694 = vadd.f32 0.0, %v693
    %v695 = vpop.f32.mrf.mxu0
    %v696 = vadd.f32 0.0, %v695
    %697 = vdwg.mxu0
    %v698 = vadd.f32 %v630, %v694
    %v699 = vadd.f32 %v632, %v696
    %v700 = vmul.f32 %v336, %v193
    %v701 = vmul.f32 %v338, %v193
    %v702 = vpack.c.bf16 %v701, %v700
    %703 = vmatpush.bf16.xpose.msra.mxu0 0
    %704 = vmatpush.bf16.xpose.msra.mxu0 0
    %705 = vmatpush.bf16.xpose.msra.mxu0 0
    %706 = vmatpush.bf16.xpose.msra.mxu0 0
    %707 = vmatpush.bf16.xpose.msra.mxu0 0
    %708 = vmatpush.bf16.xpose.msra.mxu0 0
    %709 = vmatpush.bf16.xpose.msra.mxu0 0
    %710 = vmatpush.bf16.xpose.msra.mxu0 %v504
    %711 = vmatmul.bf16.gmra.mxu0 %v702
    %v712 = vpop.f32.mrf.mxu0
    %v713 = vadd.f32 0.0, %v712
    %v714 = vpop.f32.mrf.mxu0
    %v715 = vadd.f32 0.0, %v714
    %716 = vdwg.mxu0
    %v717 = vmul.f32 %v713, 0.17677669
    %v718 = vmul.f32 %v715, 0.17677669
    %v719 = vadd.f32 %v717, %v194
    %v720 = vadd.f32 %v718, %v195
    %v721 = vsel %vm526, %v719, -inf
    %722 = vmax.xlane.f32.xlu0 %v721
    %v723 = vpop.xlane.xlu0 %722
    %v724 = vsel %vm526, %v720, -inf
    %725 = vmax.xlane.f32.xlu0 %v724
    %v726 = vpop.xlane.xlu0 %725
    %v727 = vsub.f32 %v719, %v723
    %v728 = vsub.f32 %v720, %v726
    %v729 = vmul.f32 %v727, 1.442695
    %v730 = vpow.pop %v729
    %v731 = vmul.f32 %v728, 1.442695
    %v732 = vpow.pop %v731
    %v733 = vsel %vm526, %v730, 0.0
    %734 = vadd.xlane.f32.xlu0 %v733
    %v735 = vpop.xlane.xlu0 %734
    %v736 = vsel %vm526, %v732, 0.0
    %737 = vadd.xlane.f32.xlu0 %v736
    %v738 = vpop.xlane.xlu0 %737
    %v739 = vrcp.pop %v735
    %v740 = vrcp.pop %v738
    %v741 = vmul.f32 %v730, %v739
    %v742 = vmul.f32 %v732, %v740
    %v743 = vpack.c.bf16 %v742, %v741
    %v744 = vmul.f32 %v500, %v193
    %v745 = vmul.f32 %v502, %v193
    %v746 = vpack.c.bf16 %v745, %v744
    %v748 = vsel %vm526, %v743, 0
    %750 = vmatpush.bf16.msra.mxu0 0
    %751 = vmatpush.bf16.msra.mxu0 0
    %752 = vmatpush.bf16.msra.mxu0 0
    %753 = vmatpush.bf16.msra.mxu0 0
    %754 = vmatpush.bf16.msra.mxu0 0
    %755 = vmatpush.bf16.msra.mxu0 0
    %756 = vmatpush.bf16.msra.mxu0 0
    %757 = vmatpush.bf16.msra.mxu0 %v746
    %758 = vmatmul.bf16.gmra.mxu0 %v748
    %v759 = vpop.f32.mrf.mxu0
    %v760 = vadd.f32 0.0, %v759
    %v761 = vpop.f32.mrf.mxu0
    %v762 = vadd.f32 0.0, %v761
    %763 = vdwg.mxu0
    %v764 = vadd.f32 %v698, %v760
    %v765 = vadd.f32 %v699, %v762
    %v766 = vld [vmem:[#allocation6] sm:$0xf]
    %v767 = vld [vmem:[#allocation6 + $0x4] sm:$0xf]
    %v768 = vld [vmem:[#allocation6 + $0x8] sm:$0xf]
    %v769 = vld [vmem:[#allocation6 + $0xc] sm:$0xf]
    %v770 = vld [vmem:[#allocation6 + $0x10] sm:$0xf]
    %v771 = vld [vmem:[#allocation6 + $0x14] sm:$0xf]
    %v772 = vld [vmem:[#allocation6 + $0x18] sm:$0xf]
    %v773 = vld [vmem:[#allocation6 + $0x1c] sm:$0xf]
    %v774 = vld [vmem:[#allocation6 + $0x20] sm:$0xf]
    %v775 = vld [vmem:[#allocation6 + $0x24] sm:$0xf]
    %v776 = vld [vmem:[#allocation6 + $0x28] sm:$0xf]
    %v777 = vld [vmem:[#allocation6 + $0x2c] sm:$0xf]
    %v778 = vld [vmem:[#allocation6 + $0x30] sm:$0xf]
    %v779 = vld [vmem:[#allocation6 + $0x34] sm:$0xf]
    %v780 = vld [vmem:[#allocation6 + $0x38] sm:$0xf]
    %v781 = vld [vmem:[#allocation6 + $0x3c] sm:$0xf]
    %v782 = vpack.c.bf16 %v765, %v764
    %v783 = vld [vmem:[%s11] sm:$0x1]
    %v785 = vperm.slane %v783, 0
    %v803 = vunpack.c.l.b16 %v766
    %v804 = vunpack.c.l.b16 %v767
    %v805 = vunpack.c.l.b16 %v768
    %v806 = vunpack.c.l.b16 %v769
    %v807 = vunpack.c.l.b16 %v770
    %v808 = vunpack.c.l.b16 %v771
    %v809 = vunpack.c.l.b16 %v772
    %v810 = vunpack.c.l.b16 %v773
    %v811 = vunpack.c.l.b16 %v774
    %v812 = vunpack.c.l.b16 %v775
    %v813 = vunpack.c.l.b16 %v776
    %v814 = vunpack.c.l.b16 %v777
    %v815 = vunpack.c.l.b16 %v778
    %v816 = vunpack.c.l.b16 %v779
    %v817 = vunpack.c.l.b16 %v780
    %v818 = vunpack.c.l.b16 %v781
    %v819 = vpack.c.b16 %v804, %v803
    %v820 = vpack.c.b16 %v806, %v805
    %v821 = vpack.c.b16 %v808, %v807
    %v822 = vpack.c.b16 %v810, %v809
    %v823 = vpack.c.b16 %v812, %v811
    %v824 = vpack.c.b16 %v814, %v813
    %v825 = vpack.c.b16 %v816, %v815
    %v826 = vpack.c.b16 %v818, %v817
    %835 = vmatpush.bf16.msra.mxu0 %v826
    %836 = vmatpush.bf16.msra.mxu0 %v825
    %837 = vmatpush.bf16.msra.mxu0 %v824
    %838 = vmatpush.bf16.msra.mxu0 %v823
    %839 = vmatpush.bf16.msra.mxu0 %v822
    %840 = vmatpush.bf16.msra.mxu0 %v821
    %841 = vmatpush.bf16.msra.mxu0 %v820
    %842 = vmatpush.bf16.msra.mxu0 %v819
    %843 = vmatmul.bf16.gmra.mxu0 %v782
    %v844 = vpop.f32.mrf.mxu0
    %v845 = vadd.f32 %v785, %v844
    %v846 = vpop.f32.mrf.mxu0
    %v847 = vadd.f32 %v785, %v846
    %848 = vdwg.mxu0
    %v849 = vadd.f32 %v255, %v845
    %v850 = vadd.f32 %v256, %v847
    %v851 = vld [vmem:[%s12] sm:$0x1]
    %v852 = vld [vmem:[%s13] sm:$0x1]
    %853 = vadd.xlane.f32.xlu0 %v849
    %v854 = vpop.xlane.xlu0 %853
    %855 = vadd.xlane.f32.xlu0 %v850
    %v856 = vpop.xlane.xlu0 %855
    %v857 = vmul.f32 %v854, %v210
    %v858 = vmul.f32 %v856, %v210
    %v859 = vsub.f32 %v849, %v857
    %v860 = vsub.f32 %v850, %v858
    %v861 = vmul.f32 %v859, %v859
    %v862 = vmul.f32 %v860, %v860
    %863 = vadd.xlane.f32.xlu0 %v861
    %v864 = vpop.xlane.xlu0 %863
    %865 = vadd.xlane.f32.xlu0 %v862
    %v866 = vpop.xlane.xlu0 %865
    %v867 = vmul.f32 %v864, %v210
    %v868 = vmul.f32 %v866, %v210
    %v869 = vadd.f32 %v867, 1e-12
    %v870 = vadd.f32 %v868, 1e-12
    %v871 = vrsqrt.pop %v869
    %v872 = vmul.f32 %v871, %v869
    %v873 = vmul.f32 %v872, %v871
    %v874 = vmul.f32 0.5, %v873
    %v875 = vsub.f32 1.5, %v874
    %v876 = vmul.f32 %v871, %v875
    %vm877 = vweird.f32 %v869
    %vm878 = vweird.f32 %v871
    %vm879 = vmor %vm877, %vm878
    %v880 = vsel %vm879, %v871, %v876
    %v881 = vrsqrt.pop %v870
    %v882 = vmul.f32 %v881, %v870
    %v883 = vmul.f32 %v882, %v881
    %v884 = vmul.f32 0.5, %v883
    %v885 = vsub.f32 1.5, %v884
    %v886 = vmul.f32 %v881, %v885
    %vm887 = vweird.f32 %v870
    %vm888 = vweird.f32 %v881
    %vm889 = vmor %vm887, %vm888
    %v890 = vsel %vm889, %v881, %v886
    %v891 = vmul.f32 %v859, %v880
    %v892 = vmul.f32 %v860, %v890
    %v894 = vperm.slane %v851, 0
    %v896 = vmul.f32 %v891, %v894
    %v897 = vmul.f32 %v892, %v894
    %v899 = vperm.slane %v852, 0
    %v901 = vadd.f32 %v896, %v899
    %v902 = vadd.f32 %v897, %v899
    %v903 = vld [vmem:[#allocation7] sm:$0xff]
    %v904 = vld [vmem:[#allocation7 + $0x8] sm:$0xff]
    %v905 = vld [vmem:[#allocation7 + $0x10] sm:$0xff]
    %v906 = vld [vmem:[#allocation7 + $0x18] sm:$0xff]
    %v907 = vld [vmem:[#allocation7 + $0x20] sm:$0xff]
    %v908 = vld [vmem:[#allocation7 + $0x28] sm:$0xff]
    %v909 = vld [vmem:[#allocation7 + $0x30] sm:$0xff]
    %v910 = vld [vmem:[#allocation7 + $0x38] sm:$0xff]
    %v911 = vld [vmem:[#allocation7 + $0x40] sm:$0xff]
    %v912 = vld [vmem:[#allocation7 + $0x48] sm:$0xff]
    %v913 = vld [vmem:[#allocation7 + $0x50] sm:$0xff]
    %v914 = vld [vmem:[#allocation7 + $0x58] sm:$0xff]
    %v915 = vld [vmem:[#allocation7 + $0x60] sm:$0xff]
    %v916 = vld [vmem:[#allocation7 + $0x68] sm:$0xff]
    %v917 = vld [vmem:[#allocation7 + $0x70] sm:$0xff]
    %v918 = vld [vmem:[#allocation7 + $0x78] sm:$0xff]
    %v919 = vld [vmem:[#allocation7 + $0x80] sm:$0xff]
    %v920 = vld [vmem:[#allocation7 + $0x88] sm:$0xff]
    %v921 = vld [vmem:[#allocation7 + $0x90] sm:$0xff]
    %v922 = vld [vmem:[#allocation7 + $0x98] sm:$0xff]
    %v923 = vld [vmem:[#allocation7 + $0xa0] sm:$0xff]
    %v924 = vld [vmem:[#allocation7 + $0xa8] sm:$0xff]
    %v925 = vld [vmem:[#allocation7 + $0xb0] sm:$0xff]
    %v926 = vld [vmem:[#allocation7 + $0xb8] sm:$0xff]
    %v927 = vld [vmem:[#allocation7 + $0xc0] sm:$0xff]
    %v928 = vld [vmem:[#allocation7 + $0xc8] sm:$0xff]
    %v929 = vld [vmem:[#allocation7 + $0xd0] sm:$0xff]
    %v930 = vld [vmem:[#allocation7 + $0xd8] sm:$0xff]
    %v931 = vld [vmem:[#allocation7 + $0xe0] sm:$0xff]
    %v932 = vld [vmem:[#allocation7 + $0xe8] sm:$0xff]
    %v933 = vld [vmem:[#allocation7 + $0xf0] sm:$0xff]
    %v934 = vld [vmem:[#allocation7 + $0xf8] sm:$0xff]
    %v935 = vpack.c.bf16 %v902, %v901
    %v936 = vld [vmem:[%s15] sm:$0xf]
    %v938 = vperm.slane %v936, 0
    %v939 = vperm.slane %v936, 1
    %v940 = vperm.slane %v936, 2
    %v941 = vperm.slane %v936, 3
    %v978 = vunpack.c.l.b16 %v903
    %v979 = vunpack.c.h.b16 %v903
    %v980 = vunpack.c.l.b16 %v904
    %v981 = vunpack.c.h.b16 %v904
    %v982 = vunpack.c.l.b16 %v905
    %v983 = vunpack.c.h.b16 %v905
    %v984 = vunpack.c.l.b16 %v906
    %v985 = vunpack.c.h.b16 %v906
    %v986 = vunpack.c.l.b16 %v907
    %v987 = vunpack.c.h.b16 %v907
    %v988 = vunpack.c.l.b16 %v908
    %v989 = vunpack.c.h.b16 %v908
    %v990 = vunpack.c.l.b16 %v909
    %v991 = vunpack.c.h.b16 %v909
    %v992 = vunpack.c.l.b16 %v910
    %v993 = vunpack.c.h.b16 %v910
    %v994 = vunpack.c.l.b16 %v911
    %v995 = vunpack.c.h.b16 %v911
    %v996 = vunpack.c.l.b16 %v912
    %v997 = vunpack.c.h.b16 %v912
    %v998 = vunpack.c.l.b16 %v913
    %v999 = vunpack.c.h.b16 %v913
    %v1000 = vunpack.c.l.b16 %v914
    %v1001 = vunpack.c.h.b16 %v914
    %v1002 = vunpack.c.l.b16 %v915
    %v1003 = vunpack.c.h.b16 %v915
    %v1004 = vunpack.c.l.b16 %v916
    %v1005 = vunpack.c.h.b16 %v916
    %v1006 = vunpack.c.l.b16 %v917
    %v1007 = vunpack.c.h.b16 %v917
    %v1008 = vunpack.c.l.b16 %v918
    %v1009 = vunpack.c.h.b16 %v918
    %v1010 = vunpack.c.l.b16 %v919
    %v1011 = vunpack.c.h.b16 %v919
    %v1012 = vunpack.c.l.b16 %v920
    %v1013 = vunpack.c.h.b16 %v920
    %v1014 = vunpack.c.l.b16 %v921
    %v1015 = vunpack.c.h.b16 %v921
    %v1016 = vunpack.c.l.b16 %v922
    %v1017 = vunpack.c.h.b16 %v922
    %v1018 = vunpack.c.l.b16 %v923
    %v1019 = vunpack.c.h.b16 %v923
    %v1020 = vunpack.c.l.b16 %v924
    %v1021 = vunpack.c.h.b16 %v924
    %v1022 = vunpack.c.l.b16 %v925
    %v1023 = vunpack.c.h.b16 %v925
    %v1024 = vunpack.c.l.b16 %v926
    %v1025 = vunpack.c.h.b16 %v926
    %v1026 = vunpack.c.l.b16 %v927
    %v1027 = vunpack.c.h.b16 %v927
    %v1028 = vunpack.c.l.b16 %v928
    %v1029 = vunpack.c.h.b16 %v928
    %v1030 = vunpack.c.l.b16 %v929
    %v1031 = vunpack.c.h.b16 %v929
    %v1032 = vunpack.c.l.b16 %v930
    %v1033 = vunpack.c.h.b16 %v930
    %v1034 = vunpack.c.l.b16 %v931
    %v1035 = vunpack.c.h.b16 %v931
    %v1036 = vunpack.c.l.b16 %v932
    %v1037 = vunpack.c.h.b16 %v932
    %v1038 = vunpack.c.l.b16 %v933
    %v1039 = vunpack.c.h.b16 %v933
    %v1040 = vunpack.c.l.b16 %v934
    %v1041 = vunpack.c.h.b16 %v934
    %v1042 = vpack.c.b16 %v982, %v978
    %v1043 = vpack.c.b16 %v983, %v979
    %v1044 = vpack.c.b16 %v984, %v980
    %v1045 = vpack.c.b16 %v985, %v981
    %v1046 = vpack.c.b16 %v990, %v986
    %v1047 = vpack.c.b16 %v991, %v987
    %v1048 = vpack.c.b16 %v992, %v988
    %v1049 = vpack.c.b16 %v993, %v989
    %v1050 = vpack.c.b16 %v998, %v994
    %v1051 = vpack.c.b16 %v999, %v995
    %v1052 = vpack.c.b16 %v1000, %v996
    %v1053 = vpack.c.b16 %v1001, %v997
    %v1054 = vpack.c.b16 %v1006, %v1002
    %v1055 = vpack.c.b16 %v1007, %v1003
    %v1056 = vpack.c.b16 %v1008, %v1004
    %v1057 = vpack.c.b16 %v1009, %v1005
    %v1058 = vpack.c.b16 %v1014, %v1010
    %v1059 = vpack.c.b16 %v1015, %v1011
    %v1060 = vpack.c.b16 %v1016, %v1012
    %v1061 = vpack.c.b16 %v1017, %v1013
    %v1062 = vpack.c.b16 %v1022, %v1018
    %v1063 = vpack.c.b16 %v1023, %v1019
    %v1064 = vpack.c.b16 %v1024, %v1020
    %v1065 = vpack.c.b16 %v1025, %v1021
    %v1066 = vpack.c.b16 %v1030, %v1026
    %v1067 = vpack.c.b16 %v1031, %v1027
    %v1068 = vpack.c.b16 %v1032, %v1028
    %v1069 = vpack.c.b16 %v1033, %v1029
    %v1070 = vpack.c.b16 %v1038, %v1034
    %v1071 = vpack.c.b16 %v1039, %v1035
    %v1072 = vpack.c.b16 %v1040, %v1036
    %v1073 = vpack.c.b16 %v1041, %v1037
    %1106 = vmatpush.bf16.msra.mxu0 %v1070
    %1107 = vmatpush.bf16.msra.mxu0 %v1066
    %1108 = vmatpush.bf16.msra.mxu0 %v1062
    %1109 = vmatpush.bf16.msra.mxu0 %v1058
    %1110 = vmatpush.bf16.msra.mxu0 %v1054
    %1111 = vmatpush.bf16.msra.mxu0 %v1050
    %1112 = vmatpush.bf16.msra.mxu0 %v1046
    %1113 = vmatpush.bf16.msra.mxu0 %v1042
    %1114 = vmatmul.bf16.gmra.mxu0 %v935
    %v1115 = vpop.f32.mrf.mxu0
    %v1116 = vadd.f32 %v938, %v1115
    %v1117 = vpop.f32.mrf.mxu0
    %v1118 = vadd.f32 %v938, %v1117
    %1119 = vdwg.mxu0
    %1120 = vmatpush.bf16.msra.mxu0 %v1071
    %1121 = vmatpush.bf16.msra.mxu0 %v1067
    %1122 = vmatpush.bf16.msra.mxu0 %v1063
    %1123 = vmatpush.bf16.msra.mxu0 %v1059
    %1124 = vmatpush.bf16.msra.mxu0 %v1055
    %1125 = vmatpush.bf16.msra.mxu0 %v1051
    %1126 = vmatpush.bf16.msra.mxu0 %v1047
    %1127 = vmatpush.bf16.msra.mxu0 %v1043
    %1128 = vmatmul.bf16.gmra.mxu0 %v935
    %v1129 = vpop.f32.mrf.mxu0
    %v1130 = vadd.f32 %v939, %v1129
    %v1131 = vpop.f32.mrf.mxu0
    %v1132 = vadd.f32 %v939, %v1131
    %1133 = vdwg.mxu0
    %1134 = vmatpush.bf16.msra.mxu0 %v1072
    %1135 = vmatpush.bf16.msra.mxu0 %v1068
    %1136 = vmatpush.bf16.msra.mxu0 %v1064
    %1137 = vmatpush.bf16.msra.mxu0 %v1060
    %1138 = vmatpush.bf16.msra.mxu0 %v1056
    %1139 = vmatpush.bf16.msra.mxu0 %v1052
    %1140 = vmatpush.bf16.msra.mxu0 %v1048
    %1141 = vmatpush.bf16.msra.mxu0 %v1044
    %1142 = vmatmul.bf16.gmra.mxu0 %v935
    %v1143 = vpop.f32.mrf.mxu0
    %v1144 = vadd.f32 %v940, %v1143
    %v1145 = vpop.f32.mrf.mxu0
    %v1146 = vadd.f32 %v940, %v1145
    %1147 = vdwg.mxu0
    %1148 = vmatpush.bf16.msra.mxu0 %v1073
    %1149 = vmatpush.bf16.msra.mxu0 %v1069
    %1150 = vmatpush.bf16.msra.mxu0 %v1065
    %1151 = vmatpush.bf16.msra.mxu0 %v1061
    %1152 = vmatpush.bf16.msra.mxu0 %v1057
    %1153 = vmatpush.bf16.msra.mxu0 %v1053
    %1154 = vmatpush.bf16.msra.mxu0 %v1049
    %1155 = vmatpush.bf16.msra.mxu0 %v1045
    %1156 = vmatmul.bf16.gmra.mxu0 %v935
    %v1157 = vpop.f32.mrf.mxu0
    %v1158 = vadd.f32 %v941, %v1157
    %v1159 = vpop.f32.mrf.mxu0
    %v1160 = vadd.f32 %v941, %v1159
    %1161 = vdwg.mxu0
    %v1162 = vmul.f32 %v1116, %v1116
    %v1163 = vmul.f32 %v1130, %v1130
    %v1164 = vmul.f32 %v1144, %v1144
    %v1165 = vmul.f32 %v1158, %v1158
    %v1166 = vmul.f32 %v1118, %v1118
    %v1167 = vmul.f32 %v1132, %v1132
    %v1168 = vmul.f32 %v1146, %v1146
    %v1169 = vmul.f32 %v1160, %v1160
    %v1170 = vmul.f32 %v1116, %v1162
    %v1171 = vmul.f32 %v1130, %v1163
    %v1172 = vmul.f32 %v1144, %v1164
    %v1173 = vmul.f32 %v1158, %v1165
    %v1174 = vmul.f32 %v1118, %v1166
    %v1175 = vmul.f32 %v1132, %v1167
    %v1176 = vmul.f32 %v1146, %v1168
    %v1177 = vmul.f32 %v1160, %v1169
    %v1178 = vmul.f32 %v1170, 0.044715
    %v1179 = vmul.f32 %v1171, 0.044715
    %v1180 = vmul.f32 %v1172, 0.044715
    %v1181 = vmul.f32 %v1173, 0.044715
    %v1182 = vmul.f32 %v1174, 0.044715
    %v1183 = vmul.f32 %v1175, 0.044715
    %v1184 = vmul.f32 %v1176, 0.044715
    %v1185 = vmul.f32 %v1177, 0.044715
    %v1186 = vadd.f32 %v1116, %v1178
    %v1187 = vadd.f32 %v1130, %v1179
    %v1188 = vadd.f32 %v1144, %v1180
    %v1189 = vadd.f32 %v1158, %v1181
    %v1190 = vadd.f32 %v1118, %v1182
    %v1191 = vadd.f32 %v1132, %v1183
    %v1192 = vadd.f32 %v1146, %v1184
    %v1193 = vadd.f32 %v1160, %v1185
    %v1194 = vmul.f32 %v1186, 0.7978846
    %v1195 = vmul.f32 %v1187, 0.7978846
    %v1196 = vmul.f32 %v1188, 0.7978846
    %v1197 = vmul.f32 %v1189, 0.7978846
    %v1198 = vmul.f32 %v1190, 0.7978846
    %v1199 = vmul.f32 %v1191, 0.7978846
    %v1200 = vmul.f32 %v1192, 0.7978846
    %v1201 = vmul.f32 %v1193, 0.7978846
    %v1202 = vtanh.pop %v1194
    %v1203 = vtanh.pop %v1195
    %v1204 = vtanh.pop %v1196
    %v1205 = vtanh.pop %v1197
    %v1206 = vtanh.pop %v1198
    %v1207 = vtanh.pop %v1199
    %v1208 = vtanh.pop %v1200
    %v1209 = vtanh.pop %v1201
    %v1210 = vadd.f32 %v1202, 1.0
    %v1211 = vadd.f32 %v1203, 1.0
    %v1212 = vadd.f32 %v1204, 1.0
    %v1213 = vadd.f32 %v1205, 1.0
    %v1214 = vadd.f32 %v1206, 1.0
    %v1215 = vadd.f32 %v1207, 1.0
    %v1216 = vadd.f32 %v1208, 1.0
    %v1217 = vadd.f32 %v1209, 1.0
    %v1218 = vmul.f32 %v1210, 0.5
    %v1219 = vmul.f32 %v1211, 0.5
    %v1220 = vmul.f32 %v1212, 0.5
    %v1221 = vmul.f32 %v1213, 0.5
    %v1222 = vmul.f32 %v1214, 0.5
    %v1223 = vmul.f32 %v1215, 0.5
    %v1224 = vmul.f32 %v1216, 0.5
    %v1225 = vmul.f32 %v1217, 0.5
    %v1226 = vmul.f32 %v1116, %v1218
    %v1227 = vmul.f32 %v1130, %v1219
    %v1228 = vmul.f32 %v1144, %v1220
    %v1229 = vmul.f32 %v1158, %v1221
    %v1230 = vmul.f32 %v1118, %v1222
    %v1231 = vmul.f32 %v1132, %v1223
    %v1232 = vmul.f32 %v1146, %v1224
    %v1233 = vmul.f32 %v1160, %v1225
    %v1234 = vld [vmem:[#allocation9] sm:$0xf]
    %v1235 = vld [vmem:[#allocation9 + $0x4] sm:$0xf]
    %v1236 = vld [vmem:[#allocation9 + $0x8] sm:$0xf]
    %v1237 = vld [vmem:[#allocation9 + $0xc] sm:$0xf]
    %v1238 = vld [vmem:[#allocation9 + $0x10] sm:$0xf]
    %v1239 = vld [vmem:[#allocation9 + $0x14] sm:$0xf]
    %v1240 = vld [vmem:[#allocation9 + $0x18] sm:$0xf]
    %v1241 = vld [vmem:[#allocation9 + $0x1c] sm:$0xf]
    %v1242 = vld [vmem:[#allocation9 + $0x20] sm:$0xf]
    %v1243 = vld [vmem:[#allocation9 + $0x24] sm:$0xf]
    %v1244 = vld [vmem:[#allocation9 + $0x28] sm:$0xf]
    %v1245 = vld [vmem:[#allocation9 + $0x2c] sm:$0xf]
    %v1246 = vld [vmem:[#allocation9 + $0x30] sm:$0xf]
    %v1247 = vld [vmem:[#allocation9 + $0x34] sm:$0xf]
    %v1248 = vld [vmem:[#allocation9 + $0x38] sm:$0xf]
    %v1249 = vld [vmem:[#allocation9 + $0x3c] sm:$0xf]
    %v1250 = vld [vmem:[#allocation9 + $0x40] sm:$0xf]
    %v1251 = vld [vmem:[#allocation9 + $0x44] sm:$0xf]
    %v1252 = vld [vmem:[#allocation9 + $0x48] sm:$0xf]
    %v1253 = vld [vmem:[#allocation9 + $0x4c] sm:$0xf]
    %v1254 = vld [vmem:[#allocation9 + $0x50] sm:$0xf]
    %v1255 = vld [vmem:[#allocation9 + $0x54] sm:$0xf]
    %v1256 = vld [vmem:[#allocation9 + $0x58] sm:$0xf]
    %v1257 = vld [vmem:[#allocation9 + $0x5c] sm:$0xf]
    %v1258 = vld [vmem:[#allocation9 + $0x60] sm:$0xf]
    %v1259 = vld [vmem:[#allocation9 + $0x64] sm:$0xf]
    %v1260 = vld [vmem:[#allocation9 + $0x68] sm:$0xf]
    %v1261 = vld [vmem:[#allocation9 + $0x6c] sm:$0xf]
    %v1262 = vld [vmem:[#allocation9 + $0x70] sm:$0xf]
    %v1263 = vld [vmem:[#allocation9 + $0x74] sm:$0xf]
    %v1264 = vld [vmem:[#allocation9 + $0x78] sm:$0xf]
    %v1265 = vld [vmem:[#allocation9 + $0x7c] sm:$0xf]
    %v1266 = vld [vmem:[#allocation9 + $0x80] sm:$0xf]
    %v1267 = vld [vmem:[#allocation9 + $0x84] sm:$0xf]
    %v1268 = vld [vmem:[#allocation9 + $0x88] sm:$0xf]
    %v1269 = vld [vmem:[#allocation9 + $0x8c] sm:$0xf]
    %v1270 = vld [vmem:[#allocation9 + $0x90] sm:$0xf]
    %v1271 = vld [vmem:[#allocation9 + $0x94] sm:$0xf]
    %v1272 = vld [vmem:[#allocation9 + $0x98] sm:$0xf]
    %v1273 = vld [vmem:[#allocation9 + $0x9c] sm:$0xf]
    %v1274 = vld [vmem:[#allocation9 + $0xa0] sm:$0xf]
    %v1275 = vld [vmem:[#allocation9 + $0xa4] sm:$0xf]
    %v1276 = vld [vmem:[#allocation9 + $0xa8] sm:$0xf]
    %v1277 = vld [vmem:[#allocation9 + $0xac] sm:$0xf]
    %v1278 = vld [vmem:[#allocation9 + $0xb0] sm:$0xf]
    %v1279 = vld [vmem:[#allocation9 + $0xb4] sm:$0xf]
    %v1280 = vld [vmem:[#allocation9 + $0xb8] sm:$0xf]
    %v1281 = vld [vmem:[#allocation9 + $0xbc] sm:$0xf]
    %v1282 = vld [vmem:[#allocation9 + $0xc0] sm:$0xf]
    %v1283 = vld [vmem:[#allocation9 + $0xc4] sm:$0xf]
    %v1284 = vld [vmem:[#allocation9 + $0xc8] sm:$0xf]
    %v1285 = vld [vmem:[#allocation9 + $0xcc] sm:$0xf]
    %v1286 = vld [vmem:[#allocation9 + $0xd0] sm:$0xf]
    %v1287 = vld [vmem:[#allocation9 + $0xd4] sm:$0xf]
    %v1288 = vld [vmem:[#allocation9 + $0xd8] sm:$0xf]
    %v1289 = vld [vmem:[#allocation9 + $0xdc] sm:$0xf]
    %v1290 = vld [vmem:[#allocation9 + $0xe0] sm:$0xf]
    %v1291 = vld [vmem:[#allocation9 + $0xe4] sm:$0xf]
    %v1292 = vld [vmem:[#allocation9 + $0xe8] sm:$0xf]
    %v1293 = vld [vmem:[#allocation9 + $0xec] sm:$0xf]
    %v1294 = vld [vmem:[#allocation9 + $0xf0] sm:$0xf]
    %v1295 = vld [vmem:[#allocation9 + $0xf4] sm:$0xf]
    %v1296 = vld [vmem:[#allocation9 + $0xf8] sm:$0xf]
    %v1297 = vld [vmem:[#allocation9 + $0xfc] sm:$0xf]
    %v1298 = vpack.c.bf16 %v1230, %v1226
    %v1299 = vpack.c.bf16 %v1231, %v1227
    %v1300 = vpack.c.bf16 %v1232, %v1228
    %v1301 = vpack.c.bf16 %v1233, %v1229
    %v1302 = vld [vmem:[%s17] sm:$0x1]
    %v1304 = vperm.slane %v1302, 0
    %v1370 = vunpack.c.l.b16 %v1234
    %v1371 = vunpack.c.l.b16 %v1235
    %v1372 = vunpack.c.l.b16 %v1236
    %v1373 = vunpack.c.l.b16 %v1237
    %v1374 = vunpack.c.l.b16 %v1238
    %v1375 = vunpack.c.l.b16 %v1239
    %v1376 = vunpack.c.l.b16 %v1240
    %v1377 = vunpack.c.l.b16 %v1241
    %v1378 = vunpack.c.l.b16 %v1242
    %v1379 = vunpack.c.l.b16 %v1243
    %v1380 = vunpack.c.l.b16 %v1244
    %v1381 = vunpack.c.l.b16 %v1245
    %v1382 = vunpack.c.l.b16 %v1246
    %v1383 = vunpack.c.l.b16 %v1247
    %v1384 = vunpack.c.l.b16 %v1248
    %v1385 = vunpack.c.l.b16 %v1249
    %v1386 = vunpack.c.l.b16 %v1250
    %v1387 = vunpack.c.l.b16 %v1251
    %v1388 = vunpack.c.l.b16 %v1252
    %v1389 = vunpack.c.l.b16 %v1253
    %v1390 = vunpack.c.l.b16 %v1254
    %v1391 = vunpack.c.l.b16 %v1255
    %v1392 = vunpack.c.l.b16 %v1256
    %v1393 = vunpack.c.l.b16 %v1257
    %v1394 = vunpack.c.l.b16 %v1258
    %v1395 = vunpack.c.l.b16 %v1259
    %v1396 = vunpack.c.l.b16 %v1260
    %v1397 = vunpack.c.l.b16 %v1261
    %v1398 = vunpack.c.l.b16 %v1262
    %v1399 = vunpack.c.l.b16 %v1263
    %v1400 = vunpack.c.l.b16 %v1264
    %v1401 = vunpack.c.l.b16 %v1265
    %v1402 = vunpack.c.l.b16 %v1266
    %v1403 = vunpack.c.l.b16 %v1267
    %v1404 = vunpack.c.l.b16 %v1268
    %v1405 = vunpack.c.l.b16 %v1269
    %v1406 = vunpack.c.l.b16 %v1270
    %v1407 = vunpack.c.l.b16 %v1271
    %v1408 = vunpack.c.l.b16 %v1272
    %v1409 = vunpack.c.l.b16 %v1273
    %v1410 = vunpack.c.l.b16 %v1274
    %v1411 = vunpack.c.l.b16 %v1275
    %v1412 = vunpack.c.l.b16 %v1276
    %v1413 = vunpack.c.l.b16 %v1277
    %v1414 = vunpack.c.l.b16 %v1278
    %v1415 = vunpack.c.l.b16 %v1279
    %v1416 = vunpack.c.l.b16 %v1280
    %v1417 = vunpack.c.l.b16 %v1281
    %v1418 = vunpack.c.l.b16 %v1282
    %v1419 = vunpack.c.l.b16 %v1283
    %v1420 = vunpack.c.l.b16 %v1284
    %v1421 = vunpack.c.l.b16 %v1285
    %v1422 = vunpack.c.l.b16 %v1286
    %v1423 = vunpack.c.l.b16 %v1287
    %v1424 = vunpack.c.l.b16 %v1288
    %v1425 = vunpack.c.l.b16 %v1289
    %v1426 = vunpack.c.l.b16 %v1290
    %v1427 = vunpack.c.l.b16 %v1291
    %v1428 = vunpack.c.l.b16 %v1292
    %v1429 = vunpack.c.l.b16 %v1293
    %v1430 = vunpack.c.l.b16 %v1294
    %v1431 = vunpack.c.l.b16 %v1295
    %v1432 = vunpack.c.l.b16 %v1296
    %v1433 = vunpack.c.l.b16 %v1297
    %v1434 = vpack.c.b16 %v1371, %v1370
    %v1435 = vpack.c.b16 %v1373, %v1372
    %v1436 = vpack.c.b16 %v1375, %v1374
    %v1437 = vpack.c.b16 %v1377, %v1376
    %v1438 = vpack.c.b16 %v1379, %v1378
    %v1439 = vpack.c.b16 %v1381, %v1380
    %v1440 = vpack.c.b16 %v1383, %v1382
    %v1441 = vpack.c.b16 %v1385, %v1384
    %v1442 = vpack.c.b16 %v1387, %v1386
    %v1443 = vpack.c.b16 %v1389, %v1388
    %v1444 = vpack.c.b16 %v1391, %v1390
    %v1445 = vpack.c.b16 %v1393, %v1392
    %v1446 = vpack.c.b16 %v1395, %v1394
    %v1447 = vpack.c.b16 %v1397, %v1396
    %v1448 = vpack.c.b16 %v1399, %v1398
    %v1449 = vpack.c.b16 %v1401, %v1400
    %v1450 = vpack.c.b16 %v1403, %v1402
    %v1451 = vpack.c.b16 %v1405, %v1404
    %v1452 = vpack.c.b16 %v1407, %v1406
    %v1453 = vpack.c.b16 %v1409, %v1408
    %v1454 = vpack.c.b16 %v1411, %v1410
    %v1455 = vpack.c.b16 %v1413, %v1412
    %v1456 = vpack.c.b16 %v1415, %v1414
    %v1457 = vpack.c.b16 %v1417, %v1416
    %v1458 = vpack.c.b16 %v1419, %v1418
    %v1459 = vpack.c.b16 %v1421, %v1420
    %v1460 = vpack.c.b16 %v1423, %v1422
    %v1461 = vpack.c.b16 %v1425, %v1424
    %v1462 = vpack.c.b16 %v1427, %v1426
    %v1463 = vpack.c.b16 %v1429, %v1428
    %v1464 = vpack.c.b16 %v1431, %v1430
    %v1465 = vpack.c.b16 %v1433, %v1432
    %1498 = vmatpush.bf16.msra.mxu0 %v1441
    %1499 = vmatpush.bf16.msra.mxu0 %v1440
    %1500 = vmatpush.bf16.msra.mxu0 %v1439
    %1501 = vmatpush.bf16.msra.mxu0 %v1438
    %1502 = vmatpush.bf16.msra.mxu0 %v1437
    %1503 = vmatpush.bf16.msra.mxu0 %v1436
    %1504 = vmatpush.bf16.msra.mxu0 %v1435
    %1505 = vmatpush.bf16.msra.mxu0 %v1434
    %1506 = vmatmul.bf16.gmra.mxu0 %v1298
    %v1507 = vpop.f32.mrf.mxu0
    %v1508 = vadd.f32 %v1304, %v1507
    %v1509 = vpop.f32.mrf.mxu0
    %v1510 = vadd.f32 %v1304, %v1509
    %1511 = vdwg.mxu0
    %1512 = vmatpush.bf16.msra.mxu0 %v1449
    %1513 = vmatpush.bf16.msra.mxu0 %v1448
    %1514 = vmatpush.bf16.msra.mxu0 %v1447
    %1515 = vmatpush.bf16.msra.mxu0 %v1446
    %1516 = vmatpush.bf16.msra.mxu0 %v1445
    %1517 = vmatpush.bf16.msra.mxu0 %v1444
    %1518 = vmatpush.bf16.msra.mxu0 %v1443
    %1519 = vmatpush.bf16.msra.mxu0 %v1442
    %1520 = vmatmul.bf16.gmra.mxu0 %v1299
    %v1521 = vpop.f32.mrf.mxu0
    %v1522 = vadd.f32 %v1508, %v1521
    %v1523 = vpop.f32.mrf.mxu0
    %v1524 = vadd.f32 %v1510, %v1523
    %1525 = vdwg.mxu0
    %1526 = vmatpush.bf16.msra.mxu0 %v1457
    %1527 = vmatpush.bf16.msra.mxu0 %v1456
    %1528 = vmatpush.bf16.msra.mxu0 %v1455
    %1529 = vmatpush.bf16.msra.mxu0 %v1454
    %1530 = vmatpush.bf16.msra.mxu0 %v1453
    %1531 = vmatpush.bf16.msra.mxu0 %v1452
    %1532 = vmatpush.bf16.msra.mxu0 %v1451
    %1533 = vmatpush.bf16.msra.mxu0 %v1450
    %1534 = vmatmul.bf16.gmra.mxu0 %v1300
    %v1535 = vpop.f32.mrf.mxu0
    %v1536 = vadd.f32 %v1522, %v1535
    %v1537 = vpop.f32.mrf.mxu0
    %v1538 = vadd.f32 %v1524, %v1537
    %1539 = vdwg.mxu0
    %1540 = vmatpush.bf16.msra.mxu0 %v1465
    %1541 = vmatpush.bf16.msra.mxu0 %v1464
    %1542 = vmatpush.bf16.msra.mxu0 %v1463
    %1543 = vmatpush.bf16.msra.mxu0 %v1462
    %1544 = vmatpush.bf16.msra.mxu0 %v1461
    %1545 = vmatpush.bf16.msra.mxu0 %v1460
    %1546 = vmatpush.bf16.msra.mxu0 %v1459
    %1547 = vmatpush.bf16.msra.mxu0 %v1458
    %1548 = vmatmul.bf16.gmra.mxu0 %v1301
    %v1549 = vpop.f32.mrf.mxu0
    %v1550 = vadd.f32 %v1536, %v1549
    %v1551 = vpop.f32.mrf.mxu0
    %v1552 = vadd.f32 %v1538, %v1551
    %1553 = vdwg.mxu0
    %v1554 = vadd.f32 %v901, %v1550
    %v1555 = vadd.f32 %v902, %v1552
    %v1556 = vld [vmem:[%s18] sm:$0x1]
    %v1557 = vld [vmem:[%s19] sm:$0x1]
    %1558 = vadd.xlane.f32.xlu0 %v1554
    %v1559 = vpop.xlane.xlu0 %1558
    %1560 = vadd.xlane.f32.xlu0 %v1555
    %v1561 = vpop.xlane.xlu0 %1560
    %v1562 = vmul.f32 %v1559, %v210
    %v1563 = vmul.f32 %v1561, %v210
    %v1564 = vsub.f32 %v1554, %v1562
    %v1565 = vsub.f32 %v1555, %v1563
    %v1566 = vmul.f32 %v1564, %v1564
    %v1567 = vmul.f32 %v1565, %v1565
    %1568 = vadd.xlane.f32.xlu0 %v1566
    %v1569 = vpop.xlane.xlu0 %1568
    %1570 = vadd.xlane.f32.xlu0 %v1567
    %v1571 = vpop.xlane.xlu0 %1570
    %v1572 = vmul.f32 %v1569, %v210
    %v1573 = vmul.f32 %v1571, %v210
    %v1574 = vadd.f32 %v1572, 1e-12
    %v1575 = vadd.f32 %v1573, 1e-12
    %v1576 = vrsqrt.pop %v1574
    %v1577 = vmul.f32 %v1576, %v1574
    %v1578 = vmul.f32 %v1577, %v1576
    %v1579 = vmul.f32 0.5, %v1578
    %v1580 = vsub.f32 1.5, %v1579
    %v1581 = vmul.f32 %v1576, %v1580
    %vm1582 = vweird.f32 %v1574
    %vm1583 = vweird.f32 %v1576
    %vm1584 = vmor %vm1582, %vm1583
    %v1585 = vsel %vm1584, %v1576, %v1581
    %v1586 = vrsqrt.pop %v1575
    %v1587 = vmul.f32 %v1586, %v1575
    %v1588 = vmul.f32 %v1587, %v1586
    %v1589 = vmul.f32 0.5, %v1588
    %v1590 = vsub.f32 1.5, %v1589
    %v1591 = vmul.f32 %v1586, %v1590
    %vm1592 = vweird.f32 %v1575
    %vm1593 = vweird.f32 %v1586
    %vm1594 = vmor %vm1592, %vm1593
    %v1595 = vsel %vm1594, %v1586, %v1591
    %v1596 = vmul.f32 %v1564, %v1585
    %v1597 = vmul.f32 %v1565, %v1595
    %v1599 = vperm.slane %v1556, 0
    %v1601 = vmul.f32 %v1596, %v1599
    %v1602 = vmul.f32 %v1597, %v1599
    %v1604 = vperm.slane %v1557, 0
    %v1606 = vadd.f32 %v1601, %v1604
    %v1607 = vadd.f32 %v1602, %v1604
    %s1608 = scalar_lea.vmem %s4, 64
    %v1609 = vld [vmem:[%s1608] sm:$0xf]
    %v1610 = vld [vmem:[%s1608 + $0x4] sm:$0xf]
    %v1611 = vld [vmem:[%s1608 + $0x8] sm:$0xf]
    %v1612 = vld [vmem:[%s1608 + $0xc] sm:$0xf]
    %v1613 = vld [vmem:[%s1608 + $0x10] sm:$0xf]
    %v1614 = vld [vmem:[%s1608 + $0x14] sm:$0xf]
    %v1615 = vld [vmem:[%s1608 + $0x18] sm:$0xf]
    %v1616 = vld [vmem:[%s1608 + $0x1c] sm:$0xf]
    %v1617 = vld [vmem:[%s1608 + $0x20] sm:$0xf]
    %v1618 = vld [vmem:[%s1608 + $0x24] sm:$0xf]
    %v1619 = vld [vmem:[%s1608 + $0x28] sm:$0xf]
    %v1620 = vld [vmem:[%s1608 + $0x2c] sm:$0xf]
    %v1621 = vld [vmem:[%s1608 + $0x30] sm:$0xf]
    %v1622 = vld [vmem:[%s1608 + $0x34] sm:$0xf]
    %v1623 = vld [vmem:[%s1608 + $0x38] sm:$0xf]
    %v1624 = vld [vmem:[%s1608 + $0x3c] sm:$0xf]
    %v1625 = vpack.c.bf16 %v1607, %v1606
    %s1626 = scalar_lea.vmem %s5, 1
    %v1627 = vld [vmem:[%s1626] sm:$0x1]
    %v1629 = vperm.slane %v1627, 0
    %v1647 = vunpack.c.l.b16 %v1609
    %v1648 = vunpack.c.l.b16 %v1610
    %v1649 = vunpack.c.l.b16 %v1611
    %v1650 = vunpack.c.l.b16 %v1612
    %v1651 = vunpack.c.l.b16 %v1613
    %v1652 = vunpack.c.l.b16 %v1614
    %v1653 = vunpack.c.l.b16 %v1615
    %v1654 = vunpack.c.l.b16 %v1616
    %v1655 = vunpack.c.l.b16 %v1617
    %v1656 = vunpack.c.l.b16 %v1618
    %v1657 = vunpack.c.l.b16 %v1619
    %v1658 = vunpack.c.l.b16 %v1620
    %v1659 = vunpack.c.l.b16 %v1621
    %v1660 = vunpack.c.l.b16 %v1622
    %v1661 = vunpack.c.l.b16 %v1623
    %v1662 = vunpack.c.l.b16 %v1624
    %v1663 = vpack.c.b16 %v1648, %v1647
    %v1664 = vpack.c.b16 %v1650, %v1649
    %v1665 = vpack.c.b16 %v1652, %v1651
    %v1666 = vpack.c.b16 %v1654, %v1653
    %v1667 = vpack.c.b16 %v1656, %v1655
    %v1668 = vpack.c.b16 %v1658, %v1657
    %v1669 = vpack.c.b16 %v1660, %v1659
    %v1670 = vpack.c.b16 %v1662, %v1661
    %1679 = vmatpush.bf16.msra.mxu0 %v1670
    %1680 = vmatpush.bf16.msra.mxu0 %v1669
    %1681 = vmatpush.bf16.msra.mxu0 %v1668
    %1682 = vmatpush.bf16.msra.mxu0 %v1667
    %1683 = vmatpush.bf16.msra.mxu0 %v1666
    %1684 = vmatpush.bf16.msra.mxu0 %v1665
    %1685 = vmatpush.bf16.msra.mxu0 %v1664
    %1686 = vmatpush.bf16.msra.mxu0 %v1663
    %1687 = vmatmul.bf16.gmra.mxu0 %v1625
    %v1688 = vpop.f32.mrf.mxu0
    %v1689 = vadd.f32 %v1629, %v1688
    %v1690 = vpop.f32.mrf.mxu0
    %v1691 = vadd.f32 %v1629, %v1690
    %1692 = vdwg.mxu0
    %s1693 = scalar_lea.vmem [#allocation2], 64
    %v1694 = vld [vmem:[%s1693] sm:$0xf]
    %v1695 = vld [vmem:[%s1693 + $0x4] sm:$0xf]
    %v1696 = vld [vmem:[%s1693 + $0x8] sm:$0xf]
    %v1697 = vld [vmem:[%s1693 + $0xc] sm:$0xf]
    %v1698 = vld [vmem:[%s1693 + $0x10] sm:$0xf]
    %v1699 = vld [vmem:[%s1693 + $0x14] sm:$0xf]
    %v1700 = vld [vmem:[%s1693 + $0x18] sm:$0xf]
    %v1701 = vld [vmem:[%s1693 + $0x1c] sm:$0xf]
    %v1702 = vld [vmem:[%s1693 + $0x20] sm:$0xf]
    %v1703 = vld [vmem:[%s1693 + $0x24] sm:$0xf]
    %v1704 = vld [vmem:[%s1693 + $0x28] sm:$0xf]
    %v1705 = vld [vmem:[%s1693 + $0x2c] sm:$0xf]
    %v1706 = vld [vmem:[%s1693 + $0x30] sm:$0xf]
    %v1707 = vld [vmem:[%s1693 + $0x34] sm:$0xf]
    %v1708 = vld [vmem:[%s1693 + $0x38] sm:$0xf]
    %v1709 = vld [vmem:[%s1693 + $0x3c] sm:$0xf]
    %s1710 = scalar_lea.vmem %s7, 1
    %v1711 = vld [vmem:[%s1710] sm:$0x1]
    %v1713 = vperm.slane %v1711, 0
    %v1731 = vunpack.c.l.b16 %v1694
    %v1732 = vunpack.c.l.b16 %v1695
    %v1733 = vunpack.c.l.b16 %v1696
    %v1734 = vunpack.c.l.b16 %v1697
    %v1735 = vunpack.c.l.b16 %v1698
    %v1736 = vunpack.c.l.b16 %v1699
    %v1737 = vunpack.c.l.b16 %v1700
    %v1738 = vunpack.c.l.b16 %v1701
    %v1739 = vunpack.c.l.b16 %v1702
    %v1740 = vunpack.c.l.b16 %v1703
    %v1741 = vunpack.c.l.b16 %v1704
    %v1742 = vunpack.c.l.b16 %v1705
    %v1743 = vunpack.c.l.b16 %v1706
    %v1744 = vunpack.c.l.b16 %v1707
    %v1745 = vunpack.c.l.b16 %v1708
    %v1746 = vunpack.c.l.b16 %v1709
    %v1747 = vpack.c.b16 %v1732, %v1731
    %v1748 = vpack.c.b16 %v1734, %v1733
    %v1749 = vpack.c.b16 %v1736, %v1735
    %v1750 = vpack.c.b16 %v1738, %v1737
    %v1751 = vpack.c.b16 %v1740, %v1739
    %v1752 = vpack.c.b16 %v1742, %v1741
    %v1753 = vpack.c.b16 %v1744, %v1743
    %v1754 = vpack.c.b16 %v1746, %v1745
    %1763 = vmatpush.bf16.msra.mxu0 %v1754
    %1764 = vmatpush.bf16.msra.mxu0 %v1753
    %1765 = vmatpush.bf16.msra.mxu0 %v1752
    %1766 = vmatpush.bf16.msra.mxu0 %v1751
    %1767 = vmatpush.bf16.msra.mxu0 %v1750
    %1768 = vmatpush.bf16.msra.mxu0 %v1749
    %1769 = vmatpush.bf16.msra.mxu0 %v1748
    %1770 = vmatpush.bf16.msra.mxu0 %v1747
    %1771 = vmatmul.bf16.gmra.mxu0 %v1625
    %v1772 = vpop.f32.mrf.mxu0
    %v1773 = vadd.f32 %v1713, %v1772
    %v1774 = vpop.f32.mrf.mxu0
    %v1775 = vadd.f32 %v1713, %v1774
    %1776 = vdwg.mxu0
    %s1777 = scalar_lea.vmem [#allocation4], 64
    %v1778 = vld [vmem:[%s1777] sm:$0xf]
    %v1779 = vld [vmem:[%s1777 + $0x4] sm:$0xf]
    %v1780 = vld [vmem:[%s1777 + $0x8] sm:$0xf]
    %v1781 = vld [vmem:[%s1777 + $0xc] sm:$0xf]
    %v1782 = vld [vmem:[%s1777 + $0x10] sm:$0xf]
    %v1783 = vld [vmem:[%s1777 + $0x14] sm:$0xf]
    %v1784 = vld [vmem:[%s1777 + $0x18] sm:$0xf]
    %v1785 = vld [vmem:[%s1777 + $0x1c] sm:$0xf]
    %v1786 = vld [vmem:[%s1777 + $0x20] sm:$0xf]
    %v1787 = vld [vmem:[%s1777 + $0x24] sm:$0xf]
    %v1788 = vld [vmem:[%s1777 + $0x28] sm:$0xf]
    %v1789 = vld [vmem:[%s1777 + $0x2c] sm:$0xf]
    %v1790 = vld [vmem:[%s1777 + $0x30] sm:$0xf]
    %v1791 = vld [vmem:[%s1777 + $0x34] sm:$0xf]
    %v1792 = vld [vmem:[%s1777 + $0x38] sm:$0xf]
    %v1793 = vld [vmem:[%s1777 + $0x3c] sm:$0xf]
    %s1794 = scalar_lea.vmem %s9, 1
    %v1795 = vld [vmem:[%s1794] sm:$0x1]
    %v1797 = vperm.slane %v1795, 0
    %v1815 = vunpack.c.l.b16 %v1778
    %v1816 = vunpack.c.l.b16 %v1779
    %v1817 = vunpack.c.l.b16 %v1780
    %v1818 = vunpack.c.l.b16 %v1781
    %v1819 = vunpack.c.l.b16 %v1782
    %v1820 = vunpack.c.l.b16 %v1783
    %v1821 = vunpack.c.l.b16 %v1784
    %v1822 = vunpack.c.l.b16 %v1785
    %v1823 = vunpack.c.l.b16 %v1786
    %v1824 = vunpack.c.l.b16 %v1787
    %v1825 = vunpack.c.l.b16 %v1788
    %v1826 = vunpack.c.l.b16 %v1789
    %v1827 = vunpack.c.l.b16 %v1790
    %v1828 = vunpack.c.l.b16 %v1791
    %v1829 = vunpack.c.l.b16 %v1792
    %v1830 = vunpack.c.l.b16 %v1793
    %v1831 = vpack.c.b16 %v1816, %v1815
    %v1832 = vpack.c.b16 %v1818, %v1817
    %v1833 = vpack.c.b16 %v1820, %v1819
    %v1834 = vpack.c.b16 %v1822, %v1821
    %v1835 = vpack.c.b16 %v1824, %v1823
    %v1836 = vpack.c.b16 %v1826, %v1825
    %v1837 = vpack.c.b16 %v1828, %v1827
    %v1838 = vpack.c.b16 %v1830, %v1829
    %1847 = vmatpush.bf16.msra.mxu0 %v1838
    %1848 = vmatpush.bf16.msra.mxu0 %v1837
    %1849 = vmatpush.bf16.msra.mxu0 %v1836
    %1850 = vmatpush.bf16.msra.mxu0 %v1835
    %1851 = vmatpush.bf16.msra.mxu0 %v1834
    %1852 = vmatpush.bf16.msra.mxu0 %v1833
    %1853 = vmatpush.bf16.msra.mxu0 %v1832
    %1854 = vmatpush.bf16.msra.mxu0 %v1831
    %1855 = vmatmul.bf16.gmra.mxu0 %v1625
    %v1856 = vpop.f32.mrf.mxu0
    %v1857 = vadd.f32 %v1797, %v1856
    %v1858 = vpop.f32.mrf.mxu0
    %v1859 = vadd.f32 %v1797, %v1858
    %1860 = vdwg.mxu0
    %v1861 = vpack.c.bf16 %v1775, %v1773
    %v1862 = vmul.f32 %v1689, %v178
    %v1863 = vmul.f32 %v1691, %v178
    %v1864 = vpack.c.bf16 %v1863, %v1862
    %1865 = vmatpush.bf16.xpose.msra.mxu0 0
    %1866 = vmatpush.bf16.xpose.msra.mxu0 0
    %1867 = vmatpush.bf16.xpose.msra.mxu0 0
    %1868 = vmatpush.bf16.xpose.msra.mxu0 0
    %1869 = vmatpush.bf16.xpose.msra.mxu0 0
    %1870 = vmatpush.bf16.xpose.msra.mxu0 0
    %1871 = vmatpush.bf16.xpose.msra.mxu0 0
    %1872 = vmatpush.bf16.xpose.msra.mxu0 %v1861
    %1873 = vmatmul.bf16.gmra.mxu0 %v1864
    %v1874 = vpop.f32.mrf.mxu0
    %v1875 = vadd.f32 0.0, %v1874
    %v1876 = vpop.f32.mrf.mxu0
    %v1877 = vadd.f32 0.0, %v1876
    %1878 = vdwg.mxu0
    %v1879 = vmul.f32 %v1875, 0.17677669
    %v1880 = vmul.f32 %v1877, 0.17677669
    %v1881 = vadd.f32 %v1879, %v194
    %v1882 = vadd.f32 %v1880, %v195
    %v1883 = vsel %vm526, %v1881, -inf
    %1884 = vmax.xlane.f32.xlu0 %v1883
    %v1885 = vpop.xlane.xlu0 %1884
    %v1886 = vsel %vm526, %v1882, -inf
    %1887 = vmax.xlane.f32.xlu0 %v1886
    %v1888 = vpop.xlane.xlu0 %1887
    %v1889 = vsub.f32 %v1881, %v1885
    %v1890 = vsub.f32 %v1882, %v1888
    %v1891 = vmul.f32 %v1889, 1.442695
    %v1892 = vpow.pop %v1891
    %v1893 = vmul.f32 %v1890, 1.442695
    %v1894 = vpow.pop %v1893
    %v1895 = vsel %vm526, %v1892, 0.0
    %1896 = vadd.xlane.f32.xlu0 %v1895
    %v1897 = vpop.xlane.xlu0 %1896
    %v1898 = vsel %vm526, %v1894, 0.0
    %1899 = vadd.xlane.f32.xlu0 %v1898
    %v1900 = vpop.xlane.xlu0 %1899
    %v1901 = vrcp.pop %v1897
    %v1902 = vrcp.pop %v1900
    %v1903 = vmul.f32 %v1892, %v1901
    %v1904 = vmul.f32 %v1894, %v1902
    %v1905 = vpack.c.bf16 %v1904, %v1903
    %v1906 = vmul.f32 %v1857, %v178
    %v1907 = vmul.f32 %v1859, %v178
    %v1908 = vpack.c.bf16 %v1907, %v1906
    %v1909 = vmul.f32 %v1689, %v183
    %v1910 = vmul.f32 %v1691, %v183
    %v1911 = vpack.c.bf16 %v1910, %v1909
    %1912 = vmatpush.bf16.xpose.msra.mxu0 0
    %1913 = vmatpush.bf16.xpose.msra.mxu0 0
    %1914 = vmatpush.bf16.xpose.msra.mxu0 0
    %1915 = vmatpush.bf16.xpose.msra.mxu0 0
    %1916 = vmatpush.bf16.xpose.msra.mxu0 0
    %1917 = vmatpush.bf16.xpose.msra.mxu0 0
    %1918 = vmatpush.bf16.xpose.msra.mxu0 0
    %1919 = vmatpush.bf16.xpose.msra.mxu0 %v1861
    %1920 = vmatmul.bf16.gmra.mxu0 %v1911
    %v1921 = vpop.f32.mrf.mxu0
    %v1922 = vadd.f32 0.0, %v1921
    %v1923 = vpop.f32.mrf.mxu0
    %v1924 = vadd.f32 0.0, %v1923
    %1925 = vdwg.mxu0
    %v1926 = vmul.f32 %v1922, 0.17677669
    %v1927 = vmul.f32 %v1924, 0.17677669
    %v1928 = vadd.f32 %v1926, %v194
    %v1929 = vadd.f32 %v1927, %v195
    %v1930 = vsel %vm526, %v1928, -inf
    %1931 = vmax.xlane.f32.xlu0 %v1930
    %v1932 = vpop.xlane.xlu0 %1931
    %v1933 = vsel %vm526, %v1929, -inf
    %1934 = vmax.xlane.f32.xlu0 %v1933
    %v1935 = vpop.xlane.xlu0 %1934
    %v1936 = vsub.f32 %v1928, %v1932
    %v1937 = vsub.f32 %v1929, %v1935
    %v1938 = vmul.f32 %v1936, 1.442695
    %v1939 = vpow.pop %v1938
    %v1940 = vmul.f32 %v1937, 1.442695
    %v1941 = vpow.pop %v1940
    %v1942 = vsel %vm526, %v1939, 0.0
    %1943 = vadd.xlane.f32.xlu0 %v1942
    %v1944 = vpop.xlane.xlu0 %1943
    %v1945 = vsel %vm526, %v1941, 0.0
    %1946 = vadd.xlane.f32.xlu0 %v1945
    %v1947 = vpop.xlane.xlu0 %1946
    %v1948 = vrcp.pop %v1944
    %v1949 = vrcp.pop %v1947
    %v1950 = vmul.f32 %v1939, %v1948
    %v1951 = vmul.f32 %v1941, %v1949
    %v1952 = vpack.c.bf16 %v1951, %v1950
    %v1953 = vmul.f32 %v1857, %v183
    %v1954 = vmul.f32 %v1859, %v183
    %v1955 = vpack.c.bf16 %v1954, %v1953
    %v1957 = vsel %vm526, %v1952, 0
    %1959 = vmatpush.bf16.msra.mxu0 0
    %1960 = vmatpush.bf16.msra.mxu0 0
    %1961 = vmatpush.bf16.msra.mxu0 0
    %1962 = vmatpush.bf16.msra.mxu0 0
    %1963 = vmatpush.bf16.msra.mxu0 0
    %1964 = vmatpush.bf16.msra.mxu0 0
    %1965 = vmatpush.bf16.msra.mxu0 0
    %1966 = vmatpush.bf16.msra.mxu0 %v1955
    %1967 = vmatmul.bf16.gmra.mxu0 %v1957
    %v1968 = vpop.f32.mrf.mxu0
    %v1969 = vadd.f32 0.0, %v1968
    %v1970 = vpop.f32.mrf.mxu0
    %v1971 = vadd.f32 0.0, %v1970
    %1972 = vdwg.mxu0
    %v1974 = vsel %vm526, %v1905, 0
    %1976 = vmatpush.bf16.msra.mxu0 0
    %1977 = vmatpush.bf16.msra.mxu0 0
    %1978 = vmatpush.bf16.msra.mxu0 0
    %1979 = vmatpush.bf16.msra.mxu0 0
    %1980 = vmatpush.bf16.msra.mxu0 0
    %1981 = vmatpush.bf16.msra.mxu0 0
    %1982 = vmatpush.bf16.msra.mxu0 0
    %1983 = vmatpush.bf16.msra.mxu0 %v1908
    %1984 = vmatmul.bf16.gmra.mxu0 %v1974
    %v1985 = vpop.f32.mrf.mxu0
    %v1986 = vadd.f32 %v1969, %v1985
    %v1987 = vpop.f32.mrf.mxu0
    %v1988 = vadd.f32 %v1971, %v1987
    %1989 = vdwg.mxu0
    %v1990 = vmul.f32 %v1689, %v188
    %v1991 = vmul.f32 %v1691, %v188
    %v1992 = vpack.c.bf16 %v1991, %v1990
    %1993 = vmatpush.bf16.xpose.msra.mxu0 0
    %1994 = vmatpush.bf16.xpose.msra.mxu0 0
    %1995 = vmatpush.bf16.xpose.msra.mxu0 0
    %1996 = vmatpush.bf16.xpose.msra.mxu0 0
    %1997 = vmatpush.bf16.xpose.msra.mxu0 0
    %1998 = vmatpush.bf16.xpose.msra.mxu0 0
    %1999 = vmatpush.bf16.xpose.msra.mxu0 0
    %2000 = vmatpush.bf16.xpose.msra.mxu0 %v1861
    %2001 = vmatmul.bf16.gmra.mxu0 %v1992
    %v2002 = vpop.f32.mrf.mxu0
    %v2003 = vadd.f32 0.0, %v2002
    %v2004 = vpop.f32.mrf.mxu0
    %v2005 = vadd.f32 0.0, %v2004
    %2006 = vdwg.mxu0
    %v2007 = vmul.f32 %v2003, 0.17677669
    %v2008 = vmul.f32 %v2005, 0.17677669
    %v2009 = vadd.f32 %v2007, %v194
    %v2010 = vadd.f32 %v2008, %v195
    %v2011 = vsel %vm526, %v2009, -inf
    %2012 = vmax.xlane.f32.xlu0 %v2011
    %v2013 = vpop.xlane.xlu0 %2012
    %v2014 = vsel %vm526, %v2010, -inf
    %2015 = vmax.xlane.f32.xlu0 %v2014
    %v2016 = vpop.xlane.xlu0 %2015
    %v2017 = vsub.f32 %v2009, %v2013
    %v2018 = vsub.f32 %v2010, %v2016
    %v2019 = vmul.f32 %v2017, 1.442695
    %v2020 = vpow.pop %v2019
    %v2021 = vmul.f32 %v2018, 1.442695
    %v2022 = vpow.pop %v2021
    %v2023 = vsel %vm526, %v2020, 0.0
    %2024 = vadd.xlane.f32.xlu0 %v2023
    %v2025 = vpop.xlane.xlu0 %2024
    %v2026 = vsel %vm526, %v2022, 0.0
    %2027 = vadd.xlane.f32.xlu0 %v2026
    %v2028 = vpop.xlane.xlu0 %2027
    %v2029 = vrcp.pop %v2025
    %v2030 = vrcp.pop %v2028
    %v2031 = vmul.f32 %v2020, %v2029
    %v2032 = vmul.f32 %v2022, %v2030
    %v2033 = vpack.c.bf16 %v2032, %v2031
    %v2034 = vmul.f32 %v1857, %v188
    %v2035 = vmul.f32 %v1859, %v188
    %v2036 = vpack.c.bf16 %v2035, %v2034
    %v2038 = vsel %vm526, %v2033, 0
    %2040 = vmatpush.bf16.msra.mxu0 0
    %2041 = vmatpush.bf16.msra.mxu0 0
    %2042 = vmatpush.bf16.msra.mxu0 0
    %2043 = vmatpush.bf16.msra.mxu0 0
    %2044 = vmatpush.bf16.msra.mxu0 0
    %2045 = vmatpush.bf16.msra.mxu0 0
    %2046 = vmatpush.bf16.msra.mxu0 0
    %2047 = vmatpush.bf16.msra.mxu0 %v2036
    %2048 = vmatmul.bf16.gmra.mxu0 %v2038
    %v2049 = vpop.f32.mrf.mxu0
    %v2050 = vadd.f32 0.0, %v2049
    %v2051 = vpop.f32.mrf.mxu0
    %v2052 = vadd.f32 0.0, %v2051
    %2053 = vdwg.mxu0
    %v2054 = vadd.f32 %v1986, %v2050
    %v2055 = vadd.f32 %v1988, %v2052
    %v2056 = vmul.f32 %v1689, %v193
    %v2057 = vmul.f32 %v1691, %v193
    %v2058 = vpack.c.bf16 %v2057, %v2056
    %2059 = vmatpush.bf16.xpose.msra.mxu0 0
    %2060 = vmatpush.bf16.xpose.msra.mxu0 0
    %2061 = vmatpush.bf16.xpose.msra.mxu0 0
    %2062 = vmatpush.bf16.xpose.msra.mxu0 0
    %2063 = vmatpush.bf16.xpose.msra.mxu0 0
    %2064 = vmatpush.bf16.xpose.msra.mxu0 0
    %2065 = vmatpush.bf16.xpose.msra.mxu0 0
    %2066 = vmatpush.bf16.xpose.msra.mxu0 %v1861
    %2067 = vmatmul.bf16.gmra.mxu0 %v2058
    %v2068 = vpop.f32.mrf.mxu0
    %v2069 = vadd.f32 0.0, %v2068
    %v2070 = vpop.f32.mrf.mxu0
    %v2071 = vadd.f32 0.0, %v2070
    %2072 = vdwg.mxu0
    %v2073 = vmul.f32 %v2069, 0.17677669
    %v2074 = vmul.f32 %v2071, 0.17677669
    %v2075 = vadd.f32 %v2073, %v194
    %v2076 = vadd.f32 %v2074, %v195
    %v2077 = vsel %vm526, %v2075, -inf
    %2078 = vmax.xlane.f32.xlu0 %v2077
    %v2079 = vpop.xlane.xlu0 %2078
    %v2080 = vsel %vm526, %v2076, -inf
    %2081 = vmax.xlane.f32.xlu0 %v2080
    %v2082 = vpop.xlane.xlu0 %2081
    %v2083 = vsub.f32 %v2075, %v2079
    %v2084 = vsub.f32 %v2076, %v2082
    %v2085 = vmul.f32 %v2083, 1.442695
    %v2086 = vpow.pop %v2085
    %v2087 = vmul.f32 %v2084, 1.442695
    %v2088 = vpow.pop %v2087
    %v2089 = vsel %vm526, %v2086, 0.0
    %2090 = vadd.xlane.f32.xlu0 %v2089
    %v2091 = vpop.xlane.xlu0 %2090
    %v2092 = vsel %vm526, %v2088, 0.0
    %2093 = vadd.xlane.f32.xlu0 %v2092
    %v2094 = vpop.xlane.xlu0 %2093
    %v2095 = vrcp.pop %v2091
    %v2096 = vrcp.pop %v2094
    %v2097 = vmul.f32 %v2086, %v2095
    %v2098 = vmul.f32 %v2088, %v2096
    %v2099 = vpack.c.bf16 %v2098, %v2097
    %v2100 = vmul.f32 %v1857, %v193
    %v2101 = vmul.f32 %v1859, %v193
    %v2102 = vpack.c.bf16 %v2101, %v2100
    %v2104 = vsel %vm526, %v2099, 0
    %2106 = vmatpush.bf16.msra.mxu0 0
    %2107 = vmatpush.bf16.msra.mxu0 0
    %2108 = vmatpush.bf16.msra.mxu0 0
    %2109 = vmatpush.bf16.msra.mxu0 0
    %2110 = vmatpush.bf16.msra.mxu0 0
    %2111 = vmatpush.bf16.msra.mxu0 0
    %2112 = vmatpush.bf16.msra.mxu0 0
    %2113 = vmatpush.bf16.msra.mxu0 %v2102
    %2114 = vmatmul.bf16.gmra.mxu0 %v2104
    %v2115 = vpop.f32.mrf.mxu0
    %v2116 = vadd.f32 0.0, %v2115
    %v2117 = vpop.f32.mrf.mxu0
    %v2118 = vadd.f32 0.0, %v2117
    %2119 = vdwg.mxu0
    %v2120 = vadd.f32 %v2054, %v2116
    %v2121 = vadd.f32 %v2055, %v2118
    %s2122 = scalar_lea.vmem [#allocation6], 64
    %v2123 = vld [vmem:[%s2122] sm:$0xf]
    %v2124 = vld [vmem:[%s2122 + $0x4] sm:$0xf]
    %v2125 = vld [vmem:[%s2122 + $0x8] sm:$0xf]
    %v2126 = vld [vmem:[%s2122 + $0xc] sm:$0xf]
    %v2127 = vld [vmem:[%s2122 + $0x10] sm:$0xf]
    %v2128 = vld [vmem:[%s2122 + $0x14] sm:$0xf]
    %v2129 = vld [vmem:[%s2122 + $0x18] sm:$0xf]
    %v2130 = vld [vmem:[%s2122 + $0x1c] sm:$0xf]
    %v2131 = vld [vmem:[%s2122 + $0x20] sm:$0xf]
    %v2132 = vld [vmem:[%s2122 + $0x24] sm:$0xf]
    %v2133 = vld [vmem:[%s2122 + $0x28] sm:$0xf]
    %v2134 = vld [vmem:[%s2122 + $0x2c] sm:$0xf]
    %v2135 = vld [vmem:[%s2122 + $0x30] sm:$0xf]
    %v2136 = vld [vmem:[%s2122 + $0x34] sm:$0xf]
    %v2137 = vld [vmem:[%s2122 + $0x38] sm:$0xf]
    %v2138 = vld [vmem:[%s2122 + $0x3c] sm:$0xf]
    %v2139 = vpack.c.bf16 %v2121, %v2120
    %s2140 = scalar_lea.vmem %s11, 1
    %v2141 = vld [vmem:[%s2140] sm:$0x1]
    %v2143 = vperm.slane %v2141, 0
    %v2161 = vunpack.c.l.b16 %v2123
    %v2162 = vunpack.c.l.b16 %v2124
    %v2163 = vunpack.c.l.b16 %v2125
    %v2164 = vunpack.c.l.b16 %v2126
    %v2165 = vunpack.c.l.b16 %v2127
    %v2166 = vunpack.c.l.b16 %v2128
    %v2167 = vunpack.c.l.b16 %v2129
    %v2168 = vunpack.c.l.b16 %v2130
    %v2169 = vunpack.c.l.b16 %v2131
    %v2170 = vunpack.c.l.b16 %v2132
    %v2171 = vunpack.c.l.b16 %v2133
    %v2172 = vunpack.c.l.b16 %v2134
    %v2173 = vunpack.c.l.b16 %v2135
    %v2174 = vunpack.c.l.b16 %v2136
    %v2175 = vunpack.c.l.b16 %v2137
    %v2176 = vunpack.c.l.b16 %v2138
    %v2177 = vpack.c.b16 %v2162, %v2161
    %v2178 = vpack.c.b16 %v2164, %v2163
    %v2179 = vpack.c.b16 %v2166, %v2165
    %v2180 = vpack.c.b16 %v2168, %v2167
    %v2181 = vpack.c.b16 %v2170, %v2169
    %v2182 = vpack.c.b16 %v2172, %v2171
    %v2183 = vpack.c.b16 %v2174, %v2173
    %v2184 = vpack.c.b16 %v2176, %v2175
    %2193 = vmatpush.bf16.msra.mxu0 %v2184
    %2194 = vmatpush.bf16.msra.mxu0 %v2183
    %2195 = vmatpush.bf16.msra.mxu0 %v2182
    %2196 = vmatpush.bf16.msra.mxu0 %v2181
    %2197 = vmatpush.bf16.msra.mxu0 %v2180
    %2198 = vmatpush.bf16.msra.mxu0 %v2179
    %2199 = vmatpush.bf16.msra.mxu0 %v2178
    %2200 = vmatpush.bf16.msra.mxu0 %v2177
    %2201 = vmatmul.bf16.gmra.mxu0 %v2139
    %v2202 = vpop.f32.mrf.mxu0
    %v2203 = vadd.f32 %v2143, %v2202
    %v2204 = vpop.f32.mrf.mxu0
    %v2205 = vadd.f32 %v2143, %v2204
    %2206 = vdwg.mxu0
    %v2207 = vadd.f32 %v1606, %v2203
    %v2208 = vadd.f32 %v1607, %v2205
    %s2209 = scalar_lea.vmem %s12, 1
    %v2210 = vld [vmem:[%s2209] sm:$0x1]
    %s2211 = scalar_lea.vmem %s13, 1
    %v2212 = vld [vmem:[%s2211] sm:$0x1]
    %2213 = vadd.xlane.f32.xlu0 %v2207
    %v2214 = vpop.xlane.xlu0 %2213
    %2215 = vadd.xlane.f32.xlu0 %v2208
    %v2216 = vpop.xlane.xlu0 %2215
    %v2217 = vmul.f32 %v2214, %v210
    %v2218 = vmul.f32 %v2216, %v210
    %v2219 = vsub.f32 %v2207, %v2217
    %v2220 = vsub.f32 %v2208, %v2218
    %v2221 = vmul.f32 %v2219, %v2219
    %v2222 = vmul.f32 %v2220, %v2220
    %2223 = vadd.xlane.f32.xlu0 %v2221
    %v2224 = vpop.xlane.xlu0 %2223
    %2225 = vadd.xlane.f32.xlu0 %v2222
    %v2226 = vpop.xlane.xlu0 %2225
    %v2227 = vmul.f32 %v2224, %v210
    %v2228 = vmul.f32 %v2226, %v210
    %v2229 = vadd.f32 %v2227, 1e-12
    %v2230 = vadd.f32 %v2228, 1e-12
    %v2231 = vrsqrt.pop %v2229
    %v2232 = vmul.f32 %v2231, %v2229
    %v2233 = vmul.f32 %v2232, %v2231
    %v2234 = vmul.f32 0.5, %v2233
    %v2235 = vsub.f32 1.5, %v2234
    %v2236 = vmul.f32 %v2231, %v2235
    %vm2237 = vweird.f32 %v2229
    %vm2238 = vweird.f32 %v2231
    %vm2239 = vmor %vm2237, %vm2238
    %v2240 = vsel %vm2239, %v2231, %v2236
    %v2241 = vrsqrt.pop %v2230
    %v2242 = vmul.f32 %v2241, %v2230
    %v2243 = vmul.f32 %v2242, %v2241
    %v2244 = vmul.f32 0.5, %v2243
    %v2245 = vsub.f32 1.5, %v2244
    %v2246 = vmul.f32 %v2241, %v2245
    %vm2247 = vweird.f32 %v2230
    %vm2248 = vweird.f32 %v2241
    %vm2249 = vmor %vm2247, %vm2248
    %v2250 = vsel %vm2249, %v2241, %v2246
    %v2251 = vmul.f32 %v2219, %v2240
    %v2252 = vmul.f32 %v2220, %v2250
    %v2254 = vperm.slane %v2210, 0
    %v2256 = vmul.f32 %v2251, %v2254
    %v2257 = vmul.f32 %v2252, %v2254
    %v2259 = vperm.slane %v2212, 0
    %v2261 = vadd.f32 %v2256, %v2259
    %v2262 = vadd.f32 %v2257, %v2259
    %s2263 = scalar_lea.vmem [#allocation7], 256
    %v2264 = vld [vmem:[%s2263] sm:$0xff]
    %v2265 = vld [vmem:[%s2263 + $0x8] sm:$0xff]
    %v2266 = vld [vmem:[%s2263 + $0x10] sm:$0xff]
    %v2267 = vld [vmem:[%s2263 + $0x18] sm:$0xff]
    %v2268 = vld [vmem:[%s2263 + $0x20] sm:$0xff]
    %v2269 = vld [vmem:[%s2263 + $0x28] sm:$0xff]
    %v2270 = vld [vmem:[%s2263 + $0x30] sm:$0xff]
    %v2271 = vld [vmem:[%s2263 + $0x38] sm:$0xff]
    %v2272 = vld [vmem:[%s2263 + $0x40] sm:$0xff]
    %v2273 = vld [vmem:[%s2263 + $0x48] sm:$0xff]
    %v2274 = vld [vmem:[%s2263 + $0x50] sm:$0xff]
    %v2275 = vld [vmem:[%s2263 + $0x58] sm:$0xff]
    %v2276 = vld [vmem:[%s2263 + $0x60] sm:$0xff]
    %v2277 = vld [vmem:[%s2263 + $0x68] sm:$0xff]
    %v2278 = vld [vmem:[%s2263 + $0x70] sm:$0xff]
    %v2279 = vld [vmem:[%s2263 + $0x78] sm:$0xff]
    %v2280 = vld [vmem:[%s2263 + $0x80] sm:$0xff]
    %v2281 = vld [vmem:[%s2263 + $0x88] sm:$0xff]
    %v2282 = vld [vmem:[%s2263 + $0x90] sm:$0xff]
    %v2283 = vld [vmem:[%s2263 + $0x98] sm:$0xff]
    %v2284 = vld [vmem:[%s2263 + $0xa0] sm:$0xff]
    %v2285 = vld [vmem:[%s2263 + $0xa8] sm:$0xff]
    %v2286 = vld [vmem:[%s2263 + $0xb0] sm:$0xff]
    %v2287 = vld [vmem:[%s2263 + $0xb8] sm:$0xff]
    %v2288 = vld [vmem:[%s2263 + $0xc0] sm:$0xff]
    %v2289 = vld [vmem:[%s2263 + $0xc8] sm:$0xff]
    %v2290 = vld [vmem:[%s2263 + $0xd0] sm:$0xff]
    %v2291 = vld [vmem:[%s2263 + $0xd8] sm:$0xff]
    %v2292 = vld [vmem:[%s2263 + $0xe0] sm:$0xff]
    %v2293 = vld [vmem:[%s2263 + $0xe8] sm:$0xff]
    %v2294 = vld [vmem:[%s2263 + $0xf0] sm:$0xff]
    %v2295 = vld [vmem:[%s2263 + $0xf8] sm:$0xff]
    %v2296 = vpack.c.bf16 %v2262, %v2261
    %s2297 = scalar_lea.vmem %s15, 4
    %v2298 = vld [vmem:[%s2297] sm:$0xf]
    %v2300 = vperm.slane %v2298, 0
    %v2301 = vperm.slane %v2298, 1
    %v2302 = vperm.slane %v2298, 2
    %v2303 = vperm.slane %v2298, 3
    %v2340 = vunpack.c.l.b16 %v2264
    %v2341 = vunpack.c.h.b16 %v2264
    %v2342 = vunpack.c.l.b16 %v2265
    %v2343 = vunpack.c.h.b16 %v2265
    %v2344 = vunpack.c.l.b16 %v2266
    %v2345 = vunpack.c.h.b16 %v2266
    %v2346 = vunpack.c.l.b16 %v2267
    %v2347 = vunpack.c.h.b16 %v2267
    %v2348 = vunpack.c.l.b16 %v2268
    %v2349 = vunpack.c.h.b16 %v2268
    %v2350 = vunpack.c.l.b16 %v2269
    %v2351 = vunpack.c.h.b16 %v2269
    %v2352 = vunpack.c.l.b16 %v2270
    %v2353 = vunpack.c.h.b16 %v2270
    %v2354 = vunpack.c.l.b16 %v2271
    %v2355 = vunpack.c.h.b16 %v2271
    %v2356 = vunpack.c.l.b16 %v2272
    %v2357 = vunpack.c.h.b16 %v2272
    %v2358 = vunpack.c.l.b16 %v2273
    %v2359 = vunpack.c.h.b16 %v2273
    %v2360 = vunpack.c.l.b16 %v2274
    %v2361 = vunpack.c.h.b16 %v2274
    %v2362 = vunpack.c.l.b16 %v2275
    %v2363 = vunpack.c.h.b16 %v2275
    %v2364 = vunpack.c.l.b16 %v2276
    %v2365 = vunpack.c.h.b16 %v2276
    %v2366 = vunpack.c.l.b16 %v2277
    %v2367 = vunpack.c.h.b16 %v2277
    %v2368 = vunpack.c.l.b16 %v2278
    %v2369 = vunpack.c.h.b16 %v2278
    %v2370 = vunpack.c.l.b16 %v2279
    %v2371 = vunpack.c.h.b16 %v2279
    %v2372 = vunpack.c.l.b16 %v2280
    %v2373 = vunpack.c.h.b16 %v2280
    %v2374 = vunpack.c.l.b16 %v2281
    %v2375 = vunpack.c.h.b16 %v2281
    %v2376 = vunpack.c.l.b16 %v2282
    %v2377 = vunpack.c.h.b16 %v2282
    %v2378 = vunpack.c.l.b16 %v2283
    %v2379 = vunpack.c.h.b16 %v2283
    %v2380 = vunpack.c.l.b16 %v2284
    %v2381 = vunpack.c.h.b16 %v2284
    %v2382 = vunpack.c.l.b16 %v2285
    %v2383 = vunpack.c.h.b16 %v2285
    %v2384 = vunpack.c.l.b16 %v2286
    %v2385 = vunpack.c.h.b16 %v2286
    %v2386 = vunpack.c.l.b16 %v2287
    %v2387 = vunpack.c.h.b16 %v2287
    %v2388 = vunpack.c.l.b16 %v2288
    %v2389 = vunpack.c.h.b16 %v2288
    %v2390 = vunpack.c.l.b16 %v2289
    %v2391 = vunpack.c.h.b16 %v2289
    %v2392 = vunpack.c.l.b16 %v2290
    %v2393 = vunpack.c.h.b16 %v2290
    %v2394 = vunpack.c.l.b16 %v2291
    %v2395 = vunpack.c.h.b16 %v2291
    %v2396 = vunpack.c.l.b16 %v2292
    %v2397 = vunpack.c.h.b16 %v2292
    %v2398 = vunpack.c.l.b16 %v2293
    %v2399 = vunpack.c.h.b16 %v2293
    %v2400 = vunpack.c.l.b16 %v2294
    %v2401 = vunpack.c.h.b16 %v2294
    %v2402 = vunpack.c.l.b16 %v2295
    %v2403 = vunpack.c.h.b16 %v2295
    %v2404 = vpack.c.b16 %v2344, %v2340
    %v2405 = vpack.c.b16 %v2345, %v2341
    %v2406 = vpack.c.b16 %v2346, %v2342
    %v2407 = vpack.c.b16 %v2347, %v2343
    %v2408 = vpack.c.b16 %v2352, %v2348
    %v2409 = vpack.c.b16 %v2353, %v2349
    %v2410 = vpack.c.b16 %v2354, %v2350
    %v2411 = vpack.c.b16 %v2355, %v2351
    %v2412 = vpack.c.b16 %v2360, %v2356
    %v2413 = vpack.c.b16 %v2361, %v2357
    %v2414 = vpack.c.b16 %v2362, %v2358
    %v2415 = vpack.c.b16 %v2363, %v2359
    %v2416 = vpack.c.b16 %v2368, %v2364
    %v2417 = vpack.c.b16 %v2369, %v2365
    %v2418 = vpack.c.b16 %v2370, %v2366
    %v2419 = vpack.c.b16 %v2371, %v2367
    %v2420 = vpack.c.b16 %v2376, %v2372
    %v2421 = vpack.c.b16 %v2377, %v2373
    %v2422 = vpack.c.b16 %v2378, %v2374
    %v2423 = vpack.c.b16 %v2379, %v2375
    %v2424 = vpack.c.b16 %v2384, %v2380
    %v2425 = vpack.c.b16 %v2385, %v2381
    %v2426 = vpack.c.b16 %v2386, %v2382
    %v2427 = vpack.c.b16 %v2387, %v2383
    %v2428 = vpack.c.b16 %v2392, %v2388
    %v2429 = vpack.c.b16 %v2393, %v2389
    %v2430 = vpack.c.b16 %v2394, %v2390
    %v2431 = vpack.c.b16 %v2395, %v2391
    %v2432 = vpack.c.b16 %v2400, %v2396
    %v2433 = vpack.c.b16 %v2401, %v2397
    %v2434 = vpack.c.b16 %v2402, %v2398
    %v2435 = vpack.c.b16 %v2403, %v2399
    %2468 = vmatpush.bf16.msra.mxu0 %v2432
    %2469 = vmatpush.bf16.msra.mxu0 %v2428
    %2470 = vmatpush.bf16.msra.mxu0 %v2424
    %2471 = vmatpush.bf16.msra.mxu0 %v2420
    %2472 = vmatpush.bf16.msra.mxu0 %v2416
    %2473 = vmatpush.bf16.msra.mxu0 %v2412
    %2474 = vmatpush.bf16.msra.mxu0 %v2408
    %2475 = vmatpush.bf16.msra.mxu0 %v2404
    %2476 = vmatmul.bf16.gmra.mxu0 %v2296
    %v2477 = vpop.f32.mrf.mxu0
    %v2478 = vadd.f32 %v2300, %v2477
    %v2479 = vpop.f32.mrf.mxu0
    %v2480 = vadd.f32 %v2300, %v2479
    %2481 = vdwg.mxu0
    %2482 = vmatpush.bf16.msra.mxu0 %v2433
    %2483 = vmatpush.bf16.msra.mxu0 %v2429
    %2484 = vmatpush.bf16.msra.mxu0 %v2425
    %2485 = vmatpush.bf16.msra.mxu0 %v2421
    %2486 = vmatpush.bf16.msra.mxu0 %v2417
    %2487 = vmatpush.bf16.msra.mxu0 %v2413
    %2488 = vmatpush.bf16.msra.mxu0 %v2409
    %2489 = vmatpush.bf16.msra.mxu0 %v2405
    %2490 = vmatmul.bf16.gmra.mxu0 %v2296
    %v2491 = vpop.f32.mrf.mxu0
    %v2492 = vadd.f32 %v2301, %v2491
    %v2493 = vpop.f32.mrf.mxu0
    %v2494 = vadd.f32 %v2301, %v2493
    %2495 = vdwg.mxu0
    %2496 = vmatpush.bf16.msra.mxu0 %v2434
    %2497 = vmatpush.bf16.msra.mxu0 %v2430
    %2498 = vmatpush.bf16.msra.mxu0 %v2426
    %2499 = vmatpush.bf16.msra.mxu0 %v2422
    %2500 = vmatpush.bf16.msra.mxu0 %v2418
    %2501 = vmatpush.bf16.msra.mxu0 %v2414
    %2502 = vmatpush.bf16.msra.mxu0 %v2410
    %2503 = vmatpush.bf16.msra.mxu0 %v2406
    %2504 = vmatmul.bf16.gmra.mxu0 %v2296
    %v2505 = vpop.f32.mrf.mxu0
    %v2506 = vadd.f32 %v2302, %v2505
    %v2507 = vpop.f32.mrf.mxu0
    %v2508 = vadd.f32 %v2302, %v2507
    %2509 = vdwg.mxu0
    %2510 = vmatpush.bf16.msra.mxu0 %v2435
    %2511 = vmatpush.bf16.msra.mxu0 %v2431
    %2512 = vmatpush.bf16.msra.mxu0 %v2427
    %2513 = vmatpush.bf16.msra.mxu0 %v2423
    %2514 = vmatpush.bf16.msra.mxu0 %v2419
    %2515 = vmatpush.bf16.msra.mxu0 %v2415
    %2516 = vmatpush.bf16.msra.mxu0 %v2411
    %2517 = vmatpush.bf16.msra.mxu0 %v2407
    %2518 = vmatmul.bf16.gmra.mxu0 %v2296
    %v2519 = vpop.f32.mrf.mxu0
    %v2520 = vadd.f32 %v2303, %v2519
    %v2521 = vpop.f32.mrf.mxu0
    %v2522 = vadd.f32 %v2303, %v2521
    %2523 = vdwg.mxu0
    %v2524 = vmul.f32 %v2478, %v2478
    %v2525 = vmul.f32 %v2492, %v2492
    %v2526 = vmul.f32 %v2506, %v2506
    %v2527 = vmul.f32 %v2520, %v2520
    %v2528 = vmul.f32 %v2480, %v2480
    %v2529 = vmul.f32 %v2494, %v2494
    %v2530 = vmul.f32 %v2508, %v2508
    %v2531 = vmul.f32 %v2522, %v2522
    %v2532 = vmul.f32 %v2478, %v2524
    %v2533 = vmul.f32 %v2492, %v2525
    %v2534 = vmul.f32 %v2506, %v2526
    %v2535 = vmul.f32 %v2520, %v2527
    %v2536 = vmul.f32 %v2480, %v2528
    %v2537 = vmul.f32 %v2494, %v2529
    %v2538 = vmul.f32 %v2508, %v2530
    %v2539 = vmul.f32 %v2522, %v2531
    %v2540 = vmul.f32 %v2532, 0.044715
    %v2541 = vmul.f32 %v2533, 0.044715
    %v2542 = vmul.f32 %v2534, 0.044715
    %v2543 = vmul.f32 %v2535, 0.044715
    %v2544 = vmul.f32 %v2536, 0.044715
    %v2545 = vmul.f32 %v2537, 0.044715
    %v2546 = vmul.f32 %v2538, 0.044715
    %v2547 = vmul.f32 %v2539, 0.044715
    %v2548 = vadd.f32 %v2478, %v2540
    %v2549 = vadd.f32 %v2492, %v2541
    %v2550 = vadd.f32 %v2506, %v2542
    %v2551 = vadd.f32 %v2520, %v2543
    %v2552 = vadd.f32 %v2480, %v2544
    %v2553 = vadd.f32 %v2494, %v2545
    %v2554 = vadd.f32 %v2508, %v2546
    %v2555 = vadd.f32 %v2522, %v2547
    %v2556 = vmul.f32 %v2548, 0.7978846
    %v2557 = vmul.f32 %v2549, 0.7978846
    %v2558 = vmul.f32 %v2550, 0.7978846
    %v2559 = vmul.f32 %v2551, 0.7978846
    %v2560 = vmul.f32 %v2552, 0.7978846
    %v2561 = vmul.f32 %v2553, 0.7978846
    %v2562 = vmul.f32 %v2554, 0.7978846
    %v2563 = vmul.f32 %v2555, 0.7978846
    %v2564 = vtanh.pop %v2556
    %v2565 = vtanh.pop %v2557
    %v2566 = vtanh.pop %v2558
    %v2567 = vtanh.pop %v2559
    %v2568 = vtanh.pop %v2560
    %v2569 = vtanh.pop %v2561
    %v2570 = vtanh.pop %v2562
    %v2571 = vtanh.pop %v2563
    %v2572 = vadd.f32 %v2564, 1.0
    %v2573 = vadd.f32 %v2565, 1.0
    %v2574 = vadd.f32 %v2566, 1.0
    %v2575 = vadd.f32 %v2567, 1.0
    %v2576 = vadd.f32 %v2568, 1.0
    %v2577 = vadd.f32 %v2569, 1.0
    %v2578 = vadd.f32 %v2570, 1.0
    %v2579 = vadd.f32 %v2571, 1.0
    %v2580 = vmul.f32 %v2572, 0.5
    %v2581 = vmul.f32 %v2573, 0.5
    %v2582 = vmul.f32 %v2574, 0.5
    %v2583 = vmul.f32 %v2575, 0.5
    %v2584 = vmul.f32 %v2576, 0.5
    %v2585 = vmul.f32 %v2577, 0.5
    %v2586 = vmul.f32 %v2578, 0.5
    %v2587 = vmul.f32 %v2579, 0.5
    %v2588 = vmul.f32 %v2478, %v2580
    %v2589 = vmul.f32 %v2492, %v2581
    %v2590 = vmul.f32 %v2506, %v2582
    %v2591 = vmul.f32 %v2520, %v2583
    %v2592 = vmul.f32 %v2480, %v2584
    %v2593 = vmul.f32 %v2494, %v2585
    %v2594 = vmul.f32 %v2508, %v2586
    %v2595 = vmul.f32 %v2522, %v2587
    %s2596 = scalar_lea.vmem [#allocation9], 256
    %v2597 = vld [vmem:[%s2596] sm:$0xf]
    %v2598 = vld [vmem:[%s2596 + $0x4] sm:$0xf]
    %v2599 = vld [vmem:[%s2596 + $0x8] sm:$0xf]
    %v2600 = vld [vmem:[%s2596 + $0xc] sm:$0xf]
    %v2601 = vld [vmem:[%s2596 + $0x10] sm:$0xf]
    %v2602 = vld [vmem:[%s2596 + $0x14] sm:$0xf]
    %v2603 = vld [vmem:[%s2596 + $0x18] sm:$0xf]
    %v2604 = vld [vmem:[%s2596 + $0x1c] sm:$0xf]
    %v2605 = vld [vmem:[%s2596 + $0x20] sm:$0xf]
    %v2606 = vld [vmem:[%s2596 + $0x24] sm:$0xf]
    %v2607 = vld [vmem:[%s2596 + $0x28] sm:$0xf]
    %v2608 = vld [vmem:[%s2596 + $0x2c] sm:$0xf]
    %v2609 = vld [vmem:[%s2596 + $0x30] sm:$0xf]
    %v2610 = vld [vmem:[%s2596 + $0x34] sm:$0xf]
    %v2611 = vld [vmem:[%s2596 + $0x38] sm:$0xf]
    %v2612 = vld [vmem:[%s2596 + $0x3c] sm:$0xf]
    %v2613 = vld [vmem:[%s2596 + $0x40] sm:$0xf]
    %v2614 = vld [vmem:[%s2596 + $0x44] sm:$0xf]
    %v2615 = vld [vmem:[%s2596 + $0x48] sm:$0xf]
    %v2616 = vld [vmem:[%s2596 + $0x4c] sm:$0xf]
    %v2617 = vld [vmem:[%s2596 + $0x50] sm:$0xf]
    %v2618 = vld [vmem:[%s2596 + $0x54] sm:$0xf]
    %v2619 = vld [vmem:[%s2596 + $0x58] sm:$0xf]
    %v2620 = vld [vmem:[%s2596 + $0x5c] sm:$0xf]
    %v2621 = vld [vmem:[%s2596 + $0x60] sm:$0xf]
    %v2622 = vld [vmem:[%s2596 + $0x64] sm:$0xf]
    %v2623 = vld [vmem:[%s2596 + $0x68] sm:$0xf]
    %v2624 = vld [vmem:[%s2596 + $0x6c] sm:$0xf]
    %v2625 = vld [vmem:[%s2596 + $0x70] sm:$0xf]
    %v2626 = vld [vmem:[%s2596 + $0x74] sm:$0xf]
    %v2627 = vld [vmem:[%s2596 + $0x78] sm:$0xf]
    %v2628 = vld [vmem:[%s2596 + $0x7c] sm:$0xf]
    %v2629 = vld [vmem:[%s2596 + $0x80] sm:$0xf]
    %v2630 = vld [vmem:[%s2596 + $0x84] sm:$0xf]
    %v2631 = vld [vmem:[%s2596 + $0x88] sm:$0xf]
    %v2632 = vld [vmem:[%s2596 + $0x8c] sm:$0xf]
    %v2633 = vld [vmem:[%s2596 + $0x90] sm:$0xf]
    %v2634 = vld [vmem:[%s2596 + $0x94] sm:$0xf]
    %v2635 = vld [vmem:[%s2596 + $0x98] sm:$0xf]
    %v2636 = vld [vmem:[%s2596 + $0x9c] sm:$0xf]
    %v2637 = vld [vmem:[%s2596 + $0xa0] sm:$0xf]
    %v2638 = vld [vmem:[%s2596 + $0xa4] sm:$0xf]
    %v2639 = vld [vmem:[%s2596 + $0xa8] sm:$0xf]
    %v2640 = vld [vmem:[%s2596 + $0xac] sm:$0xf]
    %v2641 = vld [vmem:[%s2596 + $0xb0] sm:$0xf]
    %v2642 = vld [vmem:[%s2596 + $0xb4] sm:$0xf]
    %v2643 = vld [vmem:[%s2596 + $0xb8] sm:$0xf]
    %v2644 = vld [vmem:[%s2596 + $0xbc] sm:$0xf]
    %v2645 = vld [vmem:[%s2596 + $0xc0] sm:$0xf]
    %v2646 = vld [vmem:[%s2596 + $0xc4] sm:$0xf]
    %v2647 = vld [vmem:[%s2596 + $0xc8] sm:$0xf]
    %v2648 = vld [vmem:[%s2596 + $0xcc] sm:$0xf]
    %v2649 = vld [vmem:[%s2596 + $0xd0] sm:$0xf]
    %v2650 = vld [vmem:[%s2596 + $0xd4] sm:$0xf]
    %v2651 = vld [vmem:[%s2596 + $0xd8] sm:$0xf]
    %v2652 = vld [vmem:[%s2596 + $0xdc] sm:$0xf]
    %v2653 = vld [vmem:[%s2596 + $0xe0] sm:$0xf]
    %v2654 = vld [vmem:[%s2596 + $0xe4] sm:$0xf]
    %v2655 = vld [vmem:[%s2596 + $0xe8] sm:$0xf]
    %v2656 = vld [vmem:[%s2596 + $0xec] sm:$0xf]
    %v2657 = vld [vmem:[%s2596 + $0xf0] sm:$0xf]
    %v2658 = vld [vmem:[%s2596 + $0xf4] sm:$0xf]
    %v2659 = vld [vmem:[%s2596 + $0xf8] sm:$0xf]
    %v2660 = vld [vmem:[%s2596 + $0xfc] sm:$0xf]
    %v2661 = vpack.c.bf16 %v2592, %v2588
    %v2662 = vpack.c.bf16 %v2593, %v2589
    %v2663 = vpack.c.bf16 %v2594, %v2590
    %v2664 = vpack.c.bf16 %v2595, %v2591
    %s2665 = scalar_lea.vmem %s17, 1
    %v2666 = vld [vmem:[%s2665] sm:$0x1]
    %v2668 = vperm.slane %v2666, 0
    %v2734 = vunpack.c.l.b16 %v2597
    %v2735 = vunpack.c.l.b16 %v2598
    %v2736 = vunpack.c.l.b16 %v2599
    %v2737 = vunpack.c.l.b16 %v2600
    %v2738 = vunpack.c.l.b16 %v2601
    %v2739 = vunpack.c.l.b16 %v2602
    %v2740 = vunpack.c.l.b16 %v2603
    %v2741 = vunpack.c.l.b16 %v2604
    %v2742 = vunpack.c.l.b16 %v2605
    %v2743 = vunpack.c.l.b16 %v2606
    %v2744 = vunpack.c.l.b16 %v2607
    %v2745 = vunpack.c.l.b16 %v2608
    %v2746 = vunpack.c.l.b16 %v2609
    %v2747 = vunpack.c.l.b16 %v2610
    %v2748 = vunpack.c.l.b16 %v2611
    %v2749 = vunpack.c.l.b16 %v2612
    %v2750 = vunpack.c.l.b16 %v2613
    %v2751 = vunpack.c.l.b16 %v2614
    %v2752 = vunpack.c.l.b16 %v2615
    %v2753 = vunpack.c.l.b16 %v2616
    %v2754 = vunpack.c.l.b16 %v2617
    %v2755 = vunpack.c.l.b16 %v2618
    %v2756 = vunpack.c.l.b16 %v2619
    %v2757 = vunpack.c.l.b16 %v2620
    %v2758 = vunpack.c.l.b16 %v2621
    %v2759 = vunpack.c.l.b16 %v2622
    %v2760 = vunpack.c.l.b16 %v2623
    %v2761 = vunpack.c.l.b16 %v2624
    %v2762 = vunpack.c.l.b16 %v2625
    %v2763 = vunpack.c.l.b16 %v2626
    %v2764 = vunpack.c.l.b16 %v2627
    %v2765 = vunpack.c.l.b16 %v2628
    %v2766 = vunpack.c.l.b16 %v2629
    %v2767 = vunpack.c.l.b16 %v2630
    %v2768 = vunpack.c.l.b16 %v2631
    %v2769 = vunpack.c.l.b16 %v2632
    %v2770 = vunpack.c.l.b16 %v2633
    %v2771 = vunpack.c.l.b16 %v2634
    %v2772 = vunpack.c.l.b16 %v2635
    %v2773 = vunpack.c.l.b16 %v2636
    %v2774 = vunpack.c.l.b16 %v2637
    %v2775 = vunpack.c.l.b16 %v2638
    %v2776 = vunpack.c.l.b16 %v2639
    %v2777 = vunpack.c.l.b16 %v2640
    %v2778 = vunpack.c.l.b16 %v2641
    %v2779 = vunpack.c.l.b16 %v2642
    %v2780 = vunpack.c.l.b16 %v2643
    %v2781 = vunpack.c.l.b16 %v2644
    %v2782 = vunpack.c.l.b16 %v2645
    %v2783 = vunpack.c.l.b16 %v2646
    %v2784 = vunpack.c.l.b16 %v2647
    %v2785 = vunpack.c.l.b16 %v2648
    %v2786 = vunpack.c.l.b16 %v2649
    %v2787 = vunpack.c.l.b16 %v2650
    %v2788 = vunpack.c.l.b16 %v2651
    %v2789 = vunpack.c.l.b16 %v2652
    %v2790 = vunpack.c.l.b16 %v2653
    %v2791 = vunpack.c.l.b16 %v2654
    %v2792 = vunpack.c.l.b16 %v2655
    %v2793 = vunpack.c.l.b16 %v2656
    %v2794 = vunpack.c.l.b16 %v2657
    %v2795 = vunpack.c.l.b16 %v2658
    %v2796 = vunpack.c.l.b16 %v2659
    %v2797 = vunpack.c.l.b16 %v2660
    %v2798 = vpack.c.b16 %v2735, %v2734
    %v2799 = vpack.c.b16 %v2737, %v2736
    %v2800 = vpack.c.b16 %v2739, %v2738
    %v2801 = vpack.c.b16 %v2741, %v2740
    %v2802 = vpack.c.b16 %v2743, %v2742
    %v2803 = vpack.c.b16 %v2745, %v2744
    %v2804 = vpack.c.b16 %v2747, %v2746
    %v2805 = vpack.c.b16 %v2749, %v2748
    %v2806 = vpack.c.b16 %v2751, %v2750
    %v2807 = vpack.c.b16 %v2753, %v2752
    %v2808 = vpack.c.b16 %v2755, %v2754
    %v2809 = vpack.c.b16 %v2757, %v2756
    %v2810 = vpack.c.b16 %v2759, %v2758
    %v2811 = vpack.c.b16 %v2761, %v2760
    %v2812 = vpack.c.b16 %v2763, %v2762
    %v2813 = vpack.c.b16 %v2765, %v2764
    %v2814 = vpack.c.b16 %v2767, %v2766
    %v2815 = vpack.c.b16 %v2769, %v2768
    %v2816 = vpack.c.b16 %v2771, %v2770
    %v2817 = vpack.c.b16 %v2773, %v2772
    %v2818 = vpack.c.b16 %v2775, %v2774
    %v2819 = vpack.c.b16 %v2777, %v2776
    %v2820 = vpack.c.b16 %v2779, %v2778
    %v2821 = vpack.c.b16 %v2781, %v2780
    %v2822 = vpack.c.b16 %v2783, %v2782
    %v2823 = vpack.c.b16 %v2785, %v2784
    %v2824 = vpack.c.b16 %v2787, %v2786
    %v2825 = vpack.c.b16 %v2789, %v2788
    %v2826 = vpack.c.b16 %v2791, %v2790
    %v2827 = vpack.c.b16 %v2793, %v2792
    %v2828 = vpack.c.b16 %v2795, %v2794
    %v2829 = vpack.c.b16 %v2797, %v2796
    %2862 = vmatpush.bf16.msra.mxu0 %v2805
    %2863 = vmatpush.bf16.msra.mxu0 %v2804
    %2864 = vmatpush.bf16.msra.mxu0 %v2803
    %2865 = vmatpush.bf16.msra.mxu0 %v2802
    %2866 = vmatpush.bf16.msra.mxu0 %v2801
    %2867 = vmatpush.bf16.msra.mxu0 %v2800
    %2868 = vmatpush.bf16.msra.mxu0 %v2799
    %2869 = vmatpush.bf16.msra.mxu0 %v2798
    %2870 = vmatmul.bf16.gmra.mxu0 %v2661
    %v2871 = vpop.f32.mrf.mxu0
    %v2872 = vadd.f32 %v2668, %v2871
    %v2873 = vpop.f32.mrf.mxu0
    %v2874 = vadd.f32 %v2668, %v2873
    %2875 = vdwg.mxu0
    %2876 = vmatpush.bf16.msra.mxu0 %v2813
    %2877 = vmatpush.bf16.msra.mxu0 %v2812
    %2878 = vmatpush.bf16.msra.mxu0 %v2811
    %2879 = vmatpush.bf16.msra.mxu0 %v2810
    %2880 = vmatpush.bf16.msra.mxu0 %v2809
    %2881 = vmatpush.bf16.msra.mxu0 %v2808
    %2882 = vmatpush.bf16.msra.mxu0 %v2807
    %2883 = vmatpush.bf16.msra.mxu0 %v2806
    %2884 = vmatmul.bf16.gmra.mxu0 %v2662
    %v2885 = vpop.f32.mrf.mxu0
    %v2886 = vadd.f32 %v2872, %v2885
    %v2887 = vpop.f32.mrf.mxu0
    %v2888 = vadd.f32 %v2874, %v2887
    %2889 = vdwg.mxu0
    %2890 = vmatpush.bf16.msra.mxu0 %v2821
    %2891 = vmatpush.bf16.msra.mxu0 %v2820
    %2892 = vmatpush.bf16.msra.mxu0 %v2819
    %2893 = vmatpush.bf16.msra.mxu0 %v2818
    %2894 = vmatpush.bf16.msra.mxu0 %v2817
    %2895 = vmatpush.bf16.msra.mxu0 %v2816
    %2896 = vmatpush.bf16.msra.mxu0 %v2815
    %2897 = vmatpush.bf16.msra.mxu0 %v2814
    %2898 = vmatmul.bf16.gmra.mxu0 %v2663
    %v2899 = vpop.f32.mrf.mxu0
    %v2900 = vadd.f32 %v2886, %v2899
    %v2901 = vpop.f32.mrf.mxu0
    %v2902 = vadd.f32 %v2888, %v2901
    %2903 = vdwg.mxu0
    %2904 = vmatpush.bf16.msra.mxu0 %v2829
    %2905 = vmatpush.bf16.msra.mxu0 %v2828
    %2906 = vmatpush.bf16.msra.mxu0 %v2827
    %2907 = vmatpush.bf16.msra.mxu0 %v2826
    %2908 = vmatpush.bf16.msra.mxu0 %v2825
    %2909 = vmatpush.bf16.msra.mxu0 %v2824
    %2910 = vmatpush.bf16.msra.mxu0 %v2823
    %2911 = vmatpush.bf16.msra.mxu0 %v2822
    %2912 = vmatmul.bf16.gmra.mxu0 %v2664
    %v2913 = vpop.f32.mrf.mxu0
    %v2914 = vadd.f32 %v2900, %v2913
    %v2915 = vpop.f32.mrf.mxu0
    %v2916 = vadd.f32 %v2902, %v2915
    %2917 = vdwg.mxu0
    %v2918 = vadd.f32 %v2261, %v2914
    %v2919 = vadd.f32 %v2262, %v2916
    %s2920 = scalar_lea.vmem %s18, 1
    %v2921 = vld [vmem:[%s2920] sm:$0x1]
    %s2922 = scalar_lea.vmem %s19, 1
    %v2923 = vld [vmem:[%s2922] sm:$0x1]
    %2924 = vadd.xlane.f32.xlu0 %v2918
    %v2925 = vpop.xlane.xlu0 %2924
    %2926 = vadd.xlane.f32.xlu0 %v2919
    %v2927 = vpop.xlane.xlu0 %2926
    %v2928 = vmul.f32 %v2925, %v210
    %v2929 = vmul.f32 %v2927, %v210
    %v2930 = vsub.f32 %v2918, %v2928
    %v2931 = vsub.f32 %v2919, %v2929
    %v2932 = vmul.f32 %v2930, %v2930
    %v2933 = vmul.f32 %v2931, %v2931
    %2934 = vadd.xlane.f32.xlu0 %v2932
    %v2935 = vpop.xlane.xlu0 %2934
    %2936 = vadd.xlane.f32.xlu0 %v2933
    %v2937 = vpop.xlane.xlu0 %2936
    %v2938 = vmul.f32 %v2935, %v210
    %v2939 = vmul.f32 %v2937, %v210
    %v2940 = vadd.f32 %v2938, 1e-12
    %v2941 = vadd.f32 %v2939, 1e-12
    %v2942 = vrsqrt.pop %v2940
    %v2943 = vmul.f32 %v2942, %v2940
    %v2944 = vmul.f32 %v2943, %v2942
    %v2945 = vmul.f32 0.5, %v2944
    %v2946 = vsub.f32 1.5, %v2945
    %v2947 = vmul.f32 %v2942, %v2946
    %vm2948 = vweird.f32 %v2940
    %vm2949 = vweird.f32 %v2942
    %vm2950 = vmor %vm2948, %vm2949
    %v2951 = vsel %vm2950, %v2942, %v2947
    %v2952 = vrsqrt.pop %v2941
    %v2953 = vmul.f32 %v2952, %v2941
    %v2954 = vmul.f32 %v2953, %v2952
    %v2955 = vmul.f32 0.5, %v2954
    %v2956 = vsub.f32 1.5, %v2955
    %v2957 = vmul.f32 %v2952, %v2956
    %vm2958 = vweird.f32 %v2941
    %vm2959 = vweird.f32 %v2952
    %vm2960 = vmor %vm2958, %vm2959
    %v2961 = vsel %vm2960, %v2952, %v2957
    %v2962 = vmul.f32 %v2930, %v2951
    %v2963 = vmul.f32 %v2931, %v2961
    %v2965 = vperm.slane %v2921, 0
    %v2967 = vmul.f32 %v2962, %v2965
    %v2968 = vmul.f32 %v2963, %v2965
    %v2970 = vperm.slane %v2923, 0
    %v2972 = vadd.f32 %v2967, %v2970
    %v2973 = vadd.f32 %v2968, %v2970
    %v2974 = vld [vmem:[%s20] sm:$0xf]
    %v2975 = vld [vmem:[%s20 + $0x4] sm:$0xf]
    %v2976 = vld [vmem:[%s20 + $0x8] sm:$0xf]
    %v2977 = vld [vmem:[%s20 + $0xc] sm:$0xf]
    %v2978 = vld [vmem:[%s20 + $0x10] sm:$0xf]
    %v2979 = vld [vmem:[%s20 + $0x14] sm:$0xf]
    %v2980 = vld [vmem:[%s20 + $0x18] sm:$0xf]
    %v2981 = vld [vmem:[%s20 + $0x1c] sm:$0xf]
    %v2982 = vld [vmem:[%s20 + $0x20] sm:$0xf]
    %v2983 = vld [vmem:[%s20 + $0x24] sm:$0xf]
    %v2984 = vld [vmem:[%s20 + $0x28] sm:$0xf]
    %v2985 = vld [vmem:[%s20 + $0x2c] sm:$0xf]
    %v2986 = vld [vmem:[%s20 + $0x30] sm:$0xf]
    %v2987 = vld [vmem:[%s20 + $0x34] sm:$0xf]
    %v2988 = vld [vmem:[%s20 + $0x38] sm:$0xf]
    %v2989 = vld [vmem:[%s20 + $0x3c] sm:$0xf]
    %v2990 = vpack.c.bf16 %v2973, %v2972
    %v2991 = vld [vmem:[%s21] sm:$0x1]
    %v2993 = vperm.slane %v2991, 0
    %v3011 = vunpack.c.l.b16 %v2974
    %v3012 = vunpack.c.l.b16 %v2975
    %v3013 = vunpack.c.l.b16 %v2976
    %v3014 = vunpack.c.l.b16 %v2977
    %v3015 = vunpack.c.l.b16 %v2978
    %v3016 = vunpack.c.l.b16 %v2979
    %v3017 = vunpack.c.l.b16 %v2980
    %v3018 = vunpack.c.l.b16 %v2981
    %v3019 = vunpack.c.l.b16 %v2982
    %v3020 = vunpack.c.l.b16 %v2983
    %v3021 = vunpack.c.l.b16 %v2984
    %v3022 = vunpack.c.l.b16 %v2985
    %v3023 = vunpack.c.l.b16 %v2986
    %v3024 = vunpack.c.l.b16 %v2987
    %v3025 = vunpack.c.l.b16 %v2988
    %v3026 = vunpack.c.l.b16 %v2989
    %v3027 = vpack.c.b16 %v3012, %v3011
    %v3028 = vpack.c.b16 %v3014, %v3013
    %v3029 = vpack.c.b16 %v3016, %v3015
    %v3030 = vpack.c.b16 %v3018, %v3017
    %v3031 = vpack.c.b16 %v3020, %v3019
    %v3032 = vpack.c.b16 %v3022, %v3021
    %v3033 = vpack.c.b16 %v3024, %v3023
    %v3034 = vpack.c.b16 %v3026, %v3025
    %3043 = vmatpush.bf16.msra.mxu0 %v3034
    %3044 = vmatpush.bf16.msra.mxu0 %v3033
    %3045 = vmatpush.bf16.msra.mxu0 %v3032
    %3046 = vmatpush.bf16.msra.mxu0 %v3031
    %3047 = vmatpush.bf16.msra.mxu0 %v3030
    %3048 = vmatpush.bf16.msra.mxu0 %v3029
    %3049 = vmatpush.bf16.msra.mxu0 %v3028
    %3050 = vmatpush.bf16.msra.mxu0 %v3027
    %3051 = vmatmul.bf16.gmra.mxu0 %v2990
    %v3052 = vpop.f32.mrf.mxu0
    %v3053 = vadd.f32 %v2993, %v3052
    %v3054 = vpop.f32.mrf.mxu0
    %v3055 = vadd.f32 %v2993, %v3054
    %3056 = vdwg.mxu0
    %v3057 = vmax.f32 %v3053, 0.0
    %v3058 = vmax.f32 %v3055, 0.0
    %v3059 = vld [vmem:[#allocation10] sm:$0xf]
    %v3060 = vld [vmem:[#allocation10 + $0x4] sm:$0xf]
    %v3061 = vld [vmem:[#allocation10 + $0x8] sm:$0xf]
    %v3062 = vld [vmem:[#allocation10 + $0xc] sm:$0xf]
    %v3063 = vld [vmem:[#allocation10 + $0x10] sm:$0xf]
    %v3064 = vld [vmem:[#allocation10 + $0x14] sm:$0xf]
    %v3065 = vld [vmem:[#allocation10 + $0x18] sm:$0xf]
    %v3066 = vld [vmem:[#allocation10 + $0x1c] sm:$0xf]
    %v3067 = vld [vmem:[#allocation10 + $0x20] sm:$0xf]
    %v3068 = vld [vmem:[#allocation10 + $0x24] sm:$0xf]
    %v3069 = vld [vmem:[#allocation10 + $0x28] sm:$0xf]
    %v3070 = vld [vmem:[#allocation10 + $0x2c] sm:$0xf]
    %v3071 = vld [vmem:[#allocation10 + $0x30] sm:$0xf]
    %v3072 = vld [vmem:[#allocation10 + $0x34] sm:$0xf]
    %v3073 = vld [vmem:[#allocation10 + $0x38] sm:$0xf]
    %v3074 = vld [vmem:[#allocation10 + $0x3c] sm:$0xf]
    %v3075 = vpack.c.bf16 %v3058, %v3057
    %v3076 = vld [vmem:[%s23] sm:$0x1]
    %v3078 = vperm.slane %v3076, 0
    %v3096 = vunpack.c.l.b16 %v3059
    %v3097 = vunpack.c.l.b16 %v3060
    %v3098 = vunpack.c.l.b16 %v3061
    %v3099 = vunpack.c.l.b16 %v3062
    %v3100 = vunpack.c.l.b16 %v3063
    %v3101 = vunpack.c.l.b16 %v3064
    %v3102 = vunpack.c.l.b16 %v3065
    %v3103 = vunpack.c.l.b16 %v3066
    %v3104 = vunpack.c.l.b16 %v3067
    %v3105 = vunpack.c.l.b16 %v3068
    %v3106 = vunpack.c.l.b16 %v3069
    %v3107 = vunpack.c.l.b16 %v3070
    %v3108 = vunpack.c.l.b16 %v3071
    %v3109 = vunpack.c.l.b16 %v3072
    %v3110 = vunpack.c.l.b16 %v3073
    %v3111 = vunpack.c.l.b16 %v3074
    %v3112 = vpack.c.b16 %v3097, %v3096
    %v3113 = vpack.c.b16 %v3099, %v3098
    %v3114 = vpack.c.b16 %v3101, %v3100
    %v3115 = vpack.c.b16 %v3103, %v3102
    %v3116 = vpack.c.b16 %v3105, %v3104
    %v3117 = vpack.c.b16 %v3107, %v3106
    %v3118 = vpack.c.b16 %v3109, %v3108
    %v3119 = vpack.c.b16 %v3111, %v3110
    %3128 = vmatpush.bf16.msra.mxu0 %v3119
    %3129 = vmatpush.bf16.msra.mxu0 %v3118
    %3130 = vmatpush.bf16.msra.mxu0 %v3117
    %3131 = vmatpush.bf16.msra.mxu0 %v3116
    %3132 = vmatpush.bf16.msra.mxu0 %v3115
    %3133 = vmatpush.bf16.msra.mxu0 %v3114
    %3134 = vmatpush.bf16.msra.mxu0 %v3113
    %3135 = vmatpush.bf16.msra.mxu0 %v3112
    %3136 = vmatmul.bf16.gmra.mxu0 %v3075
    %v3137 = vpop.f32.mrf.mxu0
    %v3138 = vadd.f32 %v3078, %v3137
    %v3139 = vpop.f32.mrf.mxu0
    %v3140 = vadd.f32 %v3078, %v3139
    %3141 = vdwg.mxu0
    %3142 = vst [vmem:[%s24] sm:$0xff] %v3138
    %3143 = vst [vmem:[%s24 + $0x8] sm:$0xff] %v3140
    // Predicated region
    $region122: #{bert_classifier_forward.1} parent=1 // pred_check
      _
    $region123: #{bert_classifier_forward.1} parent=1 // pred_check_branch
      %3145 = sbr.rel (0) target = $region125
    $region124: #{bert_classifier_forward.1} parent=1 // pred_region
      _
    $region125: #{bert_classifier_forward.1} parent=1 // pred_fallthru
      _
    // Predicated region
    $region126: #{bert_classifier_forward.1} parent=1 // pred_check
      _
    $region127: #{bert_classifier_forward.1} parent=1 // pred_check_branch
      %3147 = sbr.rel (0) target = $region129
    $region128: #{bert_classifier_forward.1} parent=1 // pred_region
      _
    $region129: #{bert_classifier_forward.1} parent=1 // pred_fallthru
      _
    %3148 = vsyncpa [#allocation3], 1
    %3149 = vsyncpa [#allocation5], 1
    %3150 = vsyncpa [#allocation8], 1
    %3151 = vsyncpa [#allocation11], 1

</llo_original>
